<compile_context>
chip_gen: v7x
topology: tpu7x:2x2x1
jax: 0.10.0
libtpu: 0.0.40
codegen_flags: <defaults>
</compile_context>

<pallas_src>
import jax
import jax.numpy as jnp
from jax.experimental import pallas as pl
from jax.experimental.pallas import tpu as pltpu

EXPANSION = 4
BN_EPS = 1e-5


# ---------------------------------------------------------------------------
# Fused kernel
# ---------------------------------------------------------------------------
def _bottleneck_kernel(xa_ref, xt_ref, xb_ref,
                       w1_ref, b1_ref, w2_ref, b2_ref, w3_ref, b3_ref,
                       o_ref, stage_ref):
    """One (batch, row-block) step of the fused Bottleneck.

    xa_ref: (1, TH, W, Cin)   main rows of x (also the residual)
    xt_ref: (1, 1,  W, Cin)   row above the block (zeroed in-kernel at rb == 0)
    xb_ref: (1, 1,  W, Cin)   row below the block (zeroed at rb == last)
    w1_ref: (Cin, P) bf16     conv1 weight, BN1 scale folded
    w2_ref: (3, 3P, P) bf16   conv2 weight grouped as (kh, kw*P + cin, cout)
    w3_ref: (P, Cexp) bf16    conv3 weight, BN3 scale folded
    b*_ref: folded BN biases, f32
    stage_ref: VMEM ((TH+2)*W, 3P) bf16 — [y1(w-1) | y1(w) | y1(w+1)] slabs.
    """
    TH = xa_ref.shape[1]
    W = xa_ref.shape[2]
    Cin = xa_ref.shape[3]
    P = w1_ref.shape[1]
    Cexp = w3_ref.shape[1]
    rows = (TH + 2) * W

    rb = pl.program_id(1)
    nrb = pl.num_programs(1)

    w1 = w1_ref[...]            # (Cin, P) bf16
    b1 = b1_ref[...]            # (1, P)  f32

    def conv1(x2d):
        y = jnp.dot(x2d.astype(jnp.bfloat16), w1,
                    preferred_element_type=jnp.float32)
        return jnp.maximum(y + b1, 0.0)

    # ---- conv1 + bn1 + relu on the TH main rows and the two halo rows ----
    top = jnp.where(rb == 0, 0.0,
                    conv1(xt_ref[...].reshape(W, Cin)))          # pad above row 0
    main = conv1(xa_ref[...].reshape(TH * W, Cin))
    bot = jnp.where(rb == nrb - 1, 0.0,
                    conv1(xb_ref[...].reshape(W, Cin)))          # pad below last
    y1 = jnp.concatenate([top, main, bot], axis=0)               # (rows, P) f32

    # ---- stage the W-shifted slabs (kw = -1, 0, +1) in one bf16 scratch ----
    colf = jax.lax.broadcasted_iota(jnp.int32, (rows, 1), 0) % W
    zrow = jnp.zeros((1, P), jnp.float32)
    y1_m1 = jnp.where(colf == 0, 0.0,
                      jnp.concatenate([zrow, y1[:rows - 1, :]], axis=0))
    y1_p1 = jnp.where(colf == W - 1, 0.0,
                      jnp.concatenate([y1[1:, :], zrow], axis=0))
    stage_ref[...] = jnp.concatenate([y1_m1, y1, y1_p1],
                                     axis=1).astype(jnp.bfloat16)

    # ---- conv2 (3x3, pad 1) + bn2 + relu: 3 matmuls with K = 3P ----
    acc = jnp.dot(stage_ref[0:TH * W, :], w2_ref[0],
                  preferred_element_type=jnp.float32)
    for dh in (1, 2):
        acc = acc + jnp.dot(stage_ref[dh * W:(dh + TH) * W, :], w2_ref[dh],
                            preferred_element_type=jnp.float32)
    y2 = jnp.maximum(acc + b2_ref[...], 0.0)                     # (TH*W, P) f32

    # ---- conv3 (1x1) + bn3 + residual + relu ----
    res = xa_ref[...].reshape(TH * W, Cexp).astype(jnp.float32)
    y3 = jnp.dot(y2.astype(jnp.bfloat16), w3_ref[...],
                 preferred_element_type=jnp.float32)
    y3 = jnp.maximum(y3 + b3_ref[...] + res, 0.0)
    o_ref[...] = y3.reshape(1, TH, W, Cexp).astype(o_ref.dtype)


# ---------------------------------------------------------------------------
# Wrappers
# ---------------------------------------------------------------------------
def _fold_bn(stats):
    gamma, beta, mean, var = stats
    scale = gamma / jnp.sqrt(var + BN_EPS)
    bias = beta - mean * scale
    return scale.astype(jnp.float32), bias.astype(jnp.float32)


def _pick_row_block(H, W, n_batch, max_rows=8192):
    """Largest divisor of H keeping the pixel-row slab modest in VMEM, and
    guaranteeing >=2 total grid steps (v7x has 2 TensorCores per chip)."""
    th_cap = max(1, min(H, max_rows // max(W, 1)))
    if n_batch == 1 and H > 1:
        th_cap = min(th_cap, max(1, H // 2))
    for th in range(th_cap, 0, -1):
        if H % th == 0:
            return th
    return 1


def bottleneck_forward_nhwc(x_nhwc, params, *, row_block=None):
    """NHWC fused Bottleneck (stride=1, downsample=None).  Output dtype
    matches the input dtype (use bf16 activations for the mem-bound fast
    path); all accumulation is f32."""
    N, H, W, Cin = x_nhwc.shape
    P = params["w1_oihw"].shape[0]
    Cexp = P * EXPANSION
    if Cin != Cexp:
        raise ValueError("downsample=None requires inplanes == planes * 4")
    if W % 8 != 0:
        # TODO(synk): pad W to a multiple of 8 for awkward widths.
        raise ValueError("W must be a multiple of 8")

    TH = row_block if row_block is not None else _pick_row_block(H, W, N)
    if H % TH != 0:
        raise ValueError("row_block must divide H")
    nrb = H // TH

    s1, b1 = _fold_bn(params["bn1"])
    s2, b2 = _fold_bn(params["bn2"])
    s3, b3 = _fold_bn(params["bn3"])

    # BN scale folded into conv weights (f32 fold), bf16 MXU operands.
    w1 = (jnp.transpose(params["w1_oihw"][:, :, 0, 0], (1, 0))
          * s1[None, :]).astype(jnp.bfloat16)                       # (Cin, P)
    # (O,I,kh,kw) -> (kh,kw,I,O), fold scale, group (kw, I) along K.
    w2 = (jnp.transpose(params["w2_oihw"], (2, 3, 1, 0))
          * s2[None, None, None, :]).reshape(3, 3 * P, P).astype(jnp.bfloat16)
    w3 = (jnp.transpose(params["w3_oihw"][:, :, 0, 0], (1, 0))
          * s3[None, :]).astype(jnp.bfloat16)                       # (P, Cexp)
    b1 = b1.reshape(1, P)
    b2 = b2.reshape(1, P)
    b3 = b3.reshape(1, Cexp)

    spec_x_main = pl.BlockSpec((1, TH, W, Cin), lambda n, r: (n, r, 0, 0))
    spec_x_top = pl.BlockSpec(
        (1, 1, W, Cin), lambda n, r: (n, jnp.maximum(r * TH - 1, 0), 0, 0))
    spec_x_bot = pl.BlockSpec(
        (1, 1, W, Cin), lambda n, r: (n, jnp.minimum(r * TH + TH, H - 1), 0, 0))

    def full(shape):
        return pl.BlockSpec(shape, lambda n, r, _s=shape: (0,) * len(_s))

    itm = jnp.dtype(x_nhwc.dtype).itemsize
    M = N * H * W
    w_bytes = 2 * (Cin * P + 9 * P * P + P * Cexp) + 4 * (2 * P + Cexp)
    flops = 2 * M * (Cin * P + 9 * P * P + P * Cexp)
    bytes_accessed = (itm * M * (Cin + Cexp)          # x in + out
                      + itm * N * nrb * 2 * W * Cin   # halo rows
                      + N * nrb * w_bytes)            # weights per step
    cost = pl.CostEstimate(flops=flops, transcendentals=0,
                           bytes_accessed=int(bytes_accessed))

    # VMEM budget from actual tile sizes (double-buffered specs + scratch),
    # capped at 48 MiB so it stays inside v7x's 64 MiB per-TC VMEM.
    blk_in = (TH + 2) * W * Cin * itm
    blk_out = TH * W * Cexp * itm
    stage_bytes = (TH + 2) * W * 3 * P * 2
    vmem_need = 2 * (blk_in + blk_out + w_bytes) + stage_bytes
    vmem_limit = int(min(max(2 * vmem_need + (4 << 20), 16 << 20), 48 << 20))

    return pl.pallas_call(
        _bottleneck_kernel,
        out_shape=jax.ShapeDtypeStruct((N, H, W, Cexp), x_nhwc.dtype),
        grid_spec=pltpu.PrefetchScalarGridSpec(
            num_scalar_prefetch=0,
            grid=(N, nrb),
            in_specs=[spec_x_main, spec_x_top, spec_x_bot,
                      full((Cin, P)), full((1, P)),
                      full((3, 3 * P, P)), full((1, P)),
                      full((P, Cexp)), full((1, Cexp))],
            out_specs=pl.BlockSpec((1, TH, W, Cexp), lambda n, r: (n, r, 0, 0)),
            scratch_shapes=[
                pltpu.VMEM(((TH + 2) * W, 3 * P), jnp.bfloat16),  # shift slabs
            ]),
        compiler_params=pltpu.CompilerParams(
            dimension_semantics=("parallel", "parallel"),
            vmem_limit_bytes=vmem_limit),
        cost_estimate=cost,
    )(x_nhwc, x_nhwc, x_nhwc, w1, b1, w2, b2, w3, b3)


def bottleneck_forward(x_nchw, params, *, row_block=None):
    """PyTorch-layout convenience wrapper [N, Cin, H, W] -> [N, Cin, H, W].
    Prefer `bottleneck_forward_nhwc` end-to-end: these two transposes are a
    full extra HBM pass each on a memory-bound block."""
    x_nhwc = jnp.transpose(x_nchw, (0, 2, 3, 1))
    y = bottleneck_forward_nhwc(x_nhwc, params, row_block=row_block)
    return jnp.transpose(y, (0, 3, 1, 2))


# ---------------------------------------------------------------------------
# Pure-JAX reference (f32, NHWC) for correctness check
# ---------------------------------------------------------------------------
def bottleneck_reference_nhwc(x, params):
    def conv(x, w_oihw, pad):
        w = jnp.transpose(w_oihw, (2, 3, 1, 0))   # OIHW -> HWIO
        return jax.lax.conv_general_dilated(
            x, w, (1, 1), [(pad, pad), (pad, pad)],
            dimension_numbers=("NHWC", "HWIO", "NHWC"))

    def bn(x, stats):
        g, b, m, v = stats
        inv = g / jnp.sqrt(v + BN_EPS)
        return x * inv + (b - m * inv)

    out = jax.nn.relu(bn(conv(x, params["w1_oihw"], 0), params["bn1"]))
    out = jax.nn.relu(bn(conv(out, params["w2_oihw"], 1), params["bn2"]))
    out = bn(conv(out, params["w3_oihw"], 0), params["bn3"])
    return jax.nn.relu(out + x)


def make_params(key, inplanes, planes):
    ks = jax.random.split(key, 6)
    cexp = planes * EXPANSION

    def bn_stats(k, c):
        k1, k2, k3, k4 = jax.random.split(k, 4)
        gamma = 1.0 + 0.1 * jax.random.normal(k1, (c,), jnp.float32)
        beta = 0.1 * jax.random.normal(k2, (c,), jnp.float32)
        mean = 0.1 * jax.random.normal(k3, (c,), jnp.float32)
        var = jax.random.uniform(k4, (c,), jnp.float32, 0.5, 1.5)
        return (gamma, beta, mean, var)

    return {
        "w1_oihw": 0.1 * jax.random.normal(ks[0], (planes, inplanes, 1, 1), jnp.float32),
        "w2_oihw": 0.1 * jax.random.normal(ks[1], (planes, planes, 3, 3), jnp.float32),
        "w3_oihw": 0.1 * jax.random.normal(ks[2], (cexp, planes, 1, 1), jnp.float32),
        "bn1": bn_stats(ks[3], planes),
        "bn2": bn_stats(ks[4], planes),
        "bn3": bn_stats(ks[5], cexp),
    }


if __name__ == "__main__":
    key = jax.random.PRNGKey(0)
    k_x, k_p = jax.random.split(key)

    N, planes, H, W = 2, 4, 16, 16
    inplanes = planes * EXPANSION   # 16 -> identity residual (downsample=None)

    x_nhwc = jax.random.normal(k_x, (N, H, W, inplanes), jnp.float32)
    params = make_params(k_p, inplanes, planes)

    ref = jax.block_until_ready(bottleneck_reference_nhwc(x_nhwc, params))

    # f32 activations, single row-block per image.
    out = jax.block_until_ready(bottleneck_forward_nhwc(x_nhwc, params))
    assert out.shape == ref.shape == (N, H, W, inplanes)
    assert jnp.allclose(out, ref, rtol=2e-3, atol=2e-3), \
        float(jnp.max(jnp.abs(out - ref)))

    # Row-tiled path (TH < H) to exercise the halo / boundary logic.
    out2 = jax.block_until_ready(
        bottleneck_forward_nhwc(x_nhwc, params, row_block=8))
    assert jnp.allclose(out2, ref, rtol=2e-3, atol=2e-3), \
        float(jnp.max(jnp.abs(out2 - ref)))

    # bf16 activation I/O (memory-bound fast path); looser tolerance.
    x_bf16 = x_nhwc.astype(jnp.bfloat16)
    out_bf = jax.block_until_ready(
        bottleneck_forward_nhwc(x_bf16, params, row_block=8))
    ref_bf = bottleneck_reference_nhwc(x_bf16.astype(jnp.float32), params)
    assert out_bf.dtype == jnp.bfloat16
    assert jnp.allclose(out_bf.astype(jnp.float32), ref_bf,
                        rtol=5e-2, atol=5e-2), \
        float(jnp.max(jnp.abs(out_bf.astype(jnp.float32) - ref_bf)))

    # NCHW convenience wrapper (PyTorch module interface).
    x_nchw = jnp.transpose(x_nhwc, (0, 3, 1, 2))
    out_nchw = jax.block_until_ready(bottleneck_forward(x_nchw, params))
    assert jnp.allclose(out_nchw, jnp.transpose(ref, (0, 3, 1, 2)),
                        rtol=2e-3, atol=2e-3)

    print("KERNEL_OK")
</pallas_src>

<mosaic_0001>
module attributes {stable_mosaic.version = 11 : i64} {
  func.func @_bottleneck_kernel(%arg0: i32, %arg1: i32, %arg2: memref<1x16x16x16xf32, #tpu.memory_space<vmem>>, %arg3: memref<1x1x16x16xf32, #tpu.memory_space<vmem>>, %arg4: memref<1x1x16x16xf32, #tpu.memory_space<vmem>>, %arg5: memref<16x4xbf16, #tpu.memory_space<vmem>>, %arg6: memref<1x4xf32, #tpu.memory_space<vmem>>, %arg7: memref<3x12x4xbf16, #tpu.memory_space<vmem>>, %arg8: memref<1x4xf32, #tpu.memory_space<vmem>>, %arg9: memref<4x16xbf16, #tpu.memory_space<vmem>>, %arg10: memref<1x16xf32, #tpu.memory_space<vmem>>, %arg11: memref<1x16x16x16xf32, #tpu.memory_space<vmem>>, %arg12: memref<288x12xbf16, #tpu.memory_space<vmem>>) attributes {dimension_semantics = [#tpu.dimension_semantics<parallel>, #tpu.dimension_semantics<parallel>], iteration_bounds = array<i64: 2, 1>, scalar_prefetch = 0 : i64, scratch_operands = 1 : i64, tpu.core_type = #tpu.core_type<tc>, window_params = [{transform_indices = @transform_0, window_bounds = array<i64: 1, 16, 16, 16>}, {transform_indices = @transform_1, window_bounds = array<i64: 1, 1, 16, 16>}, {transform_indices = @transform_2, window_bounds = array<i64: 1, 1, 16, 16>}, {pipeline_mode = #tpu.pipeline_mode<synchronous>, transform_indices = @transform_3, window_bounds = array<i64: 16, 4>}, {pipeline_mode = #tpu.pipeline_mode<synchronous>, transform_indices = @transform_4, window_bounds = array<i64: 1, 4>}, {pipeline_mode = #tpu.pipeline_mode<synchronous>, transform_indices = @transform_5, window_bounds = array<i64: 3, 12, 4>}, {pipeline_mode = #tpu.pipeline_mode<synchronous>, transform_indices = @transform_6, window_bounds = array<i64: 1, 4>}, {pipeline_mode = #tpu.pipeline_mode<synchronous>, transform_indices = @transform_7, window_bounds = array<i64: 4, 16>}, {pipeline_mode = #tpu.pipeline_mode<synchronous>, transform_indices = @transform_8, window_bounds = array<i64: 1, 16>}, {transform_indices = @transform_9, window_bounds = array<i64: 1, 16, 16, 16>}]} {
    %c0 = arith.constant 0 : index
    %c0_0 = arith.constant 0 : index
    %0 = vector.load %arg5[%c0, %c0_0] : memref<16x4xbf16, #tpu.memory_space<vmem>>, vector<16x4xbf16>
    %c0_1 = arith.constant 0 : index
    %c0_2 = arith.constant 0 : index
    %1 = vector.load %arg6[%c0_1, %c0_2] : memref<1x4xf32, #tpu.memory_space<vmem>>, vector<1x4xf32>
    %c0_i32 = arith.constant 0 : i32
    %2 = arith.cmpi eq, %arg1, %c0_i32 : i32
    %c0_3 = arith.constant 0 : index
    %c0_4 = arith.constant 0 : index
    %c0_5 = arith.constant 0 : index
    %c0_6 = arith.constant 0 : index
    %3 = vector.load %arg3[%c0_3, %c0_4, %c0_5, %c0_6] : memref<1x1x16x16xf32, #tpu.memory_space<vmem>>, vector<1x1x16x16xf32>
    %4 = vector.shape_cast %3 : vector<1x1x16x16xf32> to vector<16x16xf32>
    %5 = arith.truncf %4 : vector<16x16xf32> to vector<16x16xbf16>
    %cst = arith.constant dense<0.000000e+00> : vector<16x4xf32>
    %6 = tpu.matmul %5, %0, %cst {dimension_numbers = #tpu.dot_dimension_numbers<[1], [0], [0], [1], [0, 0, 1, 1], [], []>} : vector<16x16xbf16>, vector<16x4xbf16>, vector<16x4xf32> -> vector<16x4xf32>
    %7 = vector.broadcast %1 : vector<1x4xf32> to vector<16x4xf32>
    %8 = arith.addf %6, %7 : vector<16x4xf32>
    %cst_7 = arith.constant 0.000000e+00 : f32
    %9 = vector.broadcast %cst_7 : f32 to vector<16x4xf32>
    %10 = arith.maximumf %8, %9 : vector<16x4xf32>
    %cst_8 = arith.constant 0.000000e+00 : f32
    %11 = vector.broadcast %cst_8 : f32 to vector<16x4xf32>
    %12 = arith.select %2, %11, %10 : vector<16x4xf32>
    %c0_9 = arith.constant 0 : index
    %c0_10 = arith.constant 0 : index
    %c0_11 = arith.constant 0 : index
    %c0_12 = arith.constant 0 : index
    %13 = vector.load %arg2[%c0_9, %c0_10, %c0_11, %c0_12] : memref<1x16x16x16xf32, #tpu.memory_space<vmem>>, vector<1x16x16x16xf32>
    %14 = vector.shape_cast %13 : vector<1x16x16x16xf32> to vector<256x16xf32>
    %15 = arith.truncf %14 : vector<256x16xf32> to vector<256x16xbf16>
    %cst_13 = arith.constant dense<0.000000e+00> : vector<256x4xf32>
    %16 = tpu.matmul %15, %0, %cst_13 {dimension_numbers = #tpu.dot_dimension_numbers<[1], [0], [0], [1], [0, 0, 1, 1], [], []>} : vector<256x16xbf16>, vector<16x4xbf16>, vector<256x4xf32> -> vector<256x4xf32>
    %17 = vector.broadcast %1 : vector<1x4xf32> to vector<256x4xf32>
    %18 = arith.addf %16, %17 : vector<256x4xf32>
    %cst_14 = arith.constant 0.000000e+00 : f32
    %19 = vector.broadcast %cst_14 : f32 to vector<256x4xf32>
    %20 = arith.maximumf %18, %19 : vector<256x4xf32>
    %c0_i32_15 = arith.constant 0 : i32
    %21 = arith.cmpi eq, %arg1, %c0_i32_15 : i32
    %c0_16 = arith.constant 0 : index
    %c0_17 = arith.constant 0 : index
    %c0_18 = arith.constant 0 : index
    %c0_19 = arith.constant 0 : index
    %22 = vector.load %arg4[%c0_16, %c0_17, %c0_18, %c0_19] : memref<1x1x16x16xf32, #tpu.memory_space<vmem>>, vector<1x1x16x16xf32>
    %23 = vector.shape_cast %22 : vector<1x1x16x16xf32> to vector<16x16xf32>
    %24 = arith.truncf %23 : vector<16x16xf32> to vector<16x16xbf16>
    %cst_20 = arith.constant dense<0.000000e+00> : vector<16x4xf32>
    %25 = tpu.matmul %24, %0, %cst_20 {dimension_numbers = #tpu.dot_dimension_numbers<[1], [0], [0], [1], [0, 0, 1, 1], [], []>} : vector<16x16xbf16>, vector<16x4xbf16>, vector<16x4xf32> -> vector<16x4xf32>
    %26 = vector.broadcast %1 : vector<1x4xf32> to vector<16x4xf32>
    %27 = arith.addf %25, %26 : vector<16x4xf32>
    %cst_21 = arith.constant 0.000000e+00 : f32
    %28 = vector.broadcast %cst_21 : f32 to vector<16x4xf32>
    %29 = arith.maximumf %27, %28 : vector<16x4xf32>
    %cst_22 = arith.constant 0.000000e+00 : f32
    %30 = vector.broadcast %cst_22 : f32 to vector<16x4xf32>
    %31 = arith.select %21, %30, %29 : vector<16x4xf32>
    %32 = tpu.concatenate %12, %20, %31 in 0 : vector<16x4xf32>, vector<256x4xf32>, vector<16x4xf32> -> vector<288x4xf32>
    %33 = tpu.iota {dimensions = array<i32: 0>} : vector<288x1xi32>
    %c16_i32 = arith.constant 16 : i32
    %c0_i32_23 = arith.constant 0 : i32
    %34 = arith.cmpi eq, %c16_i32, %c0_i32_23 : i32
    %c1_i32 = arith.constant 1 : i32
    %35 = arith.select %34, %c1_i32, %c16_i32 : i32
    %36 = vector.broadcast %35 : i32 to vector<288x1xi32>
    %37 = arith.remsi %33, %36 : vector<288x1xi32>
    %c0_i32_24 = arith.constant 0 : i32
    %38 = vector.broadcast %c0_i32_24 : i32 to vector<288x1xi32>
    %39 = arith.cmpi ne, %37, %38 : vector<288x1xi32>
    %c0_i32_25 = arith.constant 0 : i32
    %40 = vector.broadcast %c0_i32_25 : i32 to vector<288x1xi32>
    %41 = arith.cmpi slt, %37, %40 : vector<288x1xi32>
    %c0_i32_26 = arith.constant 0 : i32
    %42 = arith.cmpi slt, %35, %c0_i32_26 : i32
    %43 = vector.broadcast %42 : i1 to vector<288x1xi1>
    %44 = vector.broadcast %43 : vector<288x1xi1> to vector<288x1xi1>
    %45 = arith.xori %41, %44 : vector<288x1xi1>
    %46 = arith.andi %45, %39 : vector<288x1xi1>
    %47 = vector.broadcast %35 : i32 to vector<288x1xi32>
    %48 = arith.addi %37, %47 : vector<288x1xi32>
    %49 = arith.select %46, %48, %37 : vector<288x1xi1>, vector<288x1xi32>
    %cst_27 = arith.constant 0.000000e+00 : f32
    %50 = vector.broadcast %cst_27 : f32 to vector<1x4xf32>
    %c0_i32_28 = arith.constant 0 : i32
    %51 = vector.broadcast %c0_i32_28 : i32 to vector<288x1xi32>
    %52 = arith.cmpi eq, %49, %51 : vector<288x1xi32>
    %53 = vector.extract_strided_slice %32 {offsets = [0, 0], sizes = [287, 4], strides = [1, 1]} : vector<288x4xf32> to vector<287x4xf32>
    %54 = tpu.concatenate %50, %53 in 0 : vector<1x4xf32>, vector<287x4xf32> -> vector<288x4xf32>
    %cst_29 = arith.constant 0.000000e+00 : f32
    %55 = vector.shape_cast %52 : vector<288x1xi1> to vector<288x1xi1>
    %56 = vector.broadcast %55 : vector<288x1xi1> to vector<288x4xi1>
    %57 = vector.broadcast %cst_29 : f32 to vector<288x4xf32>
    %58 = arith.select %56, %57, %54 : vector<288x4xi1>, vector<288x4xf32>
    %c15_i32 = arith.constant 15 : i32
    %59 = vector.broadcast %c15_i32 : i32 to vector<288x1xi32>
    %60 = arith.cmpi eq, %49, %59 : vector<288x1xi32>
    %61 = vector.extract_strided_slice %32 {offsets = [1, 0], sizes = [287, 4], strides = [1, 1]} : vector<288x4xf32> to vector<287x4xf32>
    %62 = tpu.concatenate %61, %50 in 0 : vector<287x4xf32>, vector<1x4xf32> -> vector<288x4xf32>
    %cst_30 = arith.constant 0.000000e+00 : f32
    %63 = vector.shape_cast %60 : vector<288x1xi1> to vector<288x1xi1>
    %64 = vector.broadcast %63 : vector<288x1xi1> to vector<288x4xi1>
    %65 = vector.broadcast %cst_30 : f32 to vector<288x4xf32>
    %66 = arith.select %64, %65, %62 : vector<288x4xi1>, vector<288x4xf32>
    %67 = tpu.concatenate %58, %32, %66 in 1 : vector<288x4xf32>, vector<288x4xf32>, vector<288x4xf32> -> vector<288x12xf32>
    %68 = arith.truncf %67 : vector<288x12xf32> to vector<288x12xbf16>
    %c0_31 = arith.constant 0 : index
    %c0_32 = arith.constant 0 : index
    %69 = vector.load %arg12[%c0_31, %c0_32] : memref<288x12xbf16, #tpu.memory_space<vmem>>, vector<288x12xbf16>
    tpu.vector_store %arg12[%c0_31, %c0_32], %68 {strides = array<i32>} : memref<288x12xbf16, #tpu.memory_space<vmem>>, vector<288x12xbf16>,
    %c0_33 = arith.constant 0 : index
    %c0_34 = arith.constant 0 : index
    %70 = vector.load %arg12[%c0_33, %c0_34] : memref<288x12xbf16, #tpu.memory_space<vmem>>, vector<256x12xbf16>
    %c0_35 = arith.constant 0 : index
    %c0_36 = arith.constant 0 : index
    %c0_37 = arith.constant 0 : index
    %71 = vector.load %arg7[%c0_35, %c0_36, %c0_37] : memref<3x12x4xbf16, #tpu.memory_space<vmem>>, vector<1x12x4xbf16>
    %72 = vector.shape_cast %71 : vector<1x12x4xbf16> to vector<12x4xbf16>
    %cst_38 = arith.constant dense<0.000000e+00> : vector<256x4xf32>
    %73 = tpu.matmul %70, %72, %cst_38 {dimension_numbers = #tpu.dot_dimension_numbers<[1], [0], [0], [1], [0, 0, 1, 1], [], []>} : vector<256x12xbf16>, vector<12x4xbf16>, vector<256x4xf32> -> vector<256x4xf32>
    %c16 = arith.constant 16 : index
    %c0_39 = arith.constant 0 : index
    %74 = vector.load %arg12[%c16, %c0_39] : memref<288x12xbf16, #tpu.memory_space<vmem>>, vector<256x12xbf16>
    %c1 = arith.constant 1 : index
    %c0_40 = arith.constant 0 : index
    %c0_41 = arith.constant 0 : index
    %75 = vector.load %arg7[%c1, %c0_40, %c0_41] : memref<3x12x4xbf16, #tpu.memory_space<vmem>>, vector<1x12x4xbf16>
    %76 = vector.shape_cast %75 : vector<1x12x4xbf16> to vector<12x4xbf16>
    %cst_42 = arith.constant dense<0.000000e+00> : vector<256x4xf32>
    %77 = tpu.matmul %74, %76, %cst_42 {dimension_numbers = #tpu.dot_dimension_numbers<[1], [0], [0], [1], [0, 0, 1, 1], [], []>} : vector<256x12xbf16>, vector<12x4xbf16>, vector<256x4xf32> -> vector<256x4xf32>
    %78 = arith.addf %73, %77 : vector<256x4xf32>
    %c32 = arith.constant 32 : index
    %c0_43 = arith.constant 0 : index
    %79 = vector.load %arg12[%c32, %c0_43] : memref<288x12xbf16, #tpu.memory_space<vmem>>, vector<256x12xbf16>
    %c2 = arith.constant 2 : index
    %c0_44 = arith.constant 0 : index
    %c0_45 = arith.constant 0 : index
    %80 = vector.load %arg7[%c2, %c0_44, %c0_45] : memref<3x12x4xbf16, #tpu.memory_space<vmem>>, vector<1x12x4xbf16>
    %81 = vector.shape_cast %80 : vector<1x12x4xbf16> to vector<12x4xbf16>
    %cst_46 = arith.constant dense<0.000000e+00> : vector<256x4xf32>
    %82 = tpu.matmul %79, %81, %cst_46 {dimension_numbers = #tpu.dot_dimension_numbers<[1], [0], [0], [1], [0, 0, 1, 1], [], []>} : vector<256x12xbf16>, vector<12x4xbf16>, vector<256x4xf32> -> vector<256x4xf32>
    %83 = arith.addf %78, %82 : vector<256x4xf32>
    %c0_47 = arith.constant 0 : index
    %c0_48 = arith.constant 0 : index
    %84 = vector.load %arg8[%c0_47, %c0_48] : memref<1x4xf32, #tpu.memory_space<vmem>>, vector<1x4xf32>
    %85 = vector.broadcast %84 : vector<1x4xf32> to vector<256x4xf32>
    %86 = arith.addf %83, %85 : vector<256x4xf32>
    %cst_49 = arith.constant 0.000000e+00 : f32
    %87 = vector.broadcast %cst_49 : f32 to vector<256x4xf32>
    %88 = arith.maximumf %86, %87 : vector<256x4xf32>
    %c0_50 = arith.constant 0 : index
    %c0_51 = arith.constant 0 : index
    %c0_52 = arith.constant 0 : index
    %c0_53 = arith.constant 0 : index
    %89 = vector.load %arg2[%c0_50, %c0_51, %c0_52, %c0_53] : memref<1x16x16x16xf32, #tpu.memory_space<vmem>>, vector<1x16x16x16xf32>
    %90 = vector.shape_cast %89 : vector<1x16x16x16xf32> to vector<256x16xf32>
    %91 = arith.truncf %88 : vector<256x4xf32> to vector<256x4xbf16>
    %c0_54 = arith.constant 0 : index
    %c0_55 = arith.constant 0 : index
    %92 = vector.load %arg9[%c0_54, %c0_55] : memref<4x16xbf16, #tpu.memory_space<vmem>>, vector<4x16xbf16>
    %cst_56 = arith.constant dense<0.000000e+00> : vector<256x16xf32>
    %93 = tpu.matmul %91, %92, %cst_56 {dimension_numbers = #tpu.dot_dimension_numbers<[1], [0], [0], [1], [0, 0, 1, 1], [], []>} : vector<256x4xbf16>, vector<4x16xbf16>, vector<256x16xf32> -> vector<256x16xf32>
    %c0_57 = arith.constant 0 : index
    %c0_58 = arith.constant 0 : index
    %94 = vector.load %arg10[%c0_57, %c0_58] : memref<1x16xf32, #tpu.memory_space<vmem>>, vector<1x16xf32>
    %95 = vector.broadcast %94 : vector<1x16xf32> to vector<256x16xf32>
    %96 = arith.addf %93, %95 : vector<256x16xf32>
    %97 = arith.addf %96, %90 : vector<256x16xf32>
    %cst_59 = arith.constant 0.000000e+00 : f32
    %98 = vector.broadcast %cst_59 : f32 to vector<256x16xf32>
    %99 = arith.maximumf %97, %98 : vector<256x16xf32>
    %100 = vector.shape_cast %99 : vector<256x16xf32> to vector<1x16x16x16xf32>
    %c0_60 = arith.constant 0 : index
    %c0_61 = arith.constant 0 : index
    %c0_62 = arith.constant 0 : index
    %c0_63 = arith.constant 0 : index
    %101 = vector.load %arg11[%c0_60, %c0_61, %c0_62, %c0_63] : memref<1x16x16x16xf32, #tpu.memory_space<vmem>>, vector<1x16x16x16xf32>
    tpu.vector_store %arg11[%c0_60, %c0_61, %c0_62, %c0_63], %100 {strides = array<i32>} : memref<1x16x16x16xf32, #tpu.memory_space<vmem>>, vector<1x16x16x16xf32>,
    return
  }
  func.func @transform_0(%arg0: i32, %arg1: i32) -> (i32, i32, i32, i32) {
    %c0_i32 = arith.constant 0 : i32
    %c0_i32_0 = arith.constant 0 : i32
    %c0_i32_1 = arith.constant 0 : i32
    return %arg0, %arg1, %c0_i32, %c0_i32_0 : i32, i32, i32, i32
  }
  func.func @transform_1(%arg0: i32, %arg1: i32) -> (i32, i32, i32, i32) {
    %c16_i32 = arith.constant 16 : i32
    %0 = arith.muli %arg1, %c16_i32 : i32
    %c1_i32 = arith.constant 1 : i32
    %1 = arith.subi %0, %c1_i32 : i32
    %c0_i32 = arith.constant 0 : i32
    %2 = arith.maxsi %1, %c0_i32 : i32
    %c0_i32_0 = arith.constant 0 : i32
    %c0_i32_1 = arith.constant 0 : i32
    %c0_i32_2 = arith.constant 0 : i32
    return %arg0, %2, %c0_i32_0, %c0_i32_1 : i32, i32, i32, i32
  }
  func.func @transform_2(%arg0: i32, %arg1: i32) -> (i32, i32, i32, i32) {
    %c16_i32 = arith.constant 16 : i32
    %0 = arith.muli %arg1, %c16_i32 : i32
    %c16_i32_0 = arith.constant 16 : i32
    %1 = arith.addi %0, %c16_i32_0 : i32
    %c15_i32 = arith.constant 15 : i32
    %2 = arith.minsi %1, %c15_i32 : i32
    %c0_i32 = arith.constant 0 : i32
    %c0_i32_1 = arith.constant 0 : i32
    %c0_i32_2 = arith.constant 0 : i32
    return %arg0, %2, %c0_i32, %c0_i32_1 : i32, i32, i32, i32
  }
  func.func @transform_3(%arg0: i32, %arg1: i32) -> (i32, i32) {
    %c0_i32 = arith.constant 0 : i32
    %c0_i32_0 = arith.constant 0 : i32
    %c0_i32_1 = arith.constant 0 : i32
    return %c0_i32, %c0_i32_0 : i32, i32
  }
  func.func @transform_4(%arg0: i32, %arg1: i32) -> (i32, i32) {
    %c0_i32 = arith.constant 0 : i32
    %c0_i32_0 = arith.constant 0 : i32
    %c0_i32_1 = arith.constant 0 : i32
    return %c0_i32, %c0_i32_0 : i32, i32
  }
  func.func @transform_5(%arg0: i32, %arg1: i32) -> (i32, i32, i32) {
    %c0_i32 = arith.constant 0 : i32
    %c0_i32_0 = arith.constant 0 : i32
    %c0_i32_1 = arith.constant 0 : i32
    %c0_i32_2 = arith.constant 0 : i32
    return %c0_i32, %c0_i32_0, %c0_i32_1 : i32, i32, i32
  }
  func.func @transform_6(%arg0: i32, %arg1: i32) -> (i32, i32) {
    %c0_i32 = arith.constant 0 : i32
    %c0_i32_0 = arith.constant 0 : i32
    %c0_i32_1 = arith.constant 0 : i32
    return %c0_i32, %c0_i32_0 : i32, i32
  }
  func.func @transform_7(%arg0: i32, %arg1: i32) -> (i32, i32) {
    %c0_i32 = arith.constant 0 : i32
    %c0_i32_0 = arith.constant 0 : i32
    %c0_i32_1 = arith.constant 0 : i32
    return %c0_i32, %c0_i32_0 : i32, i32
  }
  func.func @transform_8(%arg0: i32, %arg1: i32) -> (i32, i32) {
    %c0_i32 = arith.constant 0 : i32
    %c0_i32_0 = arith.constant 0 : i32
    %c0_i32_1 = arith.constant 0 : i32
    return %c0_i32, %c0_i32_0 : i32, i32
  }
  func.func @transform_9(%arg0: i32, %arg1: i32) -> (i32, i32, i32, i32) {
    %c0_i32 = arith.constant 0 : i32
    %c0_i32_0 = arith.constant 0 : i32
    %c0_i32_1 = arith.constant 0 : i32
    return %arg0, %arg1, %c0_i32, %c0_i32_0 : i32, i32, i32, i32
  }
}

</mosaic_0001>

<llo_original>
// kernel: tpu_custom_call.1
$region0: #{tpu_custom_call.1}
  #allocation0 [shape = 'u32[]', space=smem, size = 0x4, offset = 0x4, fixed_abs, tag = 'smem constant byte address 0x4 - core index']
  #allocation1 [shape = 'u32[144,128]{1,0:T(1,128)}', space=vmem, size = 0x12000, scoped, tag = 'internal scratch']
  #allocation2 [shape = 'bf16[288,12]{1,0:T(16,128)(2,1)}', space=vmem, size = 0x12000, scoped, tag = 'scratch operand']
  %s0 = inlined_call_operand.hbm [shape: f32[2,16,16,16], index: 0, kind: input, shape index: {}]
  %s1 = inlined_call_operand.hbm [shape: f32[2,16,16,16], index: 1, kind: input, shape index: {}]
  %s2 = inlined_call_operand.hbm [shape: f32[2,16,16,16], index: 2, kind: input, shape index: {}]
  %s3 = inlined_call_operand.vmem [shape: bf16[16,4], index: 3, kind: input, shape index: {}]
  %s4 = inlined_call_operand.vmem [shape: f32[1,4], index: 4, kind: input, shape index: {}]
  %s5 = inlined_call_operand.vmem [shape: bf16[3,12,4], index: 5, kind: input, shape index: {}]
  %s6 = inlined_call_operand.vmem [shape: f32[1,4], index: 6, kind: input, shape index: {}]
  %s7 = inlined_call_operand.vmem [shape: bf16[4,16], index: 7, kind: input, shape index: {}]
  %s8 = inlined_call_operand.vmem [shape: f32[1,16], index: 8, kind: input, shape index: {}]
  %s9 = inlined_call_operand.hbm [shape: f32[2,16,16,16], index: 9, kind: output, shape index: {}]
  %s10 = sld [smem:[#allocation0]]
  $region81: #{tpu_custom_call.1} parent=0
    _
  %s12 = ssub.s32 1, %s10
  %s13 = scalar_select 0, %s12, %s10
  $region1: #{tpu_custom_call.1} parent=0
    #allocation3 [shape = 'u8[262144]{0}', space=vmem, size = 0x40000, scoped, tag = 'input window, operand 0']
    #allocation4 [shape = 's32[2]{0}', space=sflag, size = 0x8, scoped, tag = 'scoped memory for tpu_custom_call.1']
    #allocation5 [shape = 's32[2]{0}', space=sflag, size = 0x8, scoped, tag = 'scoped memory for tpu_custom_call.1']
    #allocation6 [shape = 'u8[16384]{0}', space=vmem, size = 0x4000, scoped, tag = 'input window, operand 1']
    #allocation7 [shape = 's32[2]{0}', space=sflag, size = 0x8, scoped, tag = 'scoped memory for tpu_custom_call.1']
    #allocation8 [shape = 'u8[16384]{0}', space=vmem, size = 0x4000, scoped, tag = 'input window, operand 2']
    #allocation9 [shape = 'u8[262144]{0}', space=vmem, size = 0x40000, scoped, tag = 'output window, operand 0']
    %14 = vsyncpa [#allocation4], 0
    %s15 = scalar_lea.sflag [#allocation4], 1
    %16 = vsyncpa %s15, 0
    %17 = vsyncpa [#allocation7], 0
    %s18 = scalar_lea.sflag [#allocation7], 1
    %19 = vsyncpa %s18, 0
    %20 = vsyncpa [#allocation5], 0
    %s21 = scalar_lea.sflag [#allocation5], 1
    %22 = vsyncpa %s21, 0
    loop: start=0, step=1, limit=4
    $region2: #{tpu_custom_call.1} parent=1 // loop_pre_header
      _
    $region3: #{tpu_custom_call.1} parent=1 // loop_header
      %s24 = sphi 0, %s28
      %p25 = scmp.ge.s32.totalorder %s24, 4
      %s31 = sphi 0, %s43
      %s32 = sphi 0, %s39
      %s33 = sphi 0, %s31
      %s34 = sphi 0, %s32
      %s35 = sphi 0, %s33
      %s36 = sphi 0, %s34
      %s48 = sphi 0, %s50
      %s51 = sphi 0, %s48
      %s52 = sphi 0, %s51
      %s68 = sphi 0, %s52
      %s84 = sphi 0, %s86
      %s87 = sphi 0, %s84
      %s88 = sphi 0, %s87
      %s104 = sphi 0, %s88
      %s120 = sphi 0, %s122
      %s123 = sphi 0, %s120
      %s124 = sphi 0, %s123
      %s140 = sphi 0, %s124
      %s144 = sphi 0, %s144
      %s146 = sphi 0, %s144
      %s147 = sphi 0, %s146
      %s161 = sphi 0, %s147
      %s165 = sphi 0, %s165
      %s167 = sphi 0, %s165
      %s168 = sphi 0, %s167
      %s182 = sphi 0, %s168
      %s186 = sphi 0, %s186
      %s188 = sphi 0, %s186
      %s189 = sphi 0, %s188
      %s203 = sphi 0, %s189
      %s207 = sphi 0, %s207
      %s209 = sphi 0, %s207
      %s210 = sphi 0, %s209
      %s224 = sphi 0, %s210
      %s228 = sphi 0, %s228
      %s230 = sphi 0, %s228
      %s231 = sphi 0, %s230
      %s245 = sphi 0, %s231
      %s249 = sphi 0, %s249
      %s251 = sphi 0, %s249
      %s252 = sphi 0, %s251
      %s266 = sphi 0, %s252
      %s274 = sphi 0, %s276
      %s277 = sphi 0, %s274
      %s278 = sphi 0, %s277
      %s294 = sphi 0, %s278
    $region4: #{tpu_custom_call.1} parent=1 // loop_header_branch
      %27 = sbr.rel (%p25) target = $region8
    $region5: #{tpu_custom_call.1} parent=1 // loop_body
      %s29 = ssub.s32 %s24, 1
      %s30 = ssub.s32 %s24, 2
      %s37 = sadd.s32 1, %s32
      %p38 = scmp.ge.s32.totalorder %s37, 1
      %s39 = scalar_select %p38, 0, %s37
      %s40 = sadd.s32 1, %s31
      %s41 = scalar_select %p38, %s40, %s31
      %p42 = scmp.ge.s32.totalorder %s41, 2
      %s43 = scalar_select %p42, 0, %s41
      %s44 = ssub.s32 %s31, %s43
      %s45 = ssub.s32 %s32, %s39
      %s46 = sor.u32 %s44, %s45
      %p47 = scmp.eq.s32.totalorder %s46, 0
      %s49 = sadd.s32 %s48, 1
      %s50 = scalar_select %p47, %s48, %s49
      %p53 = pneg %p47
      %p54 = scmp.eq.s32.totalorder %s24, 1
      %p55 = por %p53, %p54
      %p56 = scmp.ne.s32.totalorder %s48, %s51
      %p57 = scmp.eq.s32.totalorder %s24, 0
      %p58 = por %p56, %p57
      %p59 = scmp.ne.s32.totalorder %s48, %s51
      %p60 = scmp.eq.s32.totalorder %s29, 1
      %p61 = por %p59, %p60
      %p62 = scmp.ne.s32.totalorder %s51, %s52
      %p63 = scmp.eq.s32.totalorder %s29, 0
      %p64 = por %p62, %p63
      %p65 = scmp.ne.s32.totalorder %s51, %s52
      %p66 = scmp.eq.s32.totalorder %s30, 1
      %p67 = por %p65, %p66
      %p69 = scmp.ne.s32.totalorder %s52, %s68
      %p70 = scmp.eq.s32.totalorder %s30, 0
      %p71 = por %p69, %p70
      %s72 = smul.u32 %s32, 16
      %s73 = ssub.s32 %s72, 1
      %p74 = scmp.gt.s32.totalorder %s73, 0
      %s75 = scalar_select %p74, %s73, 0
      %s76 = smul.u32 %s39, 16
      %s77 = ssub.s32 %s76, 1
      %p78 = scmp.gt.s32.totalorder %s77, 0
      %s79 = scalar_select %p78, %s77, 0
      %s80 = ssub.s32 %s31, %s43
      %s81 = ssub.s32 %s75, %s79
      %s82 = sor.u32 %s80, %s81
      %p83 = scmp.eq.s32.totalorder %s82, 0
      %s85 = sadd.s32 %s84, 1
      %s86 = scalar_select %p83, %s84, %s85
      %p89 = pneg %p83
      %p90 = scmp.eq.s32.totalorder %s24, 1
      %p91 = por %p89, %p90
      %p92 = scmp.ne.s32.totalorder %s84, %s87
      %p93 = scmp.eq.s32.totalorder %s24, 0
      %p94 = por %p92, %p93
      %p95 = scmp.ne.s32.totalorder %s84, %s87
      %p96 = scmp.eq.s32.totalorder %s29, 1
      %p97 = por %p95, %p96
      %p98 = scmp.ne.s32.totalorder %s87, %s88
      %p99 = scmp.eq.s32.totalorder %s29, 0
      %p100 = por %p98, %p99
      %p101 = scmp.ne.s32.totalorder %s87, %s88
      %p102 = scmp.eq.s32.totalorder %s30, 1
      %p103 = por %p101, %p102
      %p105 = scmp.ne.s32.totalorder %s88, %s104
      %p106 = scmp.eq.s32.totalorder %s30, 0
      %p107 = por %p105, %p106
      %s108 = smul.u32 %s32, 16
      %s109 = sadd.s32 %s108, 16
      %p110 = scmp.lt.s32.totalorder %s109, 15
      %s111 = scalar_select %p110, %s109, 15
      %s112 = smul.u32 %s39, 16
      %s113 = sadd.s32 %s112, 16
      %p114 = scmp.lt.s32.totalorder %s113, 15
      %s115 = scalar_select %p114, %s113, 15
      %s116 = ssub.s32 %s31, %s43
      %s117 = ssub.s32 %s111, %s115
      %s118 = sor.u32 %s116, %s117
      %p119 = scmp.eq.s32.totalorder %s118, 0
      %s121 = sadd.s32 %s120, 1
      %s122 = scalar_select %p119, %s120, %s121
      %p125 = pneg %p119
      %p126 = scmp.eq.s32.totalorder %s24, 1
      %p127 = por %p125, %p126
      %p128 = scmp.ne.s32.totalorder %s120, %s123
      %p129 = scmp.eq.s32.totalorder %s24, 0
      %p130 = por %p128, %p129
      %p131 = scmp.ne.s32.totalorder %s120, %s123
      %p132 = scmp.eq.s32.totalorder %s29, 1
      %p133 = por %p131, %p132
      %p134 = scmp.ne.s32.totalorder %s123, %s124
      %p135 = scmp.eq.s32.totalorder %s29, 0
      %p136 = por %p134, %p135
      %p137 = scmp.ne.s32.totalorder %s123, %s124
      %p138 = scmp.eq.s32.totalorder %s30, 1
      %p139 = por %p137, %p138
      %p141 = scmp.ne.s32.totalorder %s124, %s140
      %p142 = scmp.eq.s32.totalorder %s30, 0
      %p143 = por %p141, %p142
      %s145 = sadd.s32 %s144, 1
      %p148 = scmp.eq.s32.totalorder %s24, 1
      %p149 = scmp.ne.s32.totalorder %s144, %s146
      %p150 = scmp.eq.s32.totalorder %s24, 0
      %p151 = por %p149, %p150
      %p152 = scmp.ne.s32.totalorder %s144, %s146
      %p153 = scmp.eq.s32.totalorder %s29, 1
      %p154 = por %p152, %p153
      %p155 = scmp.ne.s32.totalorder %s146, %s147
      %p156 = scmp.eq.s32.totalorder %s29, 0
      %p157 = por %p155, %p156
      %p158 = scmp.ne.s32.totalorder %s146, %s147
      %p159 = scmp.eq.s32.totalorder %s30, 1
      %p160 = por %p158, %p159
      %p162 = scmp.ne.s32.totalorder %s147, %s161
      %p163 = scmp.eq.s32.totalorder %s30, 0
      %p164 = por %p162, %p163
      %s166 = sadd.s32 %s165, 1
      %p169 = scmp.eq.s32.totalorder %s24, 1
      %p170 = scmp.ne.s32.totalorder %s165, %s167
      %p171 = scmp.eq.s32.totalorder %s24, 0
      %p172 = por %p170, %p171
      %p173 = scmp.ne.s32.totalorder %s165, %s167
      %p174 = scmp.eq.s32.totalorder %s29, 1
      %p175 = por %p173, %p174
      %p176 = scmp.ne.s32.totalorder %s167, %s168
      %p177 = scmp.eq.s32.totalorder %s29, 0
      %p178 = por %p176, %p177
      %p179 = scmp.ne.s32.totalorder %s167, %s168
      %p180 = scmp.eq.s32.totalorder %s30, 1
      %p181 = por %p179, %p180
      %p183 = scmp.ne.s32.totalorder %s168, %s182
      %p184 = scmp.eq.s32.totalorder %s30, 0
      %p185 = por %p183, %p184
      %s187 = sadd.s32 %s186, 1
      %p190 = scmp.eq.s32.totalorder %s24, 1
      %p191 = scmp.ne.s32.totalorder %s186, %s188
      %p192 = scmp.eq.s32.totalorder %s24, 0
      %p193 = por %p191, %p192
      %p194 = scmp.ne.s32.totalorder %s186, %s188
      %p195 = scmp.eq.s32.totalorder %s29, 1
      %p196 = por %p194, %p195
      %p197 = scmp.ne.s32.totalorder %s188, %s189
      %p198 = scmp.eq.s32.totalorder %s29, 0
      %p199 = por %p197, %p198
      %p200 = scmp.ne.s32.totalorder %s188, %s189
      %p201 = scmp.eq.s32.totalorder %s30, 1
      %p202 = por %p200, %p201
      %p204 = scmp.ne.s32.totalorder %s189, %s203
      %p205 = scmp.eq.s32.totalorder %s30, 0
      %p206 = por %p204, %p205
      %s208 = sadd.s32 %s207, 1
      %p211 = scmp.eq.s32.totalorder %s24, 1
      %p212 = scmp.ne.s32.totalorder %s207, %s209
      %p213 = scmp.eq.s32.totalorder %s24, 0
      %p214 = por %p212, %p213
      %p215 = scmp.ne.s32.totalorder %s207, %s209
      %p216 = scmp.eq.s32.totalorder %s29, 1
      %p217 = por %p215, %p216
      %p218 = scmp.ne.s32.totalorder %s209, %s210
      %p219 = scmp.eq.s32.totalorder %s29, 0
      %p220 = por %p218, %p219
      %p221 = scmp.ne.s32.totalorder %s209, %s210
      %p222 = scmp.eq.s32.totalorder %s30, 1
      %p223 = por %p221, %p222
      %p225 = scmp.ne.s32.totalorder %s210, %s224
      %p226 = scmp.eq.s32.totalorder %s30, 0
      %p227 = por %p225, %p226
      %s229 = sadd.s32 %s228, 1
      %p232 = scmp.eq.s32.totalorder %s24, 1
      %p233 = scmp.ne.s32.totalorder %s228, %s230
      %p234 = scmp.eq.s32.totalorder %s24, 0
      %p235 = por %p233, %p234
      %p236 = scmp.ne.s32.totalorder %s228, %s230
      %p237 = scmp.eq.s32.totalorder %s29, 1
      %p238 = por %p236, %p237
      %p239 = scmp.ne.s32.totalorder %s230, %s231
      %p240 = scmp.eq.s32.totalorder %s29, 0
      %p241 = por %p239, %p240
      %p242 = scmp.ne.s32.totalorder %s230, %s231
      %p243 = scmp.eq.s32.totalorder %s30, 1
      %p244 = por %p242, %p243
      %p246 = scmp.ne.s32.totalorder %s231, %s245
      %p247 = scmp.eq.s32.totalorder %s30, 0
      %p248 = por %p246, %p247
      %s250 = sadd.s32 %s249, 1
      %p253 = scmp.eq.s32.totalorder %s24, 1
      %p254 = scmp.ne.s32.totalorder %s249, %s251
      %p255 = scmp.eq.s32.totalorder %s24, 0
      %p256 = por %p254, %p255
      %p257 = scmp.ne.s32.totalorder %s249, %s251
      %p258 = scmp.eq.s32.totalorder %s29, 1
      %p259 = por %p257, %p258
      %p260 = scmp.ne.s32.totalorder %s251, %s252
      %p261 = scmp.eq.s32.totalorder %s29, 0
      %p262 = por %p260, %p261
      %p263 = scmp.ne.s32.totalorder %s251, %s252
      %p264 = scmp.eq.s32.totalorder %s30, 1
      %p265 = por %p263, %p264
      %p267 = scmp.ne.s32.totalorder %s252, %s266
      %p268 = scmp.eq.s32.totalorder %s30, 0
      %p269 = por %p267, %p268
      %s270 = ssub.s32 %s31, %s43
      %s271 = ssub.s32 %s32, %s39
      %s272 = sor.u32 %s270, %s271
      %p273 = scmp.eq.s32.totalorder %s272, 0
      %s275 = sadd.s32 %s274, 1
      %s276 = scalar_select %p273, %s274, %s275
      %p279 = pneg %p273
      %p280 = scmp.eq.s32.totalorder %s24, 1
      %p281 = por %p279, %p280
      %p282 = scmp.ne.s32.totalorder %s274, %s277
      %p283 = scmp.eq.s32.totalorder %s24, 0
      %p284 = por %p282, %p283
      %p285 = scmp.ne.s32.totalorder %s274, %s277
      %p286 = scmp.eq.s32.totalorder %s29, 1
      %p287 = por %p285, %p286
      %p288 = scmp.ne.s32.totalorder %s277, %s278
      %p289 = scmp.eq.s32.totalorder %s29, 0
      %p290 = por %p288, %p289
      %p291 = scmp.ne.s32.totalorder %s277, %s278
      %p292 = scmp.eq.s32.totalorder %s30, 1
      %p293 = por %p291, %p292
      %p295 = scmp.ne.s32.totalorder %s278, %s294
      %p296 = scmp.eq.s32.totalorder %s30, 0
      %p297 = por %p295, %p296
      %p298 = scmp.le.s32.totalorder 1, %s24
      %p299 = scmp.lt.s32.totalorder %s24, 3
      %p300 = pnand %p298, %p299
      %p301 = pneg %p300
      // Predicated region
      $region9: #{tpu_custom_call.1} parent=5 // pred_check
        _
      $region10: #{tpu_custom_call.1} parent=5 // pred_check_branch
        %303 = sbr.rel (%p300) target = $region12
      $region11: #{tpu_custom_call.1} parent=5 // pred_region
        %s304 = ssub.s32 %s24, 1
        // Predicated region
        $region13: #{tpu_custom_call.1} parent=11 // pred_check
          %p305 = pneg %p157
        $region14: #{tpu_custom_call.1} parent=11 // pred_check_branch
          %307 = sbr.rel (%p305) target = $region16
        $region15: #{tpu_custom_call.1} parent=11 // pred_region
          _
        $region16: #{tpu_custom_call.1} parent=11 // pred_fallthru
          _
        // Predicated region
        $region17: #{tpu_custom_call.1} parent=11 // pred_check
          %p308 = pneg %p178
        $region18: #{tpu_custom_call.1} parent=11 // pred_check_branch
          %310 = sbr.rel (%p308) target = $region20
        $region19: #{tpu_custom_call.1} parent=11 // pred_region
          _
        $region20: #{tpu_custom_call.1} parent=11 // pred_fallthru
          _
        // Predicated region
        $region21: #{tpu_custom_call.1} parent=11 // pred_check
          %p311 = pneg %p199
        $region22: #{tpu_custom_call.1} parent=11 // pred_check_branch
          %313 = sbr.rel (%p311) target = $region24
        $region23: #{tpu_custom_call.1} parent=11 // pred_region
          _
        $region24: #{tpu_custom_call.1} parent=11 // pred_fallthru
          _
        // Predicated region
        $region25: #{tpu_custom_call.1} parent=11 // pred_check
          %p314 = pneg %p220
        $region26: #{tpu_custom_call.1} parent=11 // pred_check_branch
          %316 = sbr.rel (%p314) target = $region28
        $region27: #{tpu_custom_call.1} parent=11 // pred_region
          _
        $region28: #{tpu_custom_call.1} parent=11 // pred_fallthru
          _
        // Predicated region
        $region29: #{tpu_custom_call.1} parent=11 // pred_check
          %p317 = pneg %p241
        $region30: #{tpu_custom_call.1} parent=11 // pred_check_branch
          %319 = sbr.rel (%p317) target = $region32
        $region31: #{tpu_custom_call.1} parent=11 // pred_region
          _
        $region32: #{tpu_custom_call.1} parent=11 // pred_fallthru
          _
        // Predicated region
        $region33: #{tpu_custom_call.1} parent=11 // pred_check
          %p320 = pneg %p262
        $region34: #{tpu_custom_call.1} parent=11 // pred_check_branch
          %322 = sbr.rel (%p320) target = $region36
        $region35: #{tpu_custom_call.1} parent=11 // pred_region
          _
        $region36: #{tpu_custom_call.1} parent=11 // pred_fallthru
          _
      $region12: #{tpu_custom_call.1} parent=5 // pred_fallthru
        _
      %p323 = scmp.lt.s32.totalorder %s24, 2
      // Predicated region
      $region37: #{tpu_custom_call.1} parent=5 // pred_check
        %p324 = pneg %p323
      $region38: #{tpu_custom_call.1} parent=5 // pred_check_branch
        %326 = sbr.rel (%p324) target = $region40
      $region39: #{tpu_custom_call.1} parent=5 // pred_region
        // Predicated region
        $region41: #{tpu_custom_call.1} parent=39 // pred_check
          %p327 = pneg %p58
        $region42: #{tpu_custom_call.1} parent=39 // pred_check_branch
          %329 = sbr.rel (%p327) target = $region44
        $region43: #{tpu_custom_call.1} parent=39 // pred_region
          %s330 = sand.u32 %s48, 1
          %s331 = scalar_lea.sflag [#allocation4], %s330
          %s332 = sand.u32 %s48, 1
          %s333 = smul.addr %s332, 256
          %s334 = scalar_lea.vmem [#allocation3], %s333
          %s335 = smul.u32 16, %s32
          %s337 = ssub.s32 4096, 4096
          %338 = vsyncadd %s331, %s337
          %s339 = smul.addr %s335, 2
          %s340 = smul.addr %s31, 32
          %s341 = sadd.s32 %s339, %s340
          %s342 = smul.addr %s341, 128
          %s343 = scalar_lea.hbm %s0, %s342
          %s344 = sshll.u32 %s334, 4
          %s345 = int_to_ptr.vmem [resolvable:$true] %s344
          %350 = dma.hbm_to_vmem [thread:$0]  %s343, 4096, %s345, %s331, 128, 128, 8
        $region44: #{tpu_custom_call.1} parent=39 // pred_fallthru
          _
        // Predicated region
        $region45: #{tpu_custom_call.1} parent=39 // pred_check
          %p351 = pneg %p94
        $region46: #{tpu_custom_call.1} parent=39 // pred_check_branch
          %353 = sbr.rel (%p351) target = $region48
        $region47: #{tpu_custom_call.1} parent=39 // pred_region
          %s354 = sand.u32 %s24, 1
          %s355 = scalar_lea.sflag [#allocation7], %s354
          %s356 = sand.u32 %s84, 1
          %s357 = smul.addr %s356, 16
          %s358 = scalar_lea.vmem [#allocation6], %s357
          %s359 = smul.u32 %s32, 16
          %s360 = ssub.s32 %s359, 1
          %p361 = scmp.gt.s32.totalorder %s360, 0
          %s362 = scalar_select %p361, %s360, 0
          %s364 = ssub.s32 256, 256
          %365 = vsyncadd %s355, %s364
          %s366 = smul.addr %s362, 2
          %s367 = smul.addr %s31, 32
          %s368 = sadd.s32 %s366, %s367
          %s369 = smul.addr %s368, 128
          %s370 = scalar_lea.hbm %s1, %s369
          %s371 = sshll.u32 %s358, 4
          %s372 = int_to_ptr.vmem [resolvable:$true] %s371
          %377 = dma.hbm_to_vmem [thread:$0]  %s370, 256, %s372, %s355, 128, 128, 8
        $region48: #{tpu_custom_call.1} parent=39 // pred_fallthru
          _
        // Predicated region
        $region49: #{tpu_custom_call.1} parent=39 // pred_check
          %p378 = pneg %p130
        $region50: #{tpu_custom_call.1} parent=39 // pred_check_branch
          %380 = sbr.rel (%p378) target = $region52
        $region51: #{tpu_custom_call.1} parent=39 // pred_region
          %s381 = sand.u32 %s24, 1
          %s382 = scalar_lea.sflag [#allocation7], %s381
          %s383 = sand.u32 %s120, 1
          %s384 = smul.addr %s383, 16
          %s385 = scalar_lea.vmem [#allocation8], %s384
          %s386 = smul.u32 %s32, 16
          %s387 = sadd.s32 %s386, 16
          %p388 = scmp.lt.s32.totalorder %s387, 15
          %s389 = scalar_select %p388, %s387, 15
          %s391 = ssub.s32 256, 256
          %392 = vsyncadd %s382, %s391
          %s393 = smul.addr %s389, 2
          %s394 = smul.addr %s31, 32
          %s395 = sadd.s32 %s393, %s394
          %s396 = smul.addr %s395, 128
          %s397 = scalar_lea.hbm %s2, %s396
          %s398 = sshll.u32 %s385, 4
          %s399 = int_to_ptr.vmem [resolvable:$true] %s398
          %404 = dma.hbm_to_vmem [thread:$0]  %s397, 256, %s399, %s382, 128, 128, 8
        $region52: #{tpu_custom_call.1} parent=39 // pred_fallthru
          _
      $region40: #{tpu_custom_call.1} parent=5 // pred_fallthru
        _
      %p405 = scmp.le.s32.totalorder 1, %s24
      %p406 = scmp.lt.s32.totalorder %s24, 3
      %p407 = pnand %p405, %p406
      %p408 = pneg %p407
      // Predicated region
      $region53: #{tpu_custom_call.1} parent=5 // pred_check
        _
      $region54: #{tpu_custom_call.1} parent=5 // pred_check_branch
        %410 = sbr.rel (%p407) target = $region56
      $region55: #{tpu_custom_call.1} parent=5 // pred_region
        %s411 = ssub.s32 %s24, 1
        %s412 = sand.u32 %s51, 1
        %s413 = scalar_lea.sflag [#allocation4], %s412
        %s414 = sand.u32 %s51, 1
        %s415 = smul.addr %s414, 256
        %s416 = scalar_lea.vmem [#allocation3], %s415
        // Predicated region
        $region57: #{tpu_custom_call.1} parent=55 // pred_check
          %p417 = pneg %p64
        $region58: #{tpu_custom_call.1} parent=55 // pred_check_branch
          %419 = sbr.rel (%p417) target = $region60
        $region59: #{tpu_custom_call.1} parent=55 // pred_region
          %420 = dma.done %s413, 4096
        $region60: #{tpu_custom_call.1} parent=55 // pred_fallthru
          _
        %s421 = sand.u32 %s29, 1
        %s422 = scalar_lea.sflag [#allocation7], %s421
        %s423 = sand.u32 %s87, 1
        %s424 = smul.addr %s423, 16
        %s425 = scalar_lea.vmem [#allocation6], %s424
        // Predicated region
        $region61: #{tpu_custom_call.1} parent=55 // pred_check
          %p426 = pneg %p100
        $region62: #{tpu_custom_call.1} parent=55 // pred_check_branch
          %428 = sbr.rel (%p426) target = $region64
        $region63: #{tpu_custom_call.1} parent=55 // pred_region
          %429 = dma.done %s422, 256
        $region64: #{tpu_custom_call.1} parent=55 // pred_fallthru
          _
        %s430 = sand.u32 %s29, 1
        %s431 = scalar_lea.sflag [#allocation7], %s430
        %s432 = sand.u32 %s123, 1
        %s433 = smul.addr %s432, 16
        %s434 = scalar_lea.vmem [#allocation8], %s433
        // Predicated region
        $region65: #{tpu_custom_call.1} parent=55 // pred_check
          %p435 = pneg %p136
        $region66: #{tpu_custom_call.1} parent=55 // pred_check_branch
          %437 = sbr.rel (%p435) target = $region68
        $region67: #{tpu_custom_call.1} parent=55 // pred_region
          %438 = dma.done %s431, 256
        $region68: #{tpu_custom_call.1} parent=55 // pred_fallthru
          _
        %s439 = sand.u32 %s51, 1
        %s440 = scalar_lea.sflag [#allocation4], %s439
        %s441 = sand.u32 %s51, 1
        %s442 = smul.addr %s441, 256
        %s443 = scalar_lea.vmem [#allocation3], %s442
        %p444 = pneg %p64
        %p445 = pneg %p61
        %s446 = sand.u32 %s29, 1
        %s447 = scalar_lea.sflag [#allocation7], %s446
        %s448 = sand.u32 %s87, 1
        %s449 = smul.addr %s448, 16
        %s450 = scalar_lea.vmem [#allocation6], %s449
        %p451 = pneg %p100
        %p452 = pneg %p97
        %s453 = sand.u32 %s29, 1
        %s454 = scalar_lea.sflag [#allocation7], %s453
        %s455 = sand.u32 %s123, 1
        %s456 = smul.addr %s455, 16
        %s457 = scalar_lea.vmem [#allocation8], %s456
        %p458 = pneg %p136
        %p459 = pneg %p133
        %p460 = pneg %p157
        %p461 = pneg %p154
        %p462 = pneg %p178
        %p463 = pneg %p175
        %p464 = pneg %p199
        %p465 = pneg %p196
        %p466 = pneg %p220
        %p467 = pneg %p217
        %p468 = pneg %p241
        %p469 = pneg %p238
        %p470 = pneg %p262
        %p471 = pneg %p259
        %p472 = pneg %p290
        %p473 = pneg %p287
        %s474 = sand.u32 %s277, 1
        %s475 = scalar_lea.sflag [#allocation5], %s474
        %s476 = sand.u32 %s277, 1
        %s477 = smul.addr %s476, 256
        %s478 = scalar_lea.vmem [#allocation9], %s477
        %s479 = smul.u32 16, %s34
        %s480 = smul.u32 %s34, 16
        %s481 = ssub.s32 %s480, 1
        %p482 = scmp.gt.s32.totalorder %s481, 0
        %s483 = scalar_select %p482, %s481, 0
        %s484 = smul.u32 %s34, 16
        %s485 = sadd.s32 %s484, 16
        %p486 = scmp.lt.s32.totalorder %s485, 15
        %s487 = scalar_select %p486, %s485, 15
        %s488 = smul.u32 16, %s34
        %v490 = vld [vmem:[%s3] sm:$0xf]
        %v491 = vld [vmem:[%s3 + $0x4] sm:$0xf]
        %v492 = vld [vmem:[%s4] sm:$0x1]
        %p493 = scmp.eq.s32.totalorder %s34, 0
        %v494 = vld [vmem:[%s425] sm:$0xff]
        %v495 = vld [vmem:[%s425 + $0x8] sm:$0xff]
        %v496 = vpack.c.bf16 %v495, %v494
        %v498 = vlaneseq
        %v499 = vshrl.u32 %v498, 7
        %v500 = vsub.s32 0, %v499
        %v501 = vrot.slane %v492, %v500
        %v505 = vunpack.c.l.b16 %v490
        %v506 = vunpack.c.l.b16 %v491
        %v507 = vpack.c.b16 %v506, %v505
        %vm509 = vcmask 130048
        %v511 = vsel %vm509, %v496, 0
        %513 = vmatprep.subr.bf16.mxu0 0
        %514 = vmatpush1.bf16.msra.mxu0 %v507
        %515 = vmatprep.subr.bf16.mxu0 0
        %516 = vmatpush1.bf16.msra.mxu0 0
        %517 = vmatprep.subr.bf16.mxu0 0
        %518 = vmatpush1.bf16.msra.mxu0 0
        %519 = vmatprep.subr.bf16.mxu0 0
        %520 = vmatpush1.bf16.msra.mxu0 0
        %521 = vmatprep.subr.bf16.mxu0 0
        %522 = vmatpush1.bf16.msra.mxu0 0
        %523 = vmatprep.subr.bf16.mxu0 0
        %524 = vmatpush1.bf16.msra.mxu0 0
        %525 = vmatprep.subr.bf16.mxu0 0
        %526 = vmatpush1.bf16.msra.mxu0 0
        %527 = vmatprep.subr.bf16.mxu0 0
        %528 = vmatpush1.bf16.msra.mxu0 0
        %529 = vmatprep.subr.bf16.mxu0 0
        %530 = vmatpush1.bf16.msra.mxu0 0
        %531 = vmatprep.subr.bf16.mxu0 0
        %532 = vmatpush1.bf16.msra.mxu0 0
        %533 = vmatprep.subr.bf16.mxu0 0
        %534 = vmatpush1.bf16.msra.mxu0 0
        %535 = vmatprep.subr.bf16.mxu0 0
        %536 = vmatpush1.bf16.msra.mxu0 0
        %537 = vmatprep.subr.bf16.mxu0 0
        %538 = vmatpush1.bf16.msra.mxu0 0
        %539 = vmatprep.subr.bf16.mxu0 0
        %540 = vmatpush1.bf16.msra.mxu0 0
        %541 = vmatprep.subr.bf16.mxu0 0
        %542 = vmatpush1.bf16.msra.mxu0 0
        %543 = vmatprep.subr.bf16.mxu0 0
        %544 = vmatpush1.bf16.msra.mxu0 0
        %545 = vmatprep.mubr.bf16.mxu0 0
        %546 = vmatmul.mubr.bf16.gmra.mrb[0].mxu0 %v511
        %v547 = vpop.f32.mrb[0].mxu0
        %v548 = vadd.f32 %v501, %v547
        %v549 = vpop.f32.mrb[0].mxu0
        %v550 = vpop.f32.mrb[0].mxu0
        %v551 = vadd.f32 %v501, %v550
        %v552 = vpop.f32.mrb[0].mxu0
        %553 = vdwg.mxu0
        %v554 = vmax.f32 %v548, 0.0
        %v555 = vmax.f32 %v551, 0.0
        %s556 = scalar_select %p493, 1, 0
        %v557 = vstv %s556
        %vm558 = vcmp.eq.s32.totalorder %v557, 1
        %v559 = vsel %vm558, 0.0, %v554
        %v560 = vsel %vm558, 0.0, %v555
        %v561 = vld [vmem:[%s416] sm:$0xff]
        %v562 = vld [vmem:[%s416 + $0x8] sm:$0xff]
        %v563 = vld [vmem:[%s416 + $0x10] sm:$0xff]
        %v564 = vld [vmem:[%s416 + $0x18] sm:$0xff]
        %v565 = vld [vmem:[%s416 + $0x20] sm:$0xff]
        %v566 = vld [vmem:[%s416 + $0x28] sm:$0xff]
        %v567 = vld [vmem:[%s416 + $0x30] sm:$0xff]
        %v568 = vld [vmem:[%s416 + $0x38] sm:$0xff]
        %v569 = vld [vmem:[%s416 + $0x40] sm:$0xff]
        %v570 = vld [vmem:[%s416 + $0x48] sm:$0xff]
        %v571 = vld [vmem:[%s416 + $0x50] sm:$0xff]
        %v572 = vld [vmem:[%s416 + $0x58] sm:$0xff]
        %v573 = vld [vmem:[%s416 + $0x60] sm:$0xff]
        %v574 = vld [vmem:[%s416 + $0x68] sm:$0xff]
        %v575 = vld [vmem:[%s416 + $0x70] sm:$0xff]
        %v576 = vld [vmem:[%s416 + $0x78] sm:$0xff]
        %v577 = vld [vmem:[%s416 + $0x80] sm:$0xff]
        %v578 = vld [vmem:[%s416 + $0x88] sm:$0xff]
        %v579 = vld [vmem:[%s416 + $0x90] sm:$0xff]
        %v580 = vld [vmem:[%s416 + $0x98] sm:$0xff]
        %v581 = vld [vmem:[%s416 + $0xa0] sm:$0xff]
        %v582 = vld [vmem:[%s416 + $0xa8] sm:$0xff]
        %v583 = vld [vmem:[%s416 + $0xb0] sm:$0xff]
        %v584 = vld [vmem:[%s416 + $0xb8] sm:$0xff]
        %v585 = vld [vmem:[%s416 + $0xc0] sm:$0xff]
        %v586 = vld [vmem:[%s416 + $0xc8] sm:$0xff]
        %v587 = vld [vmem:[%s416 + $0xd0] sm:$0xff]
        %v588 = vld [vmem:[%s416 + $0xd8] sm:$0xff]
        %v589 = vld [vmem:[%s416 + $0xe0] sm:$0xff]
        %v590 = vld [vmem:[%s416 + $0xe8] sm:$0xff]
        %v591 = vld [vmem:[%s416 + $0xf0] sm:$0xff]
        %v592 = vld [vmem:[%s416 + $0xf8] sm:$0xff]
        %v593 = vpack.c.bf16 %v562, %v561
        %v594 = vpack.c.bf16 %v564, %v563
        %v595 = vpack.c.bf16 %v566, %v565
        %v596 = vpack.c.bf16 %v568, %v567
        %v597 = vpack.c.bf16 %v570, %v569
        %v598 = vpack.c.bf16 %v572, %v571
        %v599 = vpack.c.bf16 %v574, %v573
        %v600 = vpack.c.bf16 %v576, %v575
        %v601 = vpack.c.bf16 %v578, %v577
        %v602 = vpack.c.bf16 %v580, %v579
        %v603 = vpack.c.bf16 %v582, %v581
        %v604 = vpack.c.bf16 %v584, %v583
        %v605 = vpack.c.bf16 %v586, %v585
        %v606 = vpack.c.bf16 %v588, %v587
        %v607 = vpack.c.bf16 %v590, %v589
        %v608 = vpack.c.bf16 %v592, %v591
        %v610 = vsel %vm509, %v593, 0
        %v613 = vsel %vm509, %v594, 0
        %v616 = vsel %vm509, %v595, 0
        %v619 = vsel %vm509, %v596, 0
        %v622 = vsel %vm509, %v597, 0
        %v625 = vsel %vm509, %v598, 0
        %v628 = vsel %vm509, %v599, 0
        %v631 = vsel %vm509, %v600, 0
        %v634 = vsel %vm509, %v601, 0
        %v637 = vsel %vm509, %v602, 0
        %v640 = vsel %vm509, %v603, 0
        %v643 = vsel %vm509, %v604, 0
        %v646 = vsel %vm509, %v605, 0
        %v649 = vsel %vm509, %v606, 0
        %v652 = vsel %vm509, %v607, 0
        %v655 = vsel %vm509, %v608, 0
        %657 = vmatprep.subr.bf16.mxu0 0
        %658 = vmatpush1.bf16.msra.mxu0 %v507
        %659 = vmatprep.subr.bf16.mxu0 0
        %660 = vmatpush1.bf16.msra.mxu0 0
        %661 = vmatprep.subr.bf16.mxu0 0
        %662 = vmatpush1.bf16.msra.mxu0 0
        %663 = vmatprep.subr.bf16.mxu0 0
        %664 = vmatpush1.bf16.msra.mxu0 0
        %665 = vmatprep.subr.bf16.mxu0 0
        %666 = vmatpush1.bf16.msra.mxu0 0
        %667 = vmatprep.subr.bf16.mxu0 0
        %668 = vmatpush1.bf16.msra.mxu0 0
        %669 = vmatprep.subr.bf16.mxu0 0
        %670 = vmatpush1.bf16.msra.mxu0 0
        %671 = vmatprep.subr.bf16.mxu0 0
        %672 = vmatpush1.bf16.msra.mxu0 0
        %673 = vmatprep.subr.bf16.mxu0 0
        %674 = vmatpush1.bf16.msra.mxu0 0
        %675 = vmatprep.subr.bf16.mxu0 0
        %676 = vmatpush1.bf16.msra.mxu0 0
        %677 = vmatprep.subr.bf16.mxu0 0
        %678 = vmatpush1.bf16.msra.mxu0 0
        %679 = vmatprep.subr.bf16.mxu0 0
        %680 = vmatpush1.bf16.msra.mxu0 0
        %681 = vmatprep.subr.bf16.mxu0 0
        %682 = vmatpush1.bf16.msra.mxu0 0
        %683 = vmatprep.subr.bf16.mxu0 0
        %684 = vmatpush1.bf16.msra.mxu0 0
        %685 = vmatprep.subr.bf16.mxu0 0
        %686 = vmatpush1.bf16.msra.mxu0 0
        %687 = vmatprep.subr.bf16.mxu0 0
        %688 = vmatpush1.bf16.msra.mxu0 0
        %689 = vmatprep.mubr.bf16.mxu0 0
        %690 = vmatmul.mubr.bf16.gmra.mrb[0].mxu0 %v610
        %v691 = vpop.f32.mrb[0].mxu0
        %v692 = vadd.f32 %v501, %v691
        %v693 = vpop.f32.mrb[0].mxu0
        %v694 = vpop.f32.mrb[0].mxu0
        %v695 = vadd.f32 %v501, %v694
        %v696 = vpop.f32.mrb[0].mxu0
        %697 = vmatprep.mubr.bf16.mxu0 0
        %698 = vmatmul.mubr.bf16.gmra.mrb[0].mxu0 %v613
        %v699 = vpop.f32.mrb[0].mxu0
        %v700 = vadd.f32 %v501, %v699
        %v701 = vpop.f32.mrb[0].mxu0
        %v702 = vpop.f32.mrb[0].mxu0
        %v703 = vadd.f32 %v501, %v702
        %v704 = vpop.f32.mrb[0].mxu0
        %705 = vmatprep.mubr.bf16.mxu0 0
        %706 = vmatmul.mubr.bf16.gmra.mrb[0].mxu0 %v616
        %v707 = vpop.f32.mrb[0].mxu0
        %v708 = vadd.f32 %v501, %v707
        %v709 = vpop.f32.mrb[0].mxu0
        %v710 = vpop.f32.mrb[0].mxu0
        %v711 = vadd.f32 %v501, %v710
        %v712 = vpop.f32.mrb[0].mxu0
        %713 = vmatprep.mubr.bf16.mxu0 0
        %714 = vmatmul.mubr.bf16.gmra.mrb[0].mxu0 %v619
        %v715 = vpop.f32.mrb[0].mxu0
        %v716 = vadd.f32 %v501, %v715
        %v717 = vpop.f32.mrb[0].mxu0
        %v718 = vpop.f32.mrb[0].mxu0
        %v719 = vadd.f32 %v501, %v718
        %v720 = vpop.f32.mrb[0].mxu0
        %721 = vmatprep.mubr.bf16.mxu0 0
        %722 = vmatmul.mubr.bf16.gmra.mrb[0].mxu0 %v622
        %v723 = vpop.f32.mrb[0].mxu0
        %v724 = vadd.f32 %v501, %v723
        %v725 = vpop.f32.mrb[0].mxu0
        %v726 = vpop.f32.mrb[0].mxu0
        %v727 = vadd.f32 %v501, %v726
        %v728 = vpop.f32.mrb[0].mxu0
        %729 = vmatprep.mubr.bf16.mxu0 0
        %730 = vmatmul.mubr.bf16.gmra.mrb[0].mxu0 %v625
        %v731 = vpop.f32.mrb[0].mxu0
        %v732 = vadd.f32 %v501, %v731
        %v733 = vpop.f32.mrb[0].mxu0
        %v734 = vpop.f32.mrb[0].mxu0
        %v735 = vadd.f32 %v501, %v734
        %v736 = vpop.f32.mrb[0].mxu0
        %737 = vmatprep.mubr.bf16.mxu0 0
        %738 = vmatmul.mubr.bf16.gmra.mrb[0].mxu0 %v628
        %v739 = vpop.f32.mrb[0].mxu0
        %v740 = vadd.f32 %v501, %v739
        %v741 = vpop.f32.mrb[0].mxu0
        %v742 = vpop.f32.mrb[0].mxu0
        %v743 = vadd.f32 %v501, %v742
        %v744 = vpop.f32.mrb[0].mxu0
        %745 = vmatprep.mubr.bf16.mxu0 0
        %746 = vmatmul.mubr.bf16.gmra.mrb[0].mxu0 %v631
        %v747 = vpop.f32.mrb[0].mxu0
        %v748 = vadd.f32 %v501, %v747
        %v749 = vpop.f32.mrb[0].mxu0
        %v750 = vpop.f32.mrb[0].mxu0
        %v751 = vadd.f32 %v501, %v750
        %v752 = vpop.f32.mrb[0].mxu0
        %753 = vmatprep.mubr.bf16.mxu0 0
        %754 = vmatmul.mubr.bf16.gmra.mrb[0].mxu0 %v634
        %v755 = vpop.f32.mrb[0].mxu0
        %v756 = vadd.f32 %v501, %v755
        %v757 = vpop.f32.mrb[0].mxu0
        %v758 = vpop.f32.mrb[0].mxu0
        %v759 = vadd.f32 %v501, %v758
        %v760 = vpop.f32.mrb[0].mxu0
        %761 = vmatprep.mubr.bf16.mxu0 0
        %762 = vmatmul.mubr.bf16.gmra.mrb[0].mxu0 %v637
        %v763 = vpop.f32.mrb[0].mxu0
        %v764 = vadd.f32 %v501, %v763
        %v765 = vpop.f32.mrb[0].mxu0
        %v766 = vpop.f32.mrb[0].mxu0
        %v767 = vadd.f32 %v501, %v766
        %v768 = vpop.f32.mrb[0].mxu0
        %769 = vmatprep.mubr.bf16.mxu0 0
        %770 = vmatmul.mubr.bf16.gmra.mrb[0].mxu0 %v640
        %v771 = vpop.f32.mrb[0].mxu0
        %v772 = vadd.f32 %v501, %v771
        %v773 = vpop.f32.mrb[0].mxu0
        %v774 = vpop.f32.mrb[0].mxu0
        %v775 = vadd.f32 %v501, %v774
        %v776 = vpop.f32.mrb[0].mxu0
        %777 = vmatprep.mubr.bf16.mxu0 0
        %778 = vmatmul.mubr.bf16.gmra.mrb[0].mxu0 %v643
        %v779 = vpop.f32.mrb[0].mxu0
        %v780 = vadd.f32 %v501, %v779
        %v781 = vpop.f32.mrb[0].mxu0
        %v782 = vpop.f32.mrb[0].mxu0
        %v783 = vadd.f32 %v501, %v782
        %v784 = vpop.f32.mrb[0].mxu0
        %785 = vmatprep.mubr.bf16.mxu0 0
        %786 = vmatmul.mubr.bf16.gmra.mrb[0].mxu0 %v646
        %v787 = vpop.f32.mrb[0].mxu0
        %v788 = vadd.f32 %v501, %v787
        %v789 = vpop.f32.mrb[0].mxu0
        %v790 = vpop.f32.mrb[0].mxu0
        %v791 = vadd.f32 %v501, %v790
        %v792 = vpop.f32.mrb[0].mxu0
        %793 = vmatprep.mubr.bf16.mxu0 0
        %794 = vmatmul.mubr.bf16.gmra.mrb[0].mxu0 %v649
        %v795 = vpop.f32.mrb[0].mxu0
        %v796 = vadd.f32 %v501, %v795
        %v797 = vpop.f32.mrb[0].mxu0
        %v798 = vpop.f32.mrb[0].mxu0
        %v799 = vadd.f32 %v501, %v798
        %v800 = vpop.f32.mrb[0].mxu0
        %801 = vmatprep.mubr.bf16.mxu0 0
        %802 = vmatmul.mubr.bf16.gmra.mrb[0].mxu0 %v652
        %v803 = vpop.f32.mrb[0].mxu0
        %v804 = vadd.f32 %v501, %v803
        %v805 = vpop.f32.mrb[0].mxu0
        %v806 = vpop.f32.mrb[0].mxu0
        %v807 = vadd.f32 %v501, %v806
        %v808 = vpop.f32.mrb[0].mxu0
        %809 = vmatprep.mubr.bf16.mxu0 0
        %810 = vmatmul.mubr.bf16.gmra.mrb[0].mxu0 %v655
        %v811 = vpop.f32.mrb[0].mxu0
        %v812 = vadd.f32 %v501, %v811
        %v813 = vpop.f32.mrb[0].mxu0
        %v814 = vpop.f32.mrb[0].mxu0
        %v815 = vadd.f32 %v501, %v814
        %v816 = vpop.f32.mrb[0].mxu0
        %817 = vdwg.mxu0
        %v818 = vmax.f32 %v692, 0.0
        %v819 = vmax.f32 %v695, 0.0
        %v820 = vmax.f32 %v700, 0.0
        %v821 = vmax.f32 %v703, 0.0
        %v822 = vmax.f32 %v708, 0.0
        %v823 = vmax.f32 %v711, 0.0
        %v824 = vmax.f32 %v716, 0.0
        %v825 = vmax.f32 %v719, 0.0
        %v826 = vmax.f32 %v724, 0.0
        %v827 = vmax.f32 %v727, 0.0
        %v828 = vmax.f32 %v732, 0.0
        %v829 = vmax.f32 %v735, 0.0
        %v830 = vmax.f32 %v740, 0.0
        %v831 = vmax.f32 %v743, 0.0
        %v832 = vmax.f32 %v748, 0.0
        %v833 = vmax.f32 %v751, 0.0
        %v834 = vmax.f32 %v756, 0.0
        %v835 = vmax.f32 %v759, 0.0
        %v836 = vmax.f32 %v764, 0.0
        %v837 = vmax.f32 %v767, 0.0
        %v838 = vmax.f32 %v772, 0.0
        %v839 = vmax.f32 %v775, 0.0
        %v840 = vmax.f32 %v780, 0.0
        %v841 = vmax.f32 %v783, 0.0
        %v842 = vmax.f32 %v788, 0.0
        %v843 = vmax.f32 %v791, 0.0
        %v844 = vmax.f32 %v796, 0.0
        %v845 = vmax.f32 %v799, 0.0
        %v846 = vmax.f32 %v804, 0.0
        %v847 = vmax.f32 %v807, 0.0
        %v848 = vmax.f32 %v812, 0.0
        %v849 = vmax.f32 %v815, 0.0
        %v850 = vld [vmem:[%s434] sm:$0xff]
        %v851 = vld [vmem:[%s434 + $0x8] sm:$0xff]
        %v852 = vpack.c.bf16 %v851, %v850
        %v854 = vsel %vm509, %v852, 0
        %856 = vmatprep.subr.bf16.mxu0 0
        %857 = vmatpush1.bf16.msra.mxu0 %v507
        %858 = vmatprep.subr.bf16.mxu0 0
        %859 = vmatpush1.bf16.msra.mxu0 0
        %860 = vmatprep.subr.bf16.mxu0 0
        %861 = vmatpush1.bf16.msra.mxu0 0
        %862 = vmatprep.subr.bf16.mxu0 0
        %863 = vmatpush1.bf16.msra.mxu0 0
        %864 = vmatprep.subr.bf16.mxu0 0
        %865 = vmatpush1.bf16.msra.mxu0 0
        %866 = vmatprep.subr.bf16.mxu0 0
        %867 = vmatpush1.bf16.msra.mxu0 0
        %868 = vmatprep.subr.bf16.mxu0 0
        %869 = vmatpush1.bf16.msra.mxu0 0
        %870 = vmatprep.subr.bf16.mxu0 0
        %871 = vmatpush1.bf16.msra.mxu0 0
        %872 = vmatprep.subr.bf16.mxu0 0
        %873 = vmatpush1.bf16.msra.mxu0 0
        %874 = vmatprep.subr.bf16.mxu0 0
        %875 = vmatpush1.bf16.msra.mxu0 0
        %876 = vmatprep.subr.bf16.mxu0 0
        %877 = vmatpush1.bf16.msra.mxu0 0
        %878 = vmatprep.subr.bf16.mxu0 0
        %879 = vmatpush1.bf16.msra.mxu0 0
        %880 = vmatprep.subr.bf16.mxu0 0
        %881 = vmatpush1.bf16.msra.mxu0 0
        %882 = vmatprep.subr.bf16.mxu0 0
        %883 = vmatpush1.bf16.msra.mxu0 0
        %884 = vmatprep.subr.bf16.mxu0 0
        %885 = vmatpush1.bf16.msra.mxu0 0
        %886 = vmatprep.subr.bf16.mxu0 0
        %887 = vmatpush1.bf16.msra.mxu0 0
        %888 = vmatprep.mubr.bf16.mxu0 0
        %889 = vmatmul.mubr.bf16.gmra.mrb[0].mxu0 %v854
        %v890 = vpop.f32.mrb[0].mxu0
        %v891 = vadd.f32 %v501, %v890
        %v892 = vpop.f32.mrb[0].mxu0
        %v893 = vpop.f32.mrb[0].mxu0
        %v894 = vadd.f32 %v501, %v893
        %v895 = vpop.f32.mrb[0].mxu0
        %896 = vdwg.mxu0
        %v897 = vmax.f32 %v891, 0.0
        %v898 = vmax.f32 %v894, 0.0
        %v899 = vsel %vm558, 0.0, %v897
        %v900 = vsel %vm558, 0.0, %v898
        %v901 = vlaneseq
        %v902 = vshrl.u32 %v901, 7
        %v903 = vadd.s32 %v902, 8
        %v904 = vadd.s32 %v902, 16
        %v905 = vadd.s32 %v902, 24
        %v906 = vadd.s32 %v902, 32
        %v907 = vadd.s32 %v902, 40
        %v908 = vadd.s32 %v902, 48
        %v909 = vadd.s32 %v902, 56
        %v910 = vadd.s32 %v902, 64
        %v911 = vadd.s32 %v902, 72
        %v912 = vadd.s32 %v902, 80
        %v913 = vadd.s32 %v902, 88
        %v914 = vadd.s32 %v902, 96
        %v915 = vadd.s32 %v902, 104
        %v916 = vadd.s32 %v902, 112
        %v917 = vadd.s32 %v902, 120
        %v918 = vadd.s32 %v902, 128
        %v919 = vadd.s32 %v902, 136
        %v920 = vadd.s32 %v902, 144
        %v921 = vadd.s32 %v902, 152
        %v922 = vadd.s32 %v902, 160
        %v923 = vadd.s32 %v902, 168
        %v924 = vadd.s32 %v902, 176
        %v925 = vadd.s32 %v902, 184
        %v926 = vadd.s32 %v902, 192
        %v927 = vadd.s32 %v902, 200
        %v928 = vadd.s32 %v902, 208
        %v929 = vadd.s32 %v902, 216
        %v930 = vadd.s32 %v902, 224
        %v931 = vadd.s32 %v902, 232
        %v932 = vadd.s32 %v902, 240
        %v933 = vadd.s32 %v902, 248
        %v934 = vadd.s32 %v902, 256
        %v935 = vadd.s32 %v902, 264
        %v936 = vadd.s32 %v902, 272
        %v937 = vadd.s32 %v902, 280
        %vm938 = vcmp.lt.s32.totalorder %v902, 0
        %v939 = vsub.s32 0, %v902
        %v940 = vsel %vm938, %v939, %v902
        %v941 = vshrl.u32 %v940, 4
        %v942 = vand.u32 %v940, 15
        %v943 = vsub.s32 0, %v942
        %v944 = vsel %vm938, %v943, %v942
        %vm945 = vcmp.lt.s32.totalorder %v903, 0
        %v946 = vsub.s32 0, %v903
        %v947 = vsel %vm945, %v946, %v903
        %v948 = vshrl.u32 %v947, 4
        %v949 = vand.u32 %v947, 15
        %v950 = vsub.s32 0, %v949
        %v951 = vsel %vm945, %v950, %v949
        %vm952 = vcmp.lt.s32.totalorder %v904, 0
        %v953 = vsub.s32 0, %v904
        %v954 = vsel %vm952, %v953, %v904
        %v955 = vshrl.u32 %v954, 4
        %v956 = vand.u32 %v954, 15
        %v957 = vsub.s32 0, %v956
        %v958 = vsel %vm952, %v957, %v956
        %vm959 = vcmp.lt.s32.totalorder %v905, 0
        %v960 = vsub.s32 0, %v905
        %v961 = vsel %vm959, %v960, %v905
        %v962 = vshrl.u32 %v961, 4
        %v963 = vand.u32 %v961, 15
        %v964 = vsub.s32 0, %v963
        %v965 = vsel %vm959, %v964, %v963
        %vm966 = vcmp.lt.s32.totalorder %v906, 0
        %v967 = vsub.s32 0, %v906
        %v968 = vsel %vm966, %v967, %v906
        %v969 = vshrl.u32 %v968, 4
        %v970 = vand.u32 %v968, 15
        %v971 = vsub.s32 0, %v970
        %v972 = vsel %vm966, %v971, %v970
        %vm973 = vcmp.lt.s32.totalorder %v907, 0
        %v974 = vsub.s32 0, %v907
        %v975 = vsel %vm973, %v974, %v907
        %v976 = vshrl.u32 %v975, 4
        %v977 = vand.u32 %v975, 15
        %v978 = vsub.s32 0, %v977
        %v979 = vsel %vm973, %v978, %v977
        %vm980 = vcmp.lt.s32.totalorder %v908, 0
        %v981 = vsub.s32 0, %v908
        %v982 = vsel %vm980, %v981, %v908
        %v983 = vshrl.u32 %v982, 4
        %v984 = vand.u32 %v982, 15
        %v985 = vsub.s32 0, %v984
        %v986 = vsel %vm980, %v985, %v984
        %vm987 = vcmp.lt.s32.totalorder %v909, 0
        %v988 = vsub.s32 0, %v909
        %v989 = vsel %vm987, %v988, %v909
        %v990 = vshrl.u32 %v989, 4
        %v991 = vand.u32 %v989, 15
        %v992 = vsub.s32 0, %v991
        %v993 = vsel %vm987, %v992, %v991
        %vm994 = vcmp.lt.s32.totalorder %v910, 0
        %v995 = vsub.s32 0, %v910
        %v996 = vsel %vm994, %v995, %v910
        %v997 = vshrl.u32 %v996, 4
        %v998 = vand.u32 %v996, 15
        %v999 = vsub.s32 0, %v998
        %v1000 = vsel %vm994, %v999, %v998
        %vm1001 = vcmp.lt.s32.totalorder %v911, 0
        %v1002 = vsub.s32 0, %v911
        %v1003 = vsel %vm1001, %v1002, %v911
        %v1004 = vshrl.u32 %v1003, 4
        %v1005 = vand.u32 %v1003, 15
        %v1006 = vsub.s32 0, %v1005
        %v1007 = vsel %vm1001, %v1006, %v1005
        %vm1008 = vcmp.lt.s32.totalorder %v912, 0
        %v1009 = vsub.s32 0, %v912
        %v1010 = vsel %vm1008, %v1009, %v912
        %v1011 = vshrl.u32 %v1010, 4
        %v1012 = vand.u32 %v1010, 15
        %v1013 = vsub.s32 0, %v1012
        %v1014 = vsel %vm1008, %v1013, %v1012
        %vm1015 = vcmp.lt.s32.totalorder %v913, 0
        %v1016 = vsub.s32 0, %v913
        %v1017 = vsel %vm1015, %v1016, %v913
        %v1018 = vshrl.u32 %v1017, 4
        %v1019 = vand.u32 %v1017, 15
        %v1020 = vsub.s32 0, %v1019
        %v1021 = vsel %vm1015, %v1020, %v1019
        %vm1022 = vcmp.lt.s32.totalorder %v914, 0
        %v1023 = vsub.s32 0, %v914
        %v1024 = vsel %vm1022, %v1023, %v914
        %v1025 = vshrl.u32 %v1024, 4
        %v1026 = vand.u32 %v1024, 15
        %v1027 = vsub.s32 0, %v1026
        %v1028 = vsel %vm1022, %v1027, %v1026
        %vm1029 = vcmp.lt.s32.totalorder %v915, 0
        %v1030 = vsub.s32 0, %v915
        %v1031 = vsel %vm1029, %v1030, %v915
        %v1032 = vshrl.u32 %v1031, 4
        %v1033 = vand.u32 %v1031, 15
        %v1034 = vsub.s32 0, %v1033
        %v1035 = vsel %vm1029, %v1034, %v1033
        %vm1036 = vcmp.lt.s32.totalorder %v916, 0
        %v1037 = vsub.s32 0, %v916
        %v1038 = vsel %vm1036, %v1037, %v916
        %v1039 = vshrl.u32 %v1038, 4
        %v1040 = vand.u32 %v1038, 15
        %v1041 = vsub.s32 0, %v1040
        %v1042 = vsel %vm1036, %v1041, %v1040
        %vm1043 = vcmp.lt.s32.totalorder %v917, 0
        %v1044 = vsub.s32 0, %v917
        %v1045 = vsel %vm1043, %v1044, %v917
        %v1046 = vshrl.u32 %v1045, 4
        %v1047 = vand.u32 %v1045, 15
        %v1048 = vsub.s32 0, %v1047
        %v1049 = vsel %vm1043, %v1048, %v1047
        %vm1050 = vcmp.lt.s32.totalorder %v918, 0
        %v1051 = vsub.s32 0, %v918
        %v1052 = vsel %vm1050, %v1051, %v918
        %v1053 = vshrl.u32 %v1052, 4
        %v1054 = vand.u32 %v1052, 15
        %v1055 = vsub.s32 0, %v1054
        %v1056 = vsel %vm1050, %v1055, %v1054
        %vm1057 = vcmp.lt.s32.totalorder %v919, 0
        %v1058 = vsub.s32 0, %v919
        %v1059 = vsel %vm1057, %v1058, %v919
        %v1060 = vshrl.u32 %v1059, 4
        %v1061 = vand.u32 %v1059, 15
        %v1062 = vsub.s32 0, %v1061
        %v1063 = vsel %vm1057, %v1062, %v1061
        %vm1064 = vcmp.lt.s32.totalorder %v920, 0
        %v1065 = vsub.s32 0, %v920
        %v1066 = vsel %vm1064, %v1065, %v920
        %v1067 = vshrl.u32 %v1066, 4
        %v1068 = vand.u32 %v1066, 15
        %v1069 = vsub.s32 0, %v1068
        %v1070 = vsel %vm1064, %v1069, %v1068
        %vm1071 = vcmp.lt.s32.totalorder %v921, 0
        %v1072 = vsub.s32 0, %v921
        %v1073 = vsel %vm1071, %v1072, %v921
        %v1074 = vshrl.u32 %v1073, 4
        %v1075 = vand.u32 %v1073, 15
        %v1076 = vsub.s32 0, %v1075
        %v1077 = vsel %vm1071, %v1076, %v1075
        %vm1078 = vcmp.lt.s32.totalorder %v922, 0
        %v1079 = vsub.s32 0, %v922
        %v1080 = vsel %vm1078, %v1079, %v922
        %v1081 = vshrl.u32 %v1080, 4
        %v1082 = vand.u32 %v1080, 15
        %v1083 = vsub.s32 0, %v1082
        %v1084 = vsel %vm1078, %v1083, %v1082
        %vm1085 = vcmp.lt.s32.totalorder %v923, 0
        %v1086 = vsub.s32 0, %v923
        %v1087 = vsel %vm1085, %v1086, %v923
        %v1088 = vshrl.u32 %v1087, 4
        %v1089 = vand.u32 %v1087, 15
        %v1090 = vsub.s32 0, %v1089
        %v1091 = vsel %vm1085, %v1090, %v1089
        %vm1092 = vcmp.lt.s32.totalorder %v924, 0
        %v1093 = vsub.s32 0, %v924
        %v1094 = vsel %vm1092, %v1093, %v924
        %v1095 = vshrl.u32 %v1094, 4
        %v1096 = vand.u32 %v1094, 15
        %v1097 = vsub.s32 0, %v1096
        %v1098 = vsel %vm1092, %v1097, %v1096
        %vm1099 = vcmp.lt.s32.totalorder %v925, 0
        %v1100 = vsub.s32 0, %v925
        %v1101 = vsel %vm1099, %v1100, %v925
        %v1102 = vshrl.u32 %v1101, 4
        %v1103 = vand.u32 %v1101, 15
        %v1104 = vsub.s32 0, %v1103
        %v1105 = vsel %vm1099, %v1104, %v1103
        %vm1106 = vcmp.lt.s32.totalorder %v926, 0
        %v1107 = vsub.s32 0, %v926
        %v1108 = vsel %vm1106, %v1107, %v926
        %v1109 = vshrl.u32 %v1108, 4
        %v1110 = vand.u32 %v1108, 15
        %v1111 = vsub.s32 0, %v1110
        %v1112 = vsel %vm1106, %v1111, %v1110
        %vm1113 = vcmp.lt.s32.totalorder %v927, 0
        %v1114 = vsub.s32 0, %v927
        %v1115 = vsel %vm1113, %v1114, %v927
        %v1116 = vshrl.u32 %v1115, 4
        %v1117 = vand.u32 %v1115, 15
        %v1118 = vsub.s32 0, %v1117
        %v1119 = vsel %vm1113, %v1118, %v1117
        %vm1120 = vcmp.lt.s32.totalorder %v928, 0
        %v1121 = vsub.s32 0, %v928
        %v1122 = vsel %vm1120, %v1121, %v928
        %v1123 = vshrl.u32 %v1122, 4
        %v1124 = vand.u32 %v1122, 15
        %v1125 = vsub.s32 0, %v1124
        %v1126 = vsel %vm1120, %v1125, %v1124
        %vm1127 = vcmp.lt.s32.totalorder %v929, 0
        %v1128 = vsub.s32 0, %v929
        %v1129 = vsel %vm1127, %v1128, %v929
        %v1130 = vshrl.u32 %v1129, 4
        %v1131 = vand.u32 %v1129, 15
        %v1132 = vsub.s32 0, %v1131
        %v1133 = vsel %vm1127, %v1132, %v1131
        %vm1134 = vcmp.lt.s32.totalorder %v930, 0
        %v1135 = vsub.s32 0, %v930
        %v1136 = vsel %vm1134, %v1135, %v930
        %v1137 = vshrl.u32 %v1136, 4
        %v1138 = vand.u32 %v1136, 15
        %v1139 = vsub.s32 0, %v1138
        %v1140 = vsel %vm1134, %v1139, %v1138
        %vm1141 = vcmp.lt.s32.totalorder %v931, 0
        %v1142 = vsub.s32 0, %v931
        %v1143 = vsel %vm1141, %v1142, %v931
        %v1144 = vshrl.u32 %v1143, 4
        %v1145 = vand.u32 %v1143, 15
        %v1146 = vsub.s32 0, %v1145
        %v1147 = vsel %vm1141, %v1146, %v1145
        %vm1148 = vcmp.lt.s32.totalorder %v932, 0
        %v1149 = vsub.s32 0, %v932
        %v1150 = vsel %vm1148, %v1149, %v932
        %v1151 = vshrl.u32 %v1150, 4
        %v1152 = vand.u32 %v1150, 15
        %v1153 = vsub.s32 0, %v1152
        %v1154 = vsel %vm1148, %v1153, %v1152
        %vm1155 = vcmp.lt.s32.totalorder %v933, 0
        %v1156 = vsub.s32 0, %v933
        %v1157 = vsel %vm1155, %v1156, %v933
        %v1158 = vshrl.u32 %v1157, 4
        %v1159 = vand.u32 %v1157, 15
        %v1160 = vsub.s32 0, %v1159
        %v1161 = vsel %vm1155, %v1160, %v1159
        %vm1162 = vcmp.lt.s32.totalorder %v934, 0
        %v1163 = vsub.s32 0, %v934
        %v1164 = vsel %vm1162, %v1163, %v934
        %v1165 = vshrl.u32 %v1164, 4
        %v1166 = vand.u32 %v1164, 15
        %v1167 = vsub.s32 0, %v1166
        %v1168 = vsel %vm1162, %v1167, %v1166
        %vm1169 = vcmp.lt.s32.totalorder %v935, 0
        %v1170 = vsub.s32 0, %v935
        %v1171 = vsel %vm1169, %v1170, %v935
        %v1172 = vshrl.u32 %v1171, 4
        %v1173 = vand.u32 %v1171, 15
        %v1174 = vsub.s32 0, %v1173
        %v1175 = vsel %vm1169, %v1174, %v1173
        %vm1176 = vcmp.lt.s32.totalorder %v936, 0
        %v1177 = vsub.s32 0, %v936
        %v1178 = vsel %vm1176, %v1177, %v936
        %v1179 = vshrl.u32 %v1178, 4
        %v1180 = vand.u32 %v1178, 15
        %v1181 = vsub.s32 0, %v1180
        %v1182 = vsel %vm1176, %v1181, %v1180
        %vm1183 = vcmp.lt.s32.totalorder %v937, 0
        %v1184 = vsub.s32 0, %v937
        %v1185 = vsel %vm1183, %v1184, %v937
        %v1186 = vshrl.u32 %v1185, 4
        %v1187 = vand.u32 %v1185, 15
        %v1188 = vsub.s32 0, %v1187
        %v1189 = vsel %vm1183, %v1188, %v1187
        %vm1190 = vcmp.ne.s32.totalorder %v944, 0
        %vm1191 = vcmp.ne.s32.totalorder %v951, 0
        %vm1192 = vcmp.ne.s32.totalorder %v958, 0
        %vm1193 = vcmp.ne.s32.totalorder %v965, 0
        %vm1194 = vcmp.ne.s32.totalorder %v972, 0
        %vm1195 = vcmp.ne.s32.totalorder %v979, 0
        %vm1196 = vcmp.ne.s32.totalorder %v986, 0
        %vm1197 = vcmp.ne.s32.totalorder %v993, 0
        %vm1198 = vcmp.ne.s32.totalorder %v1000, 0
        %vm1199 = vcmp.ne.s32.totalorder %v1007, 0
        %vm1200 = vcmp.ne.s32.totalorder %v1014, 0
        %vm1201 = vcmp.ne.s32.totalorder %v1021, 0
        %vm1202 = vcmp.ne.s32.totalorder %v1028, 0
        %vm1203 = vcmp.ne.s32.totalorder %v1035, 0
        %vm1204 = vcmp.ne.s32.totalorder %v1042, 0
        %vm1205 = vcmp.ne.s32.totalorder %v1049, 0
        %vm1206 = vcmp.ne.s32.totalorder %v1056, 0
        %vm1207 = vcmp.ne.s32.totalorder %v1063, 0
        %vm1208 = vcmp.ne.s32.totalorder %v1070, 0
        %vm1209 = vcmp.ne.s32.totalorder %v1077, 0
        %vm1210 = vcmp.ne.s32.totalorder %v1084, 0
        %vm1211 = vcmp.ne.s32.totalorder %v1091, 0
        %vm1212 = vcmp.ne.s32.totalorder %v1098, 0
        %vm1213 = vcmp.ne.s32.totalorder %v1105, 0
        %vm1214 = vcmp.ne.s32.totalorder %v1112, 0
        %vm1215 = vcmp.ne.s32.totalorder %v1119, 0
        %vm1216 = vcmp.ne.s32.totalorder %v1126, 0
        %vm1217 = vcmp.ne.s32.totalorder %v1133, 0
        %vm1218 = vcmp.ne.s32.totalorder %v1140, 0
        %vm1219 = vcmp.ne.s32.totalorder %v1147, 0
        %vm1220 = vcmp.ne.s32.totalorder %v1154, 0
        %vm1221 = vcmp.ne.s32.totalorder %v1161, 0
        %vm1222 = vcmp.ne.s32.totalorder %v1168, 0
        %vm1223 = vcmp.ne.s32.totalorder %v1175, 0
        %vm1224 = vcmp.ne.s32.totalorder %v1182, 0
        %vm1225 = vcmp.ne.s32.totalorder %v1189, 0
        %vm1226 = vcmp.lt.s32.totalorder %v944, 0
        %vm1227 = vcmp.lt.s32.totalorder %v951, 0
        %vm1228 = vcmp.lt.s32.totalorder %v958, 0
        %vm1229 = vcmp.lt.s32.totalorder %v965, 0
        %vm1230 = vcmp.lt.s32.totalorder %v972, 0
        %vm1231 = vcmp.lt.s32.totalorder %v979, 0
        %vm1232 = vcmp.lt.s32.totalorder %v986, 0
        %vm1233 = vcmp.lt.s32.totalorder %v993, 0
        %vm1234 = vcmp.lt.s32.totalorder %v1000, 0
        %vm1235 = vcmp.lt.s32.totalorder %v1007, 0
        %vm1236 = vcmp.lt.s32.totalorder %v1014, 0
        %vm1237 = vcmp.lt.s32.totalorder %v1021, 0
        %vm1238 = vcmp.lt.s32.totalorder %v1028, 0
        %vm1239 = vcmp.lt.s32.totalorder %v1035, 0
        %vm1240 = vcmp.lt.s32.totalorder %v1042, 0
        %vm1241 = vcmp.lt.s32.totalorder %v1049, 0
        %vm1242 = vcmp.lt.s32.totalorder %v1056, 0
        %vm1243 = vcmp.lt.s32.totalorder %v1063, 0
        %vm1244 = vcmp.lt.s32.totalorder %v1070, 0
        %vm1245 = vcmp.lt.s32.totalorder %v1077, 0
        %vm1246 = vcmp.lt.s32.totalorder %v1084, 0
        %vm1247 = vcmp.lt.s32.totalorder %v1091, 0
        %vm1248 = vcmp.lt.s32.totalorder %v1098, 0
        %vm1249 = vcmp.lt.s32.totalorder %v1105, 0
        %vm1250 = vcmp.lt.s32.totalorder %v1112, 0
        %vm1251 = vcmp.lt.s32.totalorder %v1119, 0
        %vm1252 = vcmp.lt.s32.totalorder %v1126, 0
        %vm1253 = vcmp.lt.s32.totalorder %v1133, 0
        %vm1254 = vcmp.lt.s32.totalorder %v1140, 0
        %vm1255 = vcmp.lt.s32.totalorder %v1147, 0
        %vm1256 = vcmp.lt.s32.totalorder %v1154, 0
        %vm1257 = vcmp.lt.s32.totalorder %v1161, 0
        %vm1258 = vcmp.lt.s32.totalorder %v1168, 0
        %vm1259 = vcmp.lt.s32.totalorder %v1175, 0
        %vm1260 = vcmp.lt.s32.totalorder %v1182, 0
        %vm1261 = vcmp.lt.s32.totalorder %v1189, 0
        %vm1262 = vmand %vm1226, %vm1190
        %vm1263 = vmand %vm1227, %vm1191
        %vm1264 = vmand %vm1228, %vm1192
        %vm1265 = vmand %vm1229, %vm1193
        %vm1266 = vmand %vm1230, %vm1194
        %vm1267 = vmand %vm1231, %vm1195
        %vm1268 = vmand %vm1232, %vm1196
        %vm1269 = vmand %vm1233, %vm1197
        %vm1270 = vmand %vm1234, %vm1198
        %vm1271 = vmand %vm1235, %vm1199
        %vm1272 = vmand %vm1236, %vm1200
        %vm1273 = vmand %vm1237, %vm1201
        %vm1274 = vmand %vm1238, %vm1202
        %vm1275 = vmand %vm1239, %vm1203
        %vm1276 = vmand %vm1240, %vm1204
        %vm1277 = vmand %vm1241, %vm1205
        %vm1278 = vmand %vm1242, %vm1206
        %vm1279 = vmand %vm1243, %vm1207
        %vm1280 = vmand %vm1244, %vm1208
        %vm1281 = vmand %vm1245, %vm1209
        %vm1282 = vmand %vm1246, %vm1210
        %vm1283 = vmand %vm1247, %vm1211
        %vm1284 = vmand %vm1248, %vm1212
        %vm1285 = vmand %vm1249, %vm1213
        %vm1286 = vmand %vm1250, %vm1214
        %vm1287 = vmand %vm1251, %vm1215
        %vm1288 = vmand %vm1252, %vm1216
        %vm1289 = vmand %vm1253, %vm1217
        %vm1290 = vmand %vm1254, %vm1218
        %vm1291 = vmand %vm1255, %vm1219
        %vm1292 = vmand %vm1256, %vm1220
        %vm1293 = vmand %vm1257, %vm1221
        %vm1294 = vmand %vm1258, %vm1222
        %vm1295 = vmand %vm1259, %vm1223
        %vm1296 = vmand %vm1260, %vm1224
        %vm1297 = vmand %vm1261, %vm1225
        %v1298 = vadd.s32 %v944, 16
        %v1299 = vadd.s32 %v951, 16
        %v1300 = vadd.s32 %v958, 16
        %v1301 = vadd.s32 %v965, 16
        %v1302 = vadd.s32 %v972, 16
        %v1303 = vadd.s32 %v979, 16
        %v1304 = vadd.s32 %v986, 16
        %v1305 = vadd.s32 %v993, 16
        %v1306 = vadd.s32 %v1000, 16
        %v1307 = vadd.s32 %v1007, 16
        %v1308 = vadd.s32 %v1014, 16
        %v1309 = vadd.s32 %v1021, 16
        %v1310 = vadd.s32 %v1028, 16
        %v1311 = vadd.s32 %v1035, 16
        %v1312 = vadd.s32 %v1042, 16
        %v1313 = vadd.s32 %v1049, 16
        %v1314 = vadd.s32 %v1056, 16
        %v1315 = vadd.s32 %v1063, 16
        %v1316 = vadd.s32 %v1070, 16
        %v1317 = vadd.s32 %v1077, 16
        %v1318 = vadd.s32 %v1084, 16
        %v1319 = vadd.s32 %v1091, 16
        %v1320 = vadd.s32 %v1098, 16
        %v1321 = vadd.s32 %v1105, 16
        %v1322 = vadd.s32 %v1112, 16
        %v1323 = vadd.s32 %v1119, 16
        %v1324 = vadd.s32 %v1126, 16
        %v1325 = vadd.s32 %v1133, 16
        %v1326 = vadd.s32 %v1140, 16
        %v1327 = vadd.s32 %v1147, 16
        %v1328 = vadd.s32 %v1154, 16
        %v1329 = vadd.s32 %v1161, 16
        %v1330 = vadd.s32 %v1168, 16
        %v1331 = vadd.s32 %v1175, 16
        %v1332 = vadd.s32 %v1182, 16
        %v1333 = vadd.s32 %v1189, 16
        %v1334 = vsel %vm1262, %v1298, %v944
        %v1335 = vsel %vm1263, %v1299, %v951
        %v1336 = vsel %vm1264, %v1300, %v958
        %v1337 = vsel %vm1265, %v1301, %v965
        %v1338 = vsel %vm1266, %v1302, %v972
        %v1339 = vsel %vm1267, %v1303, %v979
        %v1340 = vsel %vm1268, %v1304, %v986
        %v1341 = vsel %vm1269, %v1305, %v993
        %v1342 = vsel %vm1270, %v1306, %v1000
        %v1343 = vsel %vm1271, %v1307, %v1007
        %v1344 = vsel %vm1272, %v1308, %v1014
        %v1345 = vsel %vm1273, %v1309, %v1021
        %v1346 = vsel %vm1274, %v1310, %v1028
        %v1347 = vsel %vm1275, %v1311, %v1035
        %v1348 = vsel %vm1276, %v1312, %v1042
        %v1349 = vsel %vm1277, %v1313, %v1049
        %v1350 = vsel %vm1278, %v1314, %v1056
        %v1351 = vsel %vm1279, %v1315, %v1063
        %v1352 = vsel %vm1280, %v1316, %v1070
        %v1353 = vsel %vm1281, %v1317, %v1077
        %v1354 = vsel %vm1282, %v1318, %v1084
        %v1355 = vsel %vm1283, %v1319, %v1091
        %v1356 = vsel %vm1284, %v1320, %v1098
        %v1357 = vsel %vm1285, %v1321, %v1105
        %v1358 = vsel %vm1286, %v1322, %v1112
        %v1359 = vsel %vm1287, %v1323, %v1119
        %v1360 = vsel %vm1288, %v1324, %v1126
        %v1361 = vsel %vm1289, %v1325, %v1133
        %v1362 = vsel %vm1290, %v1326, %v1140
        %v1363 = vsel %vm1291, %v1327, %v1147
        %v1364 = vsel %vm1292, %v1328, %v1154
        %v1365 = vsel %vm1293, %v1329, %v1161
        %v1366 = vsel %vm1294, %v1330, %v1168
        %v1367 = vsel %vm1295, %v1331, %v1175
        %v1368 = vsel %vm1296, %v1332, %v1182
        %v1369 = vsel %vm1297, %v1333, %v1189
        %vm1370 = vcmp.eq.s32.totalorder %v1334, 0
        %vm1371 = vcmp.eq.s32.totalorder %v1335, 0
        %vm1372 = vcmp.eq.s32.totalorder %v1336, 0
        %vm1373 = vcmp.eq.s32.totalorder %v1337, 0
        %vm1374 = vcmp.eq.s32.totalorder %v1338, 0
        %vm1375 = vcmp.eq.s32.totalorder %v1339, 0
        %vm1376 = vcmp.eq.s32.totalorder %v1340, 0
        %vm1377 = vcmp.eq.s32.totalorder %v1341, 0
        %vm1378 = vcmp.eq.s32.totalorder %v1342, 0
        %vm1379 = vcmp.eq.s32.totalorder %v1343, 0
        %vm1380 = vcmp.eq.s32.totalorder %v1344, 0
        %vm1381 = vcmp.eq.s32.totalorder %v1345, 0
        %vm1382 = vcmp.eq.s32.totalorder %v1346, 0
        %vm1383 = vcmp.eq.s32.totalorder %v1347, 0
        %vm1384 = vcmp.eq.s32.totalorder %v1348, 0
        %vm1385 = vcmp.eq.s32.totalorder %v1349, 0
        %vm1386 = vcmp.eq.s32.totalorder %v1350, 0
        %vm1387 = vcmp.eq.s32.totalorder %v1351, 0
        %vm1388 = vcmp.eq.s32.totalorder %v1352, 0
        %vm1389 = vcmp.eq.s32.totalorder %v1353, 0
        %vm1390 = vcmp.eq.s32.totalorder %v1354, 0
        %vm1391 = vcmp.eq.s32.totalorder %v1355, 0
        %vm1392 = vcmp.eq.s32.totalorder %v1356, 0
        %vm1393 = vcmp.eq.s32.totalorder %v1357, 0
        %vm1394 = vcmp.eq.s32.totalorder %v1358, 0
        %vm1395 = vcmp.eq.s32.totalorder %v1359, 0
        %vm1396 = vcmp.eq.s32.totalorder %v1360, 0
        %vm1397 = vcmp.eq.s32.totalorder %v1361, 0
        %vm1398 = vcmp.eq.s32.totalorder %v1362, 0
        %vm1399 = vcmp.eq.s32.totalorder %v1363, 0
        %vm1400 = vcmp.eq.s32.totalorder %v1364, 0
        %vm1401 = vcmp.eq.s32.totalorder %v1365, 0
        %vm1402 = vcmp.eq.s32.totalorder %v1366, 0
        %vm1403 = vcmp.eq.s32.totalorder %v1367, 0
        %vm1404 = vcmp.eq.s32.totalorder %v1368, 0
        %vm1405 = vcmp.eq.s32.totalorder %v1369, 0
        %vm1442 = vcmask 1040384
        %v1443 = vrot.slane %v559, 7
        %v1444 = vrot.slane %v560, 7
        %v1445 = vsel %vm1442, %v1443, %v1444
        %v1446 = vrot.slane %v818, 7
        %v1447 = vsel %vm1442, %v1444, %v1446
        %v1448 = vrot.slane %v819, 7
        %v1449 = vsel %vm1442, %v1446, %v1448
        %v1450 = vrot.slane %v820, 7
        %v1451 = vsel %vm1442, %v1448, %v1450
        %v1452 = vrot.slane %v821, 7
        %v1453 = vsel %vm1442, %v1450, %v1452
        %v1454 = vrot.slane %v822, 7
        %v1455 = vsel %vm1442, %v1452, %v1454
        %v1456 = vrot.slane %v823, 7
        %v1457 = vsel %vm1442, %v1454, %v1456
        %v1458 = vrot.slane %v824, 7
        %v1459 = vsel %vm1442, %v1456, %v1458
        %v1460 = vrot.slane %v825, 7
        %v1461 = vsel %vm1442, %v1458, %v1460
        %v1462 = vrot.slane %v826, 7
        %v1463 = vsel %vm1442, %v1460, %v1462
        %v1464 = vrot.slane %v827, 7
        %v1465 = vsel %vm1442, %v1462, %v1464
        %v1466 = vrot.slane %v828, 7
        %v1467 = vsel %vm1442, %v1464, %v1466
        %v1468 = vrot.slane %v829, 7
        %v1469 = vsel %vm1442, %v1466, %v1468
        %v1470 = vrot.slane %v830, 7
        %v1471 = vsel %vm1442, %v1468, %v1470
        %v1472 = vrot.slane %v831, 7
        %v1473 = vsel %vm1442, %v1470, %v1472
        %v1474 = vrot.slane %v832, 7
        %v1475 = vsel %vm1442, %v1472, %v1474
        %v1476 = vrot.slane %v833, 7
        %v1477 = vsel %vm1442, %v1474, %v1476
        %v1478 = vrot.slane %v834, 7
        %v1479 = vsel %vm1442, %v1476, %v1478
        %v1480 = vrot.slane %v835, 7
        %v1481 = vsel %vm1442, %v1478, %v1480
        %v1482 = vrot.slane %v836, 7
        %v1483 = vsel %vm1442, %v1480, %v1482
        %v1484 = vrot.slane %v837, 7
        %v1485 = vsel %vm1442, %v1482, %v1484
        %v1486 = vrot.slane %v838, 7
        %v1487 = vsel %vm1442, %v1484, %v1486
        %v1488 = vrot.slane %v839, 7
        %v1489 = vsel %vm1442, %v1486, %v1488
        %v1490 = vrot.slane %v840, 7
        %v1491 = vsel %vm1442, %v1488, %v1490
        %v1492 = vrot.slane %v841, 7
        %v1493 = vsel %vm1442, %v1490, %v1492
        %v1494 = vrot.slane %v842, 7
        %v1495 = vsel %vm1442, %v1492, %v1494
        %v1496 = vrot.slane %v843, 7
        %v1497 = vsel %vm1442, %v1494, %v1496
        %v1498 = vrot.slane %v844, 7
        %v1499 = vsel %vm1442, %v1496, %v1498
        %v1500 = vrot.slane %v845, 7
        %v1501 = vsel %vm1442, %v1498, %v1500
        %v1502 = vrot.slane %v846, 7
        %v1503 = vsel %vm1442, %v1500, %v1502
        %v1504 = vrot.slane %v847, 7
        %v1505 = vsel %vm1442, %v1502, %v1504
        %v1506 = vrot.slane %v848, 7
        %v1507 = vsel %vm1442, %v1504, %v1506
        %v1508 = vrot.slane %v849, 7
        %v1509 = vsel %vm1442, %v1506, %v1508
        %v1510 = vrot.slane %v899, 7
        %v1511 = vsel %vm1442, %v1508, %v1510
        %v1512 = vrot.slane %v900, 7
        %v1513 = vsel %vm1442, %v1510, %v1512
        %v1550 = vsel %vm1442, 0.0, %v1443
        %v1551 = vsel %vm1370, 1, 0
        %v1552 = vsel %vm1371, 1, 0
        %v1553 = vsel %vm1372, 1, 0
        %v1554 = vsel %vm1373, 1, 0
        %v1555 = vsel %vm1374, 1, 0
        %v1556 = vsel %vm1375, 1, 0
        %v1557 = vsel %vm1376, 1, 0
        %v1558 = vsel %vm1377, 1, 0
        %v1559 = vsel %vm1378, 1, 0
        %v1560 = vsel %vm1379, 1, 0
        %v1561 = vsel %vm1380, 1, 0
        %v1562 = vsel %vm1381, 1, 0
        %v1563 = vsel %vm1382, 1, 0
        %v1564 = vsel %vm1383, 1, 0
        %v1565 = vsel %vm1384, 1, 0
        %v1566 = vsel %vm1385, 1, 0
        %v1567 = vsel %vm1386, 1, 0
        %v1568 = vsel %vm1387, 1, 0
        %v1569 = vsel %vm1388, 1, 0
        %v1570 = vsel %vm1389, 1, 0
        %v1571 = vsel %vm1390, 1, 0
        %v1572 = vsel %vm1391, 1, 0
        %v1573 = vsel %vm1392, 1, 0
        %v1574 = vsel %vm1393, 1, 0
        %v1575 = vsel %vm1394, 1, 0
        %v1576 = vsel %vm1395, 1, 0
        %v1577 = vsel %vm1396, 1, 0
        %v1578 = vsel %vm1397, 1, 0
        %v1579 = vsel %vm1398, 1, 0
        %v1580 = vsel %vm1399, 1, 0
        %v1581 = vsel %vm1400, 1, 0
        %v1582 = vsel %vm1401, 1, 0
        %v1583 = vsel %vm1402, 1, 0
        %v1584 = vsel %vm1403, 1, 0
        %v1585 = vsel %vm1404, 1, 0
        %v1586 = vsel %vm1405, 1, 0
        %vm1587 = vcmp.eq.s32.totalorder %v1551, 1
        %vm1588 = vcmp.eq.s32.totalorder %v1552, 1
        %vm1589 = vcmp.eq.s32.totalorder %v1553, 1
        %vm1590 = vcmp.eq.s32.totalorder %v1554, 1
        %vm1591 = vcmp.eq.s32.totalorder %v1555, 1
        %vm1592 = vcmp.eq.s32.totalorder %v1556, 1
        %vm1593 = vcmp.eq.s32.totalorder %v1557, 1
        %vm1594 = vcmp.eq.s32.totalorder %v1558, 1
        %vm1595 = vcmp.eq.s32.totalorder %v1559, 1
        %vm1596 = vcmp.eq.s32.totalorder %v1560, 1
        %vm1597 = vcmp.eq.s32.totalorder %v1561, 1
        %vm1598 = vcmp.eq.s32.totalorder %v1562, 1
        %vm1599 = vcmp.eq.s32.totalorder %v1563, 1
        %vm1600 = vcmp.eq.s32.totalorder %v1564, 1
        %vm1601 = vcmp.eq.s32.totalorder %v1565, 1
        %vm1602 = vcmp.eq.s32.totalorder %v1566, 1
        %vm1603 = vcmp.eq.s32.totalorder %v1567, 1
        %vm1604 = vcmp.eq.s32.totalorder %v1568, 1
        %vm1605 = vcmp.eq.s32.totalorder %v1569, 1
        %vm1606 = vcmp.eq.s32.totalorder %v1570, 1
        %vm1607 = vcmp.eq.s32.totalorder %v1571, 1
        %vm1608 = vcmp.eq.s32.totalorder %v1572, 1
        %vm1609 = vcmp.eq.s32.totalorder %v1573, 1
        %vm1610 = vcmp.eq.s32.totalorder %v1574, 1
        %vm1611 = vcmp.eq.s32.totalorder %v1575, 1
        %vm1612 = vcmp.eq.s32.totalorder %v1576, 1
        %vm1613 = vcmp.eq.s32.totalorder %v1577, 1
        %vm1614 = vcmp.eq.s32.totalorder %v1578, 1
        %vm1615 = vcmp.eq.s32.totalorder %v1579, 1
        %vm1616 = vcmp.eq.s32.totalorder %v1580, 1
        %vm1617 = vcmp.eq.s32.totalorder %v1581, 1
        %vm1618 = vcmp.eq.s32.totalorder %v1582, 1
        %vm1619 = vcmp.eq.s32.totalorder %v1583, 1
        %vm1620 = vcmp.eq.s32.totalorder %v1584, 1
        %vm1621 = vcmp.eq.s32.totalorder %v1585, 1
        %vm1622 = vcmp.eq.s32.totalorder %v1586, 1
        %v1623 = vsel %vm1587, 0.0, %v1550
        %v1624 = vsel %vm1588, 0.0, %v1445
        %v1625 = vsel %vm1589, 0.0, %v1447
        %v1626 = vsel %vm1590, 0.0, %v1449
        %v1627 = vsel %vm1591, 0.0, %v1451
        %v1628 = vsel %vm1592, 0.0, %v1453
        %v1629 = vsel %vm1593, 0.0, %v1455
        %v1630 = vsel %vm1594, 0.0, %v1457
        %v1631 = vsel %vm1595, 0.0, %v1459
        %v1632 = vsel %vm1596, 0.0, %v1461
        %v1633 = vsel %vm1597, 0.0, %v1463
        %v1634 = vsel %vm1598, 0.0, %v1465
        %v1635 = vsel %vm1599, 0.0, %v1467
        %v1636 = vsel %vm1600, 0.0, %v1469
        %v1637 = vsel %vm1601, 0.0, %v1471
        %v1638 = vsel %vm1602, 0.0, %v1473
        %v1639 = vsel %vm1603, 0.0, %v1475
        %v1640 = vsel %vm1604, 0.0, %v1477
        %v1641 = vsel %vm1605, 0.0, %v1479
        %v1642 = vsel %vm1606, 0.0, %v1481
        %v1643 = vsel %vm1607, 0.0, %v1483
        %v1644 = vsel %vm1608, 0.0, %v1485
        %v1645 = vsel %vm1609, 0.0, %v1487
        %v1646 = vsel %vm1610, 0.0, %v1489
        %v1647 = vsel %vm1611, 0.0, %v1491
        %v1648 = vsel %vm1612, 0.0, %v1493
        %v1649 = vsel %vm1613, 0.0, %v1495
        %v1650 = vsel %vm1614, 0.0, %v1497
        %v1651 = vsel %vm1615, 0.0, %v1499
        %v1652 = vsel %vm1616, 0.0, %v1501
        %v1653 = vsel %vm1617, 0.0, %v1503
        %v1654 = vsel %vm1618, 0.0, %v1505
        %v1655 = vsel %vm1619, 0.0, %v1507
        %v1656 = vsel %vm1620, 0.0, %v1509
        %v1657 = vsel %vm1621, 0.0, %v1511
        %v1658 = vsel %vm1622, 0.0, %v1513
        %vm1659 = vcmp.eq.s32.totalorder %v1334, 15
        %vm1660 = vcmp.eq.s32.totalorder %v1335, 15
        %vm1661 = vcmp.eq.s32.totalorder %v1336, 15
        %vm1662 = vcmp.eq.s32.totalorder %v1337, 15
        %vm1663 = vcmp.eq.s32.totalorder %v1338, 15
        %vm1664 = vcmp.eq.s32.totalorder %v1339, 15
        %vm1665 = vcmp.eq.s32.totalorder %v1340, 15
        %vm1666 = vcmp.eq.s32.totalorder %v1341, 15
        %vm1667 = vcmp.eq.s32.totalorder %v1342, 15
        %vm1668 = vcmp.eq.s32.totalorder %v1343, 15
        %vm1669 = vcmp.eq.s32.totalorder %v1344, 15
        %vm1670 = vcmp.eq.s32.totalorder %v1345, 15
        %vm1671 = vcmp.eq.s32.totalorder %v1346, 15
        %vm1672 = vcmp.eq.s32.totalorder %v1347, 15
        %vm1673 = vcmp.eq.s32.totalorder %v1348, 15
        %vm1674 = vcmp.eq.s32.totalorder %v1349, 15
        %vm1675 = vcmp.eq.s32.totalorder %v1350, 15
        %vm1676 = vcmp.eq.s32.totalorder %v1351, 15
        %vm1677 = vcmp.eq.s32.totalorder %v1352, 15
        %vm1678 = vcmp.eq.s32.totalorder %v1353, 15
        %vm1679 = vcmp.eq.s32.totalorder %v1354, 15
        %vm1680 = vcmp.eq.s32.totalorder %v1355, 15
        %vm1681 = vcmp.eq.s32.totalorder %v1356, 15
        %vm1682 = vcmp.eq.s32.totalorder %v1357, 15
        %vm1683 = vcmp.eq.s32.totalorder %v1358, 15
        %vm1684 = vcmp.eq.s32.totalorder %v1359, 15
        %vm1685 = vcmp.eq.s32.totalorder %v1360, 15
        %vm1686 = vcmp.eq.s32.totalorder %v1361, 15
        %vm1687 = vcmp.eq.s32.totalorder %v1362, 15
        %vm1688 = vcmp.eq.s32.totalorder %v1363, 15
        %vm1689 = vcmp.eq.s32.totalorder %v1364, 15
        %vm1690 = vcmp.eq.s32.totalorder %v1365, 15
        %vm1691 = vcmp.eq.s32.totalorder %v1366, 15
        %vm1692 = vcmp.eq.s32.totalorder %v1367, 15
        %vm1693 = vcmp.eq.s32.totalorder %v1368, 15
        %vm1694 = vcmp.eq.s32.totalorder %v1369, 15
        %vm1695 = vcmask 1046528
        %v1696 = vrot.slane %v559, 1
        %v1697 = vrot.slane %v560, 1
        %v1698 = vsel %vm1695, %v1696, %v1697
        %v1699 = vrot.slane %v818, 1
        %v1700 = vsel %vm1695, %v1697, %v1699
        %v1701 = vrot.slane %v819, 1
        %v1702 = vsel %vm1695, %v1699, %v1701
        %v1703 = vrot.slane %v820, 1
        %v1704 = vsel %vm1695, %v1701, %v1703
        %v1705 = vrot.slane %v821, 1
        %v1706 = vsel %vm1695, %v1703, %v1705
        %v1707 = vrot.slane %v822, 1
        %v1708 = vsel %vm1695, %v1705, %v1707
        %v1709 = vrot.slane %v823, 1
        %v1710 = vsel %vm1695, %v1707, %v1709
        %v1711 = vrot.slane %v824, 1
        %v1712 = vsel %vm1695, %v1709, %v1711
        %v1713 = vrot.slane %v825, 1
        %v1714 = vsel %vm1695, %v1711, %v1713
        %v1715 = vrot.slane %v826, 1
        %v1716 = vsel %vm1695, %v1713, %v1715
        %v1717 = vrot.slane %v827, 1
        %v1718 = vsel %vm1695, %v1715, %v1717
        %v1719 = vrot.slane %v828, 1
        %v1720 = vsel %vm1695, %v1717, %v1719
        %v1721 = vrot.slane %v829, 1
        %v1722 = vsel %vm1695, %v1719, %v1721
        %v1723 = vrot.slane %v830, 1
        %v1724 = vsel %vm1695, %v1721, %v1723
        %v1725 = vrot.slane %v831, 1
        %v1726 = vsel %vm1695, %v1723, %v1725
        %v1727 = vrot.slane %v832, 1
        %v1728 = vsel %vm1695, %v1725, %v1727
        %v1729 = vrot.slane %v833, 1
        %v1730 = vsel %vm1695, %v1727, %v1729
        %v1731 = vrot.slane %v834, 1
        %v1732 = vsel %vm1695, %v1729, %v1731
        %v1733 = vrot.slane %v835, 1
        %v1734 = vsel %vm1695, %v1731, %v1733
        %v1735 = vrot.slane %v836, 1
        %v1736 = vsel %vm1695, %v1733, %v1735
        %v1737 = vrot.slane %v837, 1
        %v1738 = vsel %vm1695, %v1735, %v1737
        %v1739 = vrot.slane %v838, 1
        %v1740 = vsel %vm1695, %v1737, %v1739
        %v1741 = vrot.slane %v839, 1
        %v1742 = vsel %vm1695, %v1739, %v1741
        %v1743 = vrot.slane %v840, 1
        %v1744 = vsel %vm1695, %v1741, %v1743
        %v1745 = vrot.slane %v841, 1
        %v1746 = vsel %vm1695, %v1743, %v1745
        %v1747 = vrot.slane %v842, 1
        %v1748 = vsel %vm1695, %v1745, %v1747
        %v1749 = vrot.slane %v843, 1
        %v1750 = vsel %vm1695, %v1747, %v1749
        %v1751 = vrot.slane %v844, 1
        %v1752 = vsel %vm1695, %v1749, %v1751
        %v1753 = vrot.slane %v845, 1
        %v1754 = vsel %vm1695, %v1751, %v1753
        %v1755 = vrot.slane %v846, 1
        %v1756 = vsel %vm1695, %v1753, %v1755
        %v1757 = vrot.slane %v847, 1
        %v1758 = vsel %vm1695, %v1755, %v1757
        %v1759 = vrot.slane %v848, 1
        %v1760 = vsel %vm1695, %v1757, %v1759
        %v1761 = vrot.slane %v849, 1
        %v1762 = vsel %vm1695, %v1759, %v1761
        %v1763 = vrot.slane %v899, 1
        %v1764 = vsel %vm1695, %v1761, %v1763
        %v1765 = vrot.slane %v900, 1
        %v1766 = vsel %vm1695, %v1763, %v1765
        %v1803 = vsel %vm1695, %v1765, 0.0
        %v1804 = vsel %vm1659, 1, 0
        %v1805 = vsel %vm1660, 1, 0
        %v1806 = vsel %vm1661, 1, 0
        %v1807 = vsel %vm1662, 1, 0
        %v1808 = vsel %vm1663, 1, 0
        %v1809 = vsel %vm1664, 1, 0
        %v1810 = vsel %vm1665, 1, 0
        %v1811 = vsel %vm1666, 1, 0
        %v1812 = vsel %vm1667, 1, 0
        %v1813 = vsel %vm1668, 1, 0
        %v1814 = vsel %vm1669, 1, 0
        %v1815 = vsel %vm1670, 1, 0
        %v1816 = vsel %vm1671, 1, 0
        %v1817 = vsel %vm1672, 1, 0
        %v1818 = vsel %vm1673, 1, 0
        %v1819 = vsel %vm1674, 1, 0
        %v1820 = vsel %vm1675, 1, 0
        %v1821 = vsel %vm1676, 1, 0
        %v1822 = vsel %vm1677, 1, 0
        %v1823 = vsel %vm1678, 1, 0
        %v1824 = vsel %vm1679, 1, 0
        %v1825 = vsel %vm1680, 1, 0
        %v1826 = vsel %vm1681, 1, 0
        %v1827 = vsel %vm1682, 1, 0
        %v1828 = vsel %vm1683, 1, 0
        %v1829 = vsel %vm1684, 1, 0
        %v1830 = vsel %vm1685, 1, 0
        %v1831 = vsel %vm1686, 1, 0
        %v1832 = vsel %vm1687, 1, 0
        %v1833 = vsel %vm1688, 1, 0
        %v1834 = vsel %vm1689, 1, 0
        %v1835 = vsel %vm1690, 1, 0
        %v1836 = vsel %vm1691, 1, 0
        %v1837 = vsel %vm1692, 1, 0
        %v1838 = vsel %vm1693, 1, 0
        %v1839 = vsel %vm1694, 1, 0
        %vm1840 = vcmp.eq.s32.totalorder %v1804, 1
        %vm1841 = vcmp.eq.s32.totalorder %v1805, 1
        %vm1842 = vcmp.eq.s32.totalorder %v1806, 1
        %vm1843 = vcmp.eq.s32.totalorder %v1807, 1
        %vm1844 = vcmp.eq.s32.totalorder %v1808, 1
        %vm1845 = vcmp.eq.s32.totalorder %v1809, 1
        %vm1846 = vcmp.eq.s32.totalorder %v1810, 1
        %vm1847 = vcmp.eq.s32.totalorder %v1811, 1
        %vm1848 = vcmp.eq.s32.totalorder %v1812, 1
        %vm1849 = vcmp.eq.s32.totalorder %v1813, 1
        %vm1850 = vcmp.eq.s32.totalorder %v1814, 1
        %vm1851 = vcmp.eq.s32.totalorder %v1815, 1
        %vm1852 = vcmp.eq.s32.totalorder %v1816, 1
        %vm1853 = vcmp.eq.s32.totalorder %v1817, 1
        %vm1854 = vcmp.eq.s32.totalorder %v1818, 1
        %vm1855 = vcmp.eq.s32.totalorder %v1819, 1
        %vm1856 = vcmp.eq.s32.totalorder %v1820, 1
        %vm1857 = vcmp.eq.s32.totalorder %v1821, 1
        %vm1858 = vcmp.eq.s32.totalorder %v1822, 1
        %vm1859 = vcmp.eq.s32.totalorder %v1823, 1
        %vm1860 = vcmp.eq.s32.totalorder %v1824, 1
        %vm1861 = vcmp.eq.s32.totalorder %v1825, 1
        %vm1862 = vcmp.eq.s32.totalorder %v1826, 1
        %vm1863 = vcmp.eq.s32.totalorder %v1827, 1
        %vm1864 = vcmp.eq.s32.totalorder %v1828, 1
        %vm1865 = vcmp.eq.s32.totalorder %v1829, 1
        %vm1866 = vcmp.eq.s32.totalorder %v1830, 1
        %vm1867 = vcmp.eq.s32.totalorder %v1831, 1
        %vm1868 = vcmp.eq.s32.totalorder %v1832, 1
        %vm1869 = vcmp.eq.s32.totalorder %v1833, 1
        %vm1870 = vcmp.eq.s32.totalorder %v1834, 1
        %vm1871 = vcmp.eq.s32.totalorder %v1835, 1
        %vm1872 = vcmp.eq.s32.totalorder %v1836, 1
        %vm1873 = vcmp.eq.s32.totalorder %v1837, 1
        %vm1874 = vcmp.eq.s32.totalorder %v1838, 1
        %vm1875 = vcmp.eq.s32.totalorder %v1839, 1
        %v1876 = vsel %vm1840, 0.0, %v1698
        %v1877 = vsel %vm1841, 0.0, %v1700
        %v1878 = vsel %vm1842, 0.0, %v1702
        %v1879 = vsel %vm1843, 0.0, %v1704
        %v1880 = vsel %vm1844, 0.0, %v1706
        %v1881 = vsel %vm1845, 0.0, %v1708
        %v1882 = vsel %vm1846, 0.0, %v1710
        %v1883 = vsel %vm1847, 0.0, %v1712
        %v1884 = vsel %vm1848, 0.0, %v1714
        %v1885 = vsel %vm1849, 0.0, %v1716
        %v1886 = vsel %vm1850, 0.0, %v1718
        %v1887 = vsel %vm1851, 0.0, %v1720
        %v1888 = vsel %vm1852, 0.0, %v1722
        %v1889 = vsel %vm1853, 0.0, %v1724
        %v1890 = vsel %vm1854, 0.0, %v1726
        %v1891 = vsel %vm1855, 0.0, %v1728
        %v1892 = vsel %vm1856, 0.0, %v1730
        %v1893 = vsel %vm1857, 0.0, %v1732
        %v1894 = vsel %vm1858, 0.0, %v1734
        %v1895 = vsel %vm1859, 0.0, %v1736
        %v1896 = vsel %vm1860, 0.0, %v1738
        %v1897 = vsel %vm1861, 0.0, %v1740
        %v1898 = vsel %vm1862, 0.0, %v1742
        %v1899 = vsel %vm1863, 0.0, %v1744
        %v1900 = vsel %vm1864, 0.0, %v1746
        %v1901 = vsel %vm1865, 0.0, %v1748
        %v1902 = vsel %vm1866, 0.0, %v1750
        %v1903 = vsel %vm1867, 0.0, %v1752
        %v1904 = vsel %vm1868, 0.0, %v1754
        %v1905 = vsel %vm1869, 0.0, %v1756
        %v1906 = vsel %vm1870, 0.0, %v1758
        %v1907 = vsel %vm1871, 0.0, %v1760
        %v1908 = vsel %vm1872, 0.0, %v1762
        %v1909 = vsel %vm1873, 0.0, %v1764
        %v1910 = vsel %vm1874, 0.0, %v1766
        %v1911 = vsel %vm1875, 0.0, %v1803
        %1912 = vrot.lane.b32.xlu0 %v559, 4
        %v1913 = vpop.permute.xlu0 %1912
        %1914 = vrot.lane.b32.xlu0 %v560, 4
        %v1915 = vpop.permute.xlu0 %1914
        %1916 = vrot.lane.b32.xlu0 %v818, 4
        %v1917 = vpop.permute.xlu0 %1916
        %1918 = vrot.lane.b32.xlu0 %v819, 4
        %v1919 = vpop.permute.xlu0 %1918
        %1920 = vrot.lane.b32.xlu0 %v820, 4
        %v1921 = vpop.permute.xlu0 %1920
        %1922 = vrot.lane.b32.xlu0 %v821, 4
        %v1923 = vpop.permute.xlu0 %1922
        %1924 = vrot.lane.b32.xlu0 %v822, 4
        %v1925 = vpop.permute.xlu0 %1924
        %1926 = vrot.lane.b32.xlu0 %v823, 4
        %v1927 = vpop.permute.xlu0 %1926
        %1928 = vrot.lane.b32.xlu0 %v824, 4
        %v1929 = vpop.permute.xlu0 %1928
        %1930 = vrot.lane.b32.xlu0 %v825, 4
        %v1931 = vpop.permute.xlu0 %1930
        %1932 = vrot.lane.b32.xlu0 %v826, 4
        %v1933 = vpop.permute.xlu0 %1932
        %1934 = vrot.lane.b32.xlu0 %v827, 4
        %v1935 = vpop.permute.xlu0 %1934
        %1936 = vrot.lane.b32.xlu0 %v828, 4
        %v1937 = vpop.permute.xlu0 %1936
        %1938 = vrot.lane.b32.xlu0 %v829, 4
        %v1939 = vpop.permute.xlu0 %1938
        %1940 = vrot.lane.b32.xlu0 %v830, 4
        %v1941 = vpop.permute.xlu0 %1940
        %1942 = vrot.lane.b32.xlu0 %v831, 4
        %v1943 = vpop.permute.xlu0 %1942
        %1944 = vrot.lane.b32.xlu0 %v832, 4
        %v1945 = vpop.permute.xlu0 %1944
        %1946 = vrot.lane.b32.xlu0 %v833, 4
        %v1947 = vpop.permute.xlu0 %1946
        %1948 = vrot.lane.b32.xlu0 %v834, 4
        %v1949 = vpop.permute.xlu0 %1948
        %1950 = vrot.lane.b32.xlu0 %v835, 4
        %v1951 = vpop.permute.xlu0 %1950
        %1952 = vrot.lane.b32.xlu0 %v836, 4
        %v1953 = vpop.permute.xlu0 %1952
        %1954 = vrot.lane.b32.xlu0 %v837, 4
        %v1955 = vpop.permute.xlu0 %1954
        %1956 = vrot.lane.b32.xlu0 %v838, 4
        %v1957 = vpop.permute.xlu0 %1956
        %1958 = vrot.lane.b32.xlu0 %v839, 4
        %v1959 = vpop.permute.xlu0 %1958
        %1960 = vrot.lane.b32.xlu0 %v840, 4
        %v1961 = vpop.permute.xlu0 %1960
        %1962 = vrot.lane.b32.xlu0 %v841, 4
        %v1963 = vpop.permute.xlu0 %1962
        %1964 = vrot.lane.b32.xlu0 %v842, 4
        %v1965 = vpop.permute.xlu0 %1964
        %1966 = vrot.lane.b32.xlu0 %v843, 4
        %v1967 = vpop.permute.xlu0 %1966
        %1968 = vrot.lane.b32.xlu0 %v844, 4
        %v1969 = vpop.permute.xlu0 %1968
        %1970 = vrot.lane.b32.xlu0 %v845, 4
        %v1971 = vpop.permute.xlu0 %1970
        %1972 = vrot.lane.b32.xlu0 %v846, 4
        %v1973 = vpop.permute.xlu0 %1972
        %1974 = vrot.lane.b32.xlu0 %v847, 4
        %v1975 = vpop.permute.xlu0 %1974
        %1976 = vrot.lane.b32.xlu0 %v848, 4
        %v1977 = vpop.permute.xlu0 %1976
        %1978 = vrot.lane.b32.xlu0 %v849, 4
        %v1979 = vpop.permute.xlu0 %1978
        %1980 = vrot.lane.b32.xlu0 %v899, 4
        %v1981 = vpop.permute.xlu0 %1980
        %1982 = vrot.lane.b32.xlu0 %v900, 4
        %v1983 = vpop.permute.xlu0 %1982
        %2056 = vrot.lane.b32.xlu0 %v1876, 8
        %v2057 = vpop.permute.xlu0 %2056
        %2058 = vrot.lane.b32.xlu0 %v1877, 8
        %v2059 = vpop.permute.xlu0 %2058
        %2060 = vrot.lane.b32.xlu0 %v1878, 8
        %v2061 = vpop.permute.xlu0 %2060
        %2062 = vrot.lane.b32.xlu0 %v1879, 8
        %v2063 = vpop.permute.xlu0 %2062
        %2064 = vrot.lane.b32.xlu0 %v1880, 8
        %v2065 = vpop.permute.xlu0 %2064
        %2066 = vrot.lane.b32.xlu0 %v1881, 8
        %v2067 = vpop.permute.xlu0 %2066
        %2068 = vrot.lane.b32.xlu0 %v1882, 8
        %v2069 = vpop.permute.xlu0 %2068
        %2070 = vrot.lane.b32.xlu0 %v1883, 8
        %v2071 = vpop.permute.xlu0 %2070
        %2072 = vrot.lane.b32.xlu0 %v1884, 8
        %v2073 = vpop.permute.xlu0 %2072
        %2074 = vrot.lane.b32.xlu0 %v1885, 8
        %v2075 = vpop.permute.xlu0 %2074
        %2076 = vrot.lane.b32.xlu0 %v1886, 8
        %v2077 = vpop.permute.xlu0 %2076
        %2078 = vrot.lane.b32.xlu0 %v1887, 8
        %v2079 = vpop.permute.xlu0 %2078
        %2080 = vrot.lane.b32.xlu0 %v1888, 8
        %v2081 = vpop.permute.xlu0 %2080
        %2082 = vrot.lane.b32.xlu0 %v1889, 8
        %v2083 = vpop.permute.xlu0 %2082
        %2084 = vrot.lane.b32.xlu0 %v1890, 8
        %v2085 = vpop.permute.xlu0 %2084
        %2086 = vrot.lane.b32.xlu0 %v1891, 8
        %v2087 = vpop.permute.xlu0 %2086
        %2088 = vrot.lane.b32.xlu0 %v1892, 8
        %v2089 = vpop.permute.xlu0 %2088
        %2090 = vrot.lane.b32.xlu0 %v1893, 8
        %v2091 = vpop.permute.xlu0 %2090
        %2092 = vrot.lane.b32.xlu0 %v1894, 8
        %v2093 = vpop.permute.xlu0 %2092
        %2094 = vrot.lane.b32.xlu0 %v1895, 8
        %v2095 = vpop.permute.xlu0 %2094
        %2096 = vrot.lane.b32.xlu0 %v1896, 8
        %v2097 = vpop.permute.xlu0 %2096
        %2098 = vrot.lane.b32.xlu0 %v1897, 8
        %v2099 = vpop.permute.xlu0 %2098
        %2100 = vrot.lane.b32.xlu0 %v1898, 8
        %v2101 = vpop.permute.xlu0 %2100
        %2102 = vrot.lane.b32.xlu0 %v1899, 8
        %v2103 = vpop.permute.xlu0 %2102
        %2104 = vrot.lane.b32.xlu0 %v1900, 8
        %v2105 = vpop.permute.xlu0 %2104
        %2106 = vrot.lane.b32.xlu0 %v1901, 8
        %v2107 = vpop.permute.xlu0 %2106
        %2108 = vrot.lane.b32.xlu0 %v1902, 8
        %v2109 = vpop.permute.xlu0 %2108
        %2110 = vrot.lane.b32.xlu0 %v1903, 8
        %v2111 = vpop.permute.xlu0 %2110
        %2112 = vrot.lane.b32.xlu0 %v1904, 8
        %v2113 = vpop.permute.xlu0 %2112
        %2114 = vrot.lane.b32.xlu0 %v1905, 8
        %v2115 = vpop.permute.xlu0 %2114
        %2116 = vrot.lane.b32.xlu0 %v1906, 8
        %v2117 = vpop.permute.xlu0 %2116
        %2118 = vrot.lane.b32.xlu0 %v1907, 8
        %v2119 = vpop.permute.xlu0 %2118
        %2120 = vrot.lane.b32.xlu0 %v1908, 8
        %v2121 = vpop.permute.xlu0 %2120
        %2122 = vrot.lane.b32.xlu0 %v1909, 8
        %v2123 = vpop.permute.xlu0 %2122
        %2124 = vrot.lane.b32.xlu0 %v1910, 8
        %v2125 = vpop.permute.xlu0 %2124
        %2126 = vrot.lane.b32.xlu0 %v1911, 8
        %v2127 = vpop.permute.xlu0 %2126
        %vm2164 = vcmask 31744
        %v2165 = vsel %vm2164, %v1623, %v1913
        %v2166 = vsel %vm2164, %v1624, %v1915
        %v2167 = vsel %vm2164, %v1625, %v1917
        %v2168 = vsel %vm2164, %v1626, %v1919
        %v2169 = vsel %vm2164, %v1627, %v1921
        %v2170 = vsel %vm2164, %v1628, %v1923
        %v2171 = vsel %vm2164, %v1629, %v1925
        %v2172 = vsel %vm2164, %v1630, %v1927
        %v2173 = vsel %vm2164, %v1631, %v1929
        %v2174 = vsel %vm2164, %v1632, %v1931
        %v2175 = vsel %vm2164, %v1633, %v1933
        %v2176 = vsel %vm2164, %v1634, %v1935
        %v2177 = vsel %vm2164, %v1635, %v1937
        %v2178 = vsel %vm2164, %v1636, %v1939
        %v2179 = vsel %vm2164, %v1637, %v1941
        %v2180 = vsel %vm2164, %v1638, %v1943
        %v2181 = vsel %vm2164, %v1639, %v1945
        %v2182 = vsel %vm2164, %v1640, %v1947
        %v2183 = vsel %vm2164, %v1641, %v1949
        %v2184 = vsel %vm2164, %v1642, %v1951
        %v2185 = vsel %vm2164, %v1643, %v1953
        %v2186 = vsel %vm2164, %v1644, %v1955
        %v2187 = vsel %vm2164, %v1645, %v1957
        %v2188 = vsel %vm2164, %v1646, %v1959
        %v2189 = vsel %vm2164, %v1647, %v1961
        %v2190 = vsel %vm2164, %v1648, %v1963
        %v2191 = vsel %vm2164, %v1649, %v1965
        %v2192 = vsel %vm2164, %v1650, %v1967
        %v2193 = vsel %vm2164, %v1651, %v1969
        %v2194 = vsel %vm2164, %v1652, %v1971
        %v2195 = vsel %vm2164, %v1653, %v1973
        %v2196 = vsel %vm2164, %v1654, %v1975
        %v2197 = vsel %vm2164, %v1655, %v1977
        %v2198 = vsel %vm2164, %v1656, %v1979
        %v2199 = vsel %vm2164, %v1657, %v1981
        %v2200 = vsel %vm2164, %v1658, %v1983
        %vm2201 = vcmask 64512
        %v2202 = vsel %vm2201, %v2165, %v2057
        %v2203 = vsel %vm2201, %v2166, %v2059
        %v2204 = vsel %vm2201, %v2167, %v2061
        %v2205 = vsel %vm2201, %v2168, %v2063
        %v2206 = vsel %vm2201, %v2169, %v2065
        %v2207 = vsel %vm2201, %v2170, %v2067
        %v2208 = vsel %vm2201, %v2171, %v2069
        %v2209 = vsel %vm2201, %v2172, %v2071
        %v2210 = vsel %vm2201, %v2173, %v2073
        %v2211 = vsel %vm2201, %v2174, %v2075
        %v2212 = vsel %vm2201, %v2175, %v2077
        %v2213 = vsel %vm2201, %v2176, %v2079
        %v2214 = vsel %vm2201, %v2177, %v2081
        %v2215 = vsel %vm2201, %v2178, %v2083
        %v2216 = vsel %vm2201, %v2179, %v2085
        %v2217 = vsel %vm2201, %v2180, %v2087
        %v2218 = vsel %vm2201, %v2181, %v2089
        %v2219 = vsel %vm2201, %v2182, %v2091
        %v2220 = vsel %vm2201, %v2183, %v2093
        %v2221 = vsel %vm2201, %v2184, %v2095
        %v2222 = vsel %vm2201, %v2185, %v2097
        %v2223 = vsel %vm2201, %v2186, %v2099
        %v2224 = vsel %vm2201, %v2187, %v2101
        %v2225 = vsel %vm2201, %v2188, %v2103
        %v2226 = vsel %vm2201, %v2189, %v2105
        %v2227 = vsel %vm2201, %v2190, %v2107
        %v2228 = vsel %vm2201, %v2191, %v2109
        %v2229 = vsel %vm2201, %v2192, %v2111
        %v2230 = vsel %vm2201, %v2193, %v2113
        %v2231 = vsel %vm2201, %v2194, %v2115
        %v2232 = vsel %vm2201, %v2195, %v2117
        %v2233 = vsel %vm2201, %v2196, %v2119
        %v2234 = vsel %vm2201, %v2197, %v2121
        %v2235 = vsel %vm2201, %v2198, %v2123
        %v2236 = vsel %vm2201, %v2199, %v2125
        %v2237 = vsel %vm2201, %v2200, %v2127
        %v2238 = vpack.c.bf16 %v2203, %v2202
        %v2239 = vpack.c.bf16 %v2205, %v2204
        %v2240 = vpack.c.bf16 %v2207, %v2206
        %v2241 = vpack.c.bf16 %v2209, %v2208
        %v2242 = vpack.c.bf16 %v2211, %v2210
        %v2243 = vpack.c.bf16 %v2213, %v2212
        %v2244 = vpack.c.bf16 %v2215, %v2214
        %v2245 = vpack.c.bf16 %v2217, %v2216
        %v2246 = vpack.c.bf16 %v2219, %v2218
        %v2247 = vpack.c.bf16 %v2221, %v2220
        %v2248 = vpack.c.bf16 %v2223, %v2222
        %v2249 = vpack.c.bf16 %v2225, %v2224
        %v2250 = vpack.c.bf16 %v2227, %v2226
        %v2251 = vpack.c.bf16 %v2229, %v2228
        %v2252 = vpack.c.bf16 %v2231, %v2230
        %v2253 = vpack.c.bf16 %v2233, %v2232
        %v2254 = vpack.c.bf16 %v2235, %v2234
        %v2255 = vpack.c.bf16 %v2237, %v2236
        %vm2256 = vcmask 97280
        %2257 = vst.msk [vmem:[#allocation2] sm:$0xff] %vm2256, %v2238
        %2258 = vst.msk [vmem:[#allocation2 + $0x8] sm:$0xff] %vm2256, %v2239
        %2259 = vst.msk [vmem:[#allocation2 + $0x10] sm:$0xff] %vm2256, %v2240
        %2260 = vst.msk [vmem:[#allocation2 + $0x18] sm:$0xff] %vm2256, %v2241
        %2261 = vst.msk [vmem:[#allocation2 + $0x20] sm:$0xff] %vm2256, %v2242
        %2262 = vst.msk [vmem:[#allocation2 + $0x28] sm:$0xff] %vm2256, %v2243
        %2263 = vst.msk [vmem:[#allocation2 + $0x30] sm:$0xff] %vm2256, %v2244
        %2264 = vst.msk [vmem:[#allocation2 + $0x38] sm:$0xff] %vm2256, %v2245
        %2265 = vst.msk [vmem:[#allocation2 + $0x40] sm:$0xff] %vm2256, %v2246
        %2266 = vst.msk [vmem:[#allocation2 + $0x48] sm:$0xff] %vm2256, %v2247
        %2267 = vst.msk [vmem:[#allocation2 + $0x50] sm:$0xff] %vm2256, %v2248
        %2268 = vst.msk [vmem:[#allocation2 + $0x58] sm:$0xff] %vm2256, %v2249
        %2269 = vst.msk [vmem:[#allocation2 + $0x60] sm:$0xff] %vm2256, %v2250
        %2270 = vst.msk [vmem:[#allocation2 + $0x68] sm:$0xff] %vm2256, %v2251
        %2271 = vst.msk [vmem:[#allocation2 + $0x70] sm:$0xff] %vm2256, %v2252
        %2272 = vst.msk [vmem:[#allocation2 + $0x78] sm:$0xff] %vm2256, %v2253
        %2273 = vst.msk [vmem:[#allocation2 + $0x80] sm:$0xff] %vm2256, %v2254
        %2274 = vst.msk [vmem:[#allocation2 + $0x88] sm:$0xff] %vm2256, %v2255
        %v2275 = vld [vmem:[#allocation2] sm:$0xff]
        %v2276 = vld [vmem:[#allocation2 + $0x8] sm:$0xff]
        %v2277 = vld [vmem:[#allocation2 + $0x10] sm:$0xff]
        %v2278 = vld [vmem:[#allocation2 + $0x18] sm:$0xff]
        %v2279 = vld [vmem:[#allocation2 + $0x20] sm:$0xff]
        %v2280 = vld [vmem:[#allocation2 + $0x28] sm:$0xff]
        %v2281 = vld [vmem:[#allocation2 + $0x30] sm:$0xff]
        %v2282 = vld [vmem:[#allocation2 + $0x38] sm:$0xff]
        %v2283 = vld [vmem:[#allocation2 + $0x40] sm:$0xff]
        %v2284 = vld [vmem:[#allocation2 + $0x48] sm:$0xff]
        %v2285 = vld [vmem:[#allocation2 + $0x50] sm:$0xff]
        %v2286 = vld [vmem:[#allocation2 + $0x58] sm:$0xff]
        %v2287 = vld [vmem:[#allocation2 + $0x60] sm:$0xff]
        %v2288 = vld [vmem:[#allocation2 + $0x68] sm:$0xff]
        %v2289 = vld [vmem:[#allocation2 + $0x70] sm:$0xff]
        %v2290 = vld [vmem:[#allocation2 + $0x78] sm:$0xff]
        %v2291 = vld [vmem:[%s5] sm:$0xf]
        %v2292 = vld [vmem:[%s5 + $0x4] sm:$0x3]
        %v2293 = vld [vmem:[#allocation2 + $0x80] sm:$0xff]
        %s2294 = scalar_lea.vmem %s5, 8
        %v2295 = vld [vmem:[%s2294] sm:$0xf]
        %v2296 = vld [vmem:[%s2294 + $0x4] sm:$0x3]
        %v2299 = vunpack.c.l.b16 %v2295
        %v2300 = vunpack.c.l.b16 %v2296
        %v2301 = vpack.c.b16 %v2300, %v2299
        %v2303 = vsel %vm2256, %v2276, 0
        %v2306 = vsel %vm2256, %v2277, 0
        %v2309 = vsel %vm2256, %v2278, 0
        %v2312 = vsel %vm2256, %v2279, 0
        %v2315 = vsel %vm2256, %v2280, 0
        %v2318 = vsel %vm2256, %v2281, 0
        %v2321 = vsel %vm2256, %v2282, 0
        %v2324 = vsel %vm2256, %v2283, 0
        %v2327 = vsel %vm2256, %v2284, 0
        %v2330 = vsel %vm2256, %v2285, 0
        %v2333 = vsel %vm2256, %v2286, 0
        %v2336 = vsel %vm2256, %v2287, 0
        %v2339 = vsel %vm2256, %v2288, 0
        %v2342 = vsel %vm2256, %v2289, 0
        %v2345 = vsel %vm2256, %v2290, 0
        %v2348 = vsel %vm2256, %v2293, 0
        %vm2350 = vcmask 1045504
        %v2352 = vsel %vm2350, %v2301, 0
        %2354 = vmatprep.subr.bf16.mxu0 0
        %2355 = vmatpush1.bf16.msra.mxu0 %v2352
        %2356 = vmatprep.subr.bf16.mxu0 0
        %2357 = vmatpush1.bf16.msra.mxu0 0
        %2358 = vmatprep.subr.bf16.mxu0 0
        %2359 = vmatpush1.bf16.msra.mxu0 0
        %2360 = vmatprep.subr.bf16.mxu0 0
        %2361 = vmatpush1.bf16.msra.mxu0 0
        %2362 = vmatprep.subr.bf16.mxu0 0
        %2363 = vmatpush1.bf16.msra.mxu0 0
        %2364 = vmatprep.subr.bf16.mxu0 0
        %2365 = vmatpush1.bf16.msra.mxu0 0
        %2366 = vmatprep.subr.bf16.mxu0 0
        %2367 = vmatpush1.bf16.msra.mxu0 0
        %2368 = vmatprep.subr.bf16.mxu0 0
        %2369 = vmatpush1.bf16.msra.mxu0 0
        %2370 = vmatprep.subr.bf16.mxu0 0
        %2371 = vmatpush1.bf16.msra.mxu0 0
        %2372 = vmatprep.subr.bf16.mxu0 0
        %2373 = vmatpush1.bf16.msra.mxu0 0
        %2374 = vmatprep.subr.bf16.mxu0 0
        %2375 = vmatpush1.bf16.msra.mxu0 0
        %2376 = vmatprep.subr.bf16.mxu0 0
        %2377 = vmatpush1.bf16.msra.mxu0 0
        %2378 = vmatprep.subr.bf16.mxu0 0
        %2379 = vmatpush1.bf16.msra.mxu0 0
        %2380 = vmatprep.subr.bf16.mxu0 0
        %2381 = vmatpush1.bf16.msra.mxu0 0
        %2382 = vmatprep.subr.bf16.mxu0 0
        %2383 = vmatpush1.bf16.msra.mxu0 0
        %2384 = vmatprep.subr.bf16.mxu0 0
        %2385 = vmatpush1.bf16.msra.mxu0 0
        %2386 = vmatprep.mubr.bf16.mxu0 0
        %2387 = vmatmul.mubr.bf16.gmra.mrb[0].mxu0 %v2303
        %v2388 = vpop.f32.mrb[0].mxu0
        %v2389 = vadd.f32 0.0, %v2388
        %v2390 = vpop.f32.mrb[0].mxu0
        %v2391 = vpop.f32.mrb[0].mxu0
        %v2392 = vadd.f32 0.0, %v2391
        %v2393 = vpop.f32.mrb[0].mxu0
        %2394 = vmatprep.mubr.bf16.mxu0 0
        %2395 = vmatmul.mubr.bf16.gmra.mrb[0].mxu0 %v2306
        %v2396 = vpop.f32.mrb[0].mxu0
        %v2397 = vadd.f32 0.0, %v2396
        %v2398 = vpop.f32.mrb[0].mxu0
        %v2399 = vpop.f32.mrb[0].mxu0
        %v2400 = vadd.f32 0.0, %v2399
        %v2401 = vpop.f32.mrb[0].mxu0
        %2402 = vmatprep.mubr.bf16.mxu0 0
        %2403 = vmatmul.mubr.bf16.gmra.mrb[0].mxu0 %v2309
        %v2404 = vpop.f32.mrb[0].mxu0
        %v2405 = vadd.f32 0.0, %v2404
        %v2406 = vpop.f32.mrb[0].mxu0
        %v2407 = vpop.f32.mrb[0].mxu0
        %v2408 = vadd.f32 0.0, %v2407
        %v2409 = vpop.f32.mrb[0].mxu0
        %2410 = vmatprep.mubr.bf16.mxu0 0
        %2411 = vmatmul.mubr.bf16.gmra.mrb[0].mxu0 %v2312
        %v2412 = vpop.f32.mrb[0].mxu0
        %v2413 = vadd.f32 0.0, %v2412
        %v2414 = vpop.f32.mrb[0].mxu0
        %v2415 = vpop.f32.mrb[0].mxu0
        %v2416 = vadd.f32 0.0, %v2415
        %v2417 = vpop.f32.mrb[0].mxu0
        %2418 = vmatprep.mubr.bf16.mxu0 0
        %2419 = vmatmul.mubr.bf16.gmra.mrb[0].mxu0 %v2315
        %v2420 = vpop.f32.mrb[0].mxu0
        %v2421 = vadd.f32 0.0, %v2420
        %v2422 = vpop.f32.mrb[0].mxu0
        %v2423 = vpop.f32.mrb[0].mxu0
        %v2424 = vadd.f32 0.0, %v2423
        %v2425 = vpop.f32.mrb[0].mxu0
        %2426 = vmatprep.mubr.bf16.mxu0 0
        %2427 = vmatmul.mubr.bf16.gmra.mrb[0].mxu0 %v2318
        %v2428 = vpop.f32.mrb[0].mxu0
        %v2429 = vadd.f32 0.0, %v2428
        %v2430 = vpop.f32.mrb[0].mxu0
        %v2431 = vpop.f32.mrb[0].mxu0
        %v2432 = vadd.f32 0.0, %v2431
        %v2433 = vpop.f32.mrb[0].mxu0
        %2434 = vmatprep.mubr.bf16.mxu0 0
        %2435 = vmatmul.mubr.bf16.gmra.mrb[0].mxu0 %v2321
        %v2436 = vpop.f32.mrb[0].mxu0
        %v2437 = vadd.f32 0.0, %v2436
        %v2438 = vpop.f32.mrb[0].mxu0
        %v2439 = vpop.f32.mrb[0].mxu0
        %v2440 = vadd.f32 0.0, %v2439
        %v2441 = vpop.f32.mrb[0].mxu0
        %2442 = vmatprep.mubr.bf16.mxu0 0
        %2443 = vmatmul.mubr.bf16.gmra.mrb[0].mxu0 %v2324
        %v2444 = vpop.f32.mrb[0].mxu0
        %v2445 = vadd.f32 0.0, %v2444
        %v2446 = vpop.f32.mrb[0].mxu0
        %v2447 = vpop.f32.mrb[0].mxu0
        %v2448 = vadd.f32 0.0, %v2447
        %v2449 = vpop.f32.mrb[0].mxu0
        %2450 = vmatprep.mubr.bf16.mxu0 0
        %2451 = vmatmul.mubr.bf16.gmra.mrb[0].mxu0 %v2327
        %v2452 = vpop.f32.mrb[0].mxu0
        %v2453 = vadd.f32 0.0, %v2452
        %v2454 = vpop.f32.mrb[0].mxu0
        %v2455 = vpop.f32.mrb[0].mxu0
        %v2456 = vadd.f32 0.0, %v2455
        %v2457 = vpop.f32.mrb[0].mxu0
        %2458 = vmatprep.mubr.bf16.mxu0 0
        %2459 = vmatmul.mubr.bf16.gmra.mrb[0].mxu0 %v2330
        %v2460 = vpop.f32.mrb[0].mxu0
        %v2461 = vadd.f32 0.0, %v2460
        %v2462 = vpop.f32.mrb[0].mxu0
        %v2463 = vpop.f32.mrb[0].mxu0
        %v2464 = vadd.f32 0.0, %v2463
        %v2465 = vpop.f32.mrb[0].mxu0
        %2466 = vmatprep.mubr.bf16.mxu0 0
        %2467 = vmatmul.mubr.bf16.gmra.mrb[0].mxu0 %v2333
        %v2468 = vpop.f32.mrb[0].mxu0
        %v2469 = vadd.f32 0.0, %v2468
        %v2470 = vpop.f32.mrb[0].mxu0
        %v2471 = vpop.f32.mrb[0].mxu0
        %v2472 = vadd.f32 0.0, %v2471
        %v2473 = vpop.f32.mrb[0].mxu0
        %2474 = vmatprep.mubr.bf16.mxu0 0
        %2475 = vmatmul.mubr.bf16.gmra.mrb[0].mxu0 %v2336
        %v2476 = vpop.f32.mrb[0].mxu0
        %v2477 = vadd.f32 0.0, %v2476
        %v2478 = vpop.f32.mrb[0].mxu0
        %v2479 = vpop.f32.mrb[0].mxu0
        %v2480 = vadd.f32 0.0, %v2479
        %v2481 = vpop.f32.mrb[0].mxu0
        %2482 = vmatprep.mubr.bf16.mxu0 0
        %2483 = vmatmul.mubr.bf16.gmra.mrb[0].mxu0 %v2339
        %v2484 = vpop.f32.mrb[0].mxu0
        %v2485 = vadd.f32 0.0, %v2484
        %v2486 = vpop.f32.mrb[0].mxu0
        %v2487 = vpop.f32.mrb[0].mxu0
        %v2488 = vadd.f32 0.0, %v2487
        %v2489 = vpop.f32.mrb[0].mxu0
        %2490 = vmatprep.mubr.bf16.mxu0 0
        %2491 = vmatmul.mubr.bf16.gmra.mrb[0].mxu0 %v2342
        %v2492 = vpop.f32.mrb[0].mxu0
        %v2493 = vadd.f32 0.0, %v2492
        %v2494 = vpop.f32.mrb[0].mxu0
        %v2495 = vpop.f32.mrb[0].mxu0
        %v2496 = vadd.f32 0.0, %v2495
        %v2497 = vpop.f32.mrb[0].mxu0
        %2498 = vmatprep.mubr.bf16.mxu0 0
        %2499 = vmatmul.mubr.bf16.gmra.mrb[0].mxu0 %v2345
        %v2500 = vpop.f32.mrb[0].mxu0
        %v2501 = vadd.f32 0.0, %v2500
        %v2502 = vpop.f32.mrb[0].mxu0
        %v2503 = vpop.f32.mrb[0].mxu0
        %v2504 = vadd.f32 0.0, %v2503
        %v2505 = vpop.f32.mrb[0].mxu0
        %2506 = vmatprep.mubr.bf16.mxu0 0
        %2507 = vmatmul.mubr.bf16.gmra.mrb[0].mxu0 %v2348
        %v2508 = vpop.f32.mrb[0].mxu0
        %v2509 = vadd.f32 0.0, %v2508
        %v2510 = vpop.f32.mrb[0].mxu0
        %v2511 = vpop.f32.mrb[0].mxu0
        %v2512 = vadd.f32 0.0, %v2511
        %v2513 = vpop.f32.mrb[0].mxu0
        %2514 = vdwg.mxu0
        %v2517 = vunpack.c.l.b16 %v2291
        %v2518 = vunpack.c.l.b16 %v2292
        %v2519 = vpack.c.b16 %v2518, %v2517
        %v2521 = vsel %vm2256, %v2275, 0
        %v2524 = vsel %vm2350, %v2519, 0
        %2526 = vmatprep.subr.bf16.mxu0 0
        %2527 = vmatpush1.bf16.msra.mxu0 %v2524
        %2528 = vmatprep.subr.bf16.mxu0 0
        %2529 = vmatpush1.bf16.msra.mxu0 0
        %2530 = vmatprep.subr.bf16.mxu0 0
        %2531 = vmatpush1.bf16.msra.mxu0 0
        %2532 = vmatprep.subr.bf16.mxu0 0
        %2533 = vmatpush1.bf16.msra.mxu0 0
        %2534 = vmatprep.subr.bf16.mxu0 0
        %2535 = vmatpush1.bf16.msra.mxu0 0
        %2536 = vmatprep.subr.bf16.mxu0 0
        %2537 = vmatpush1.bf16.msra.mxu0 0
        %2538 = vmatprep.subr.bf16.mxu0 0
        %2539 = vmatpush1.bf16.msra.mxu0 0
        %2540 = vmatprep.subr.bf16.mxu0 0
        %2541 = vmatpush1.bf16.msra.mxu0 0
        %2542 = vmatprep.subr.bf16.mxu0 0
        %2543 = vmatpush1.bf16.msra.mxu0 0
        %2544 = vmatprep.subr.bf16.mxu0 0
        %2545 = vmatpush1.bf16.msra.mxu0 0
        %2546 = vmatprep.subr.bf16.mxu0 0
        %2547 = vmatpush1.bf16.msra.mxu0 0
        %2548 = vmatprep.subr.bf16.mxu0 0
        %2549 = vmatpush1.bf16.msra.mxu0 0
        %2550 = vmatprep.subr.bf16.mxu0 0
        %2551 = vmatpush1.bf16.msra.mxu0 0
        %2552 = vmatprep.subr.bf16.mxu0 0
        %2553 = vmatpush1.bf16.msra.mxu0 0
        %2554 = vmatprep.subr.bf16.mxu0 0
        %2555 = vmatpush1.bf16.msra.mxu0 0
        %2556 = vmatprep.subr.bf16.mxu0 0
        %2557 = vmatpush1.bf16.msra.mxu0 0
        %2558 = vmatprep.mubr.bf16.mxu0 0
        %2559 = vmatmul.mubr.bf16.gmra.mrb[0].mxu0 %v2521
        %v2560 = vpop.f32.mrb[0].mxu0
        %v2561 = vadd.f32 %v2389, %v2560
        %v2562 = vpop.f32.mrb[0].mxu0
        %v2563 = vpop.f32.mrb[0].mxu0
        %v2564 = vadd.f32 %v2392, %v2563
        %v2565 = vpop.f32.mrb[0].mxu0
        %2566 = vmatprep.mubr.bf16.mxu0 0
        %2567 = vmatmul.mubr.bf16.gmra.mrb[0].mxu0 %v2303
        %v2568 = vpop.f32.mrb[0].mxu0
        %v2569 = vadd.f32 %v2397, %v2568
        %v2570 = vpop.f32.mrb[0].mxu0
        %v2571 = vpop.f32.mrb[0].mxu0
        %v2572 = vadd.f32 %v2400, %v2571
        %v2573 = vpop.f32.mrb[0].mxu0
        %2574 = vmatprep.mubr.bf16.mxu0 0
        %2575 = vmatmul.mubr.bf16.gmra.mrb[0].mxu0 %v2306
        %v2576 = vpop.f32.mrb[0].mxu0
        %v2577 = vadd.f32 %v2405, %v2576
        %v2578 = vpop.f32.mrb[0].mxu0
        %v2579 = vpop.f32.mrb[0].mxu0
        %v2580 = vadd.f32 %v2408, %v2579
        %v2581 = vpop.f32.mrb[0].mxu0
        %2582 = vmatprep.mubr.bf16.mxu0 0
        %2583 = vmatmul.mubr.bf16.gmra.mrb[0].mxu0 %v2309
        %v2584 = vpop.f32.mrb[0].mxu0
        %v2585 = vadd.f32 %v2413, %v2584
        %v2586 = vpop.f32.mrb[0].mxu0
        %v2587 = vpop.f32.mrb[0].mxu0
        %v2588 = vadd.f32 %v2416, %v2587
        %v2589 = vpop.f32.mrb[0].mxu0
        %2590 = vmatprep.mubr.bf16.mxu0 0
        %2591 = vmatmul.mubr.bf16.gmra.mrb[0].mxu0 %v2312
        %v2592 = vpop.f32.mrb[0].mxu0
        %v2593 = vadd.f32 %v2421, %v2592
        %v2594 = vpop.f32.mrb[0].mxu0
        %v2595 = vpop.f32.mrb[0].mxu0
        %v2596 = vadd.f32 %v2424, %v2595
        %v2597 = vpop.f32.mrb[0].mxu0
        %2598 = vmatprep.mubr.bf16.mxu0 0
        %2599 = vmatmul.mubr.bf16.gmra.mrb[0].mxu0 %v2315
        %v2600 = vpop.f32.mrb[0].mxu0
        %v2601 = vadd.f32 %v2429, %v2600
        %v2602 = vpop.f32.mrb[0].mxu0
        %v2603 = vpop.f32.mrb[0].mxu0
        %v2604 = vadd.f32 %v2432, %v2603
        %v2605 = vpop.f32.mrb[0].mxu0
        %2606 = vmatprep.mubr.bf16.mxu0 0
        %2607 = vmatmul.mubr.bf16.gmra.mrb[0].mxu0 %v2318
        %v2608 = vpop.f32.mrb[0].mxu0
        %v2609 = vadd.f32 %v2437, %v2608
        %v2610 = vpop.f32.mrb[0].mxu0
        %v2611 = vpop.f32.mrb[0].mxu0
        %v2612 = vadd.f32 %v2440, %v2611
        %v2613 = vpop.f32.mrb[0].mxu0
        %2614 = vmatprep.mubr.bf16.mxu0 0
        %2615 = vmatmul.mubr.bf16.gmra.mrb[0].mxu0 %v2321
        %v2616 = vpop.f32.mrb[0].mxu0
        %v2617 = vadd.f32 %v2445, %v2616
        %v2618 = vpop.f32.mrb[0].mxu0
        %v2619 = vpop.f32.mrb[0].mxu0
        %v2620 = vadd.f32 %v2448, %v2619
        %v2621 = vpop.f32.mrb[0].mxu0
        %2622 = vmatprep.mubr.bf16.mxu0 0
        %2623 = vmatmul.mubr.bf16.gmra.mrb[0].mxu0 %v2324
        %v2624 = vpop.f32.mrb[0].mxu0
        %v2625 = vadd.f32 %v2453, %v2624
        %v2626 = vpop.f32.mrb[0].mxu0
        %v2627 = vpop.f32.mrb[0].mxu0
        %v2628 = vadd.f32 %v2456, %v2627
        %v2629 = vpop.f32.mrb[0].mxu0
        %2630 = vmatprep.mubr.bf16.mxu0 0
        %2631 = vmatmul.mubr.bf16.gmra.mrb[0].mxu0 %v2327
        %v2632 = vpop.f32.mrb[0].mxu0
        %v2633 = vadd.f32 %v2461, %v2632
        %v2634 = vpop.f32.mrb[0].mxu0
        %v2635 = vpop.f32.mrb[0].mxu0
        %v2636 = vadd.f32 %v2464, %v2635
        %v2637 = vpop.f32.mrb[0].mxu0
        %2638 = vmatprep.mubr.bf16.mxu0 0
        %2639 = vmatmul.mubr.bf16.gmra.mrb[0].mxu0 %v2330
        %v2640 = vpop.f32.mrb[0].mxu0
        %v2641 = vadd.f32 %v2469, %v2640
        %v2642 = vpop.f32.mrb[0].mxu0
        %v2643 = vpop.f32.mrb[0].mxu0
        %v2644 = vadd.f32 %v2472, %v2643
        %v2645 = vpop.f32.mrb[0].mxu0
        %2646 = vmatprep.mubr.bf16.mxu0 0
        %2647 = vmatmul.mubr.bf16.gmra.mrb[0].mxu0 %v2333
        %v2648 = vpop.f32.mrb[0].mxu0
        %v2649 = vadd.f32 %v2477, %v2648
        %v2650 = vpop.f32.mrb[0].mxu0
        %v2651 = vpop.f32.mrb[0].mxu0
        %v2652 = vadd.f32 %v2480, %v2651
        %v2653 = vpop.f32.mrb[0].mxu0
        %2654 = vmatprep.mubr.bf16.mxu0 0
        %2655 = vmatmul.mubr.bf16.gmra.mrb[0].mxu0 %v2336
        %v2656 = vpop.f32.mrb[0].mxu0
        %v2657 = vadd.f32 %v2485, %v2656
        %v2658 = vpop.f32.mrb[0].mxu0
        %v2659 = vpop.f32.mrb[0].mxu0
        %v2660 = vadd.f32 %v2488, %v2659
        %v2661 = vpop.f32.mrb[0].mxu0
        %2662 = vmatprep.mubr.bf16.mxu0 0
        %2663 = vmatmul.mubr.bf16.gmra.mrb[0].mxu0 %v2339
        %v2664 = vpop.f32.mrb[0].mxu0
        %v2665 = vadd.f32 %v2493, %v2664
        %v2666 = vpop.f32.mrb[0].mxu0
        %v2667 = vpop.f32.mrb[0].mxu0
        %v2668 = vadd.f32 %v2496, %v2667
        %v2669 = vpop.f32.mrb[0].mxu0
        %2670 = vmatprep.mubr.bf16.mxu0 0
        %2671 = vmatmul.mubr.bf16.gmra.mrb[0].mxu0 %v2342
        %v2672 = vpop.f32.mrb[0].mxu0
        %v2673 = vadd.f32 %v2501, %v2672
        %v2674 = vpop.f32.mrb[0].mxu0
        %v2675 = vpop.f32.mrb[0].mxu0
        %v2676 = vadd.f32 %v2504, %v2675
        %v2677 = vpop.f32.mrb[0].mxu0
        %2678 = vmatprep.mubr.bf16.mxu0 0
        %2679 = vmatmul.mubr.bf16.gmra.mrb[0].mxu0 %v2345
        %v2680 = vpop.f32.mrb[0].mxu0
        %v2681 = vadd.f32 %v2509, %v2680
        %v2682 = vpop.f32.mrb[0].mxu0
        %v2683 = vpop.f32.mrb[0].mxu0
        %v2684 = vadd.f32 %v2512, %v2683
        %v2685 = vpop.f32.mrb[0].mxu0
        %2686 = vdwg.mxu0
        %v2687 = vld [vmem:[#allocation2 + $0x10] sm:$0xff]
        %v2688 = vld [vmem:[#allocation2 + $0x18] sm:$0xff]
        %v2689 = vld [vmem:[#allocation2 + $0x20] sm:$0xff]
        %v2690 = vld [vmem:[#allocation2 + $0x28] sm:$0xff]
        %v2691 = vld [vmem:[#allocation2 + $0x30] sm:$0xff]
        %v2692 = vld [vmem:[#allocation2 + $0x38] sm:$0xff]
        %v2693 = vld [vmem:[#allocation2 + $0x40] sm:$0xff]
        %v2694 = vld [vmem:[#allocation2 + $0x48] sm:$0xff]
        %v2695 = vld [vmem:[#allocation2 + $0x50] sm:$0xff]
        %v2696 = vld [vmem:[#allocation2 + $0x58] sm:$0xff]
        %v2697 = vld [vmem:[#allocation2 + $0x60] sm:$0xff]
        %v2698 = vld [vmem:[#allocation2 + $0x68] sm:$0xff]
        %v2699 = vld [vmem:[#allocation2 + $0x70] sm:$0xff]
        %v2700 = vld [vmem:[#allocation2 + $0x78] sm:$0xff]
        %v2701 = vld [vmem:[#allocation2 + $0x80] sm:$0xff]
        %v2702 = vld [vmem:[#allocation2 + $0x88] sm:$0xff]
        %s2703 = scalar_lea.vmem %s5, 16
        %v2704 = vld [vmem:[%s2703] sm:$0xf]
        %v2705 = vld [vmem:[%s2703 + $0x4] sm:$0x3]
        %v2708 = vunpack.c.l.b16 %v2704
        %v2709 = vunpack.c.l.b16 %v2705
        %v2710 = vpack.c.b16 %v2709, %v2708
        %v2712 = vsel %vm2256, %v2687, 0
        %v2715 = vsel %vm2256, %v2688, 0
        %v2718 = vsel %vm2256, %v2689, 0
        %v2721 = vsel %vm2256, %v2690, 0
        %v2724 = vsel %vm2256, %v2691, 0
        %v2727 = vsel %vm2256, %v2692, 0
        %v2730 = vsel %vm2256, %v2693, 0
        %v2733 = vsel %vm2256, %v2694, 0
        %v2736 = vsel %vm2256, %v2695, 0
        %v2739 = vsel %vm2256, %v2696, 0
        %v2742 = vsel %vm2256, %v2697, 0
        %v2745 = vsel %vm2256, %v2698, 0
        %v2748 = vsel %vm2256, %v2699, 0
        %v2751 = vsel %vm2256, %v2700, 0
        %v2754 = vsel %vm2256, %v2701, 0
        %v2757 = vsel %vm2256, %v2702, 0
        %v2760 = vsel %vm2350, %v2710, 0
        %2762 = vmatprep.subr.bf16.mxu0 0
        %2763 = vmatpush1.bf16.msra.mxu0 %v2760
        %2764 = vmatprep.subr.bf16.mxu0 0
        %2765 = vmatpush1.bf16.msra.mxu0 0
        %2766 = vmatprep.subr.bf16.mxu0 0
        %2767 = vmatpush1.bf16.msra.mxu0 0
        %2768 = vmatprep.subr.bf16.mxu0 0
        %2769 = vmatpush1.bf16.msra.mxu0 0
        %2770 = vmatprep.subr.bf16.mxu0 0
        %2771 = vmatpush1.bf16.msra.mxu0 0
        %2772 = vmatprep.subr.bf16.mxu0 0
        %2773 = vmatpush1.bf16.msra.mxu0 0
        %2774 = vmatprep.subr.bf16.mxu0 0
        %2775 = vmatpush1.bf16.msra.mxu0 0
        %2776 = vmatprep.subr.bf16.mxu0 0
        %2777 = vmatpush1.bf16.msra.mxu0 0
        %2778 = vmatprep.subr.bf16.mxu0 0
        %2779 = vmatpush1.bf16.msra.mxu0 0
        %2780 = vmatprep.subr.bf16.mxu0 0
        %2781 = vmatpush1.bf16.msra.mxu0 0
        %2782 = vmatprep.subr.bf16.mxu0 0
        %2783 = vmatpush1.bf16.msra.mxu0 0
        %2784 = vmatprep.subr.bf16.mxu0 0
        %2785 = vmatpush1.bf16.msra.mxu0 0
        %2786 = vmatprep.subr.bf16.mxu0 0
        %2787 = vmatpush1.bf16.msra.mxu0 0
        %2788 = vmatprep.subr.bf16.mxu0 0
        %2789 = vmatpush1.bf16.msra.mxu0 0
        %2790 = vmatprep.subr.bf16.mxu0 0
        %2791 = vmatpush1.bf16.msra.mxu0 0
        %2792 = vmatprep.subr.bf16.mxu0 0
        %2793 = vmatpush1.bf16.msra.mxu0 0
        %2794 = vmatprep.mubr.bf16.mxu0 0
        %2795 = vmatmul.mubr.bf16.gmra.mrb[0].mxu0 %v2712
        %v2796 = vpop.f32.mrb[0].mxu0
        %v2797 = vadd.f32 0.0, %v2796
        %v2798 = vpop.f32.mrb[0].mxu0
        %v2799 = vpop.f32.mrb[0].mxu0
        %v2800 = vadd.f32 0.0, %v2799
        %v2801 = vpop.f32.mrb[0].mxu0
        %2802 = vmatprep.mubr.bf16.mxu0 0
        %2803 = vmatmul.mubr.bf16.gmra.mrb[0].mxu0 %v2715
        %v2804 = vpop.f32.mrb[0].mxu0
        %v2805 = vadd.f32 0.0, %v2804
        %v2806 = vpop.f32.mrb[0].mxu0
        %v2807 = vpop.f32.mrb[0].mxu0
        %v2808 = vadd.f32 0.0, %v2807
        %v2809 = vpop.f32.mrb[0].mxu0
        %2810 = vmatprep.mubr.bf16.mxu0 0
        %2811 = vmatmul.mubr.bf16.gmra.mrb[0].mxu0 %v2718
        %v2812 = vpop.f32.mrb[0].mxu0
        %v2813 = vadd.f32 0.0, %v2812
        %v2814 = vpop.f32.mrb[0].mxu0
        %v2815 = vpop.f32.mrb[0].mxu0
        %v2816 = vadd.f32 0.0, %v2815
        %v2817 = vpop.f32.mrb[0].mxu0
        %2818 = vmatprep.mubr.bf16.mxu0 0
        %2819 = vmatmul.mubr.bf16.gmra.mrb[0].mxu0 %v2721
        %v2820 = vpop.f32.mrb[0].mxu0
        %v2821 = vadd.f32 0.0, %v2820
        %v2822 = vpop.f32.mrb[0].mxu0
        %v2823 = vpop.f32.mrb[0].mxu0
        %v2824 = vadd.f32 0.0, %v2823
        %v2825 = vpop.f32.mrb[0].mxu0
        %2826 = vmatprep.mubr.bf16.mxu0 0
        %2827 = vmatmul.mubr.bf16.gmra.mrb[0].mxu0 %v2724
        %v2828 = vpop.f32.mrb[0].mxu0
        %v2829 = vadd.f32 0.0, %v2828
        %v2830 = vpop.f32.mrb[0].mxu0
        %v2831 = vpop.f32.mrb[0].mxu0
        %v2832 = vadd.f32 0.0, %v2831
        %v2833 = vpop.f32.mrb[0].mxu0
        %2834 = vmatprep.mubr.bf16.mxu0 0
        %2835 = vmatmul.mubr.bf16.gmra.mrb[0].mxu0 %v2727
        %v2836 = vpop.f32.mrb[0].mxu0
        %v2837 = vadd.f32 0.0, %v2836
        %v2838 = vpop.f32.mrb[0].mxu0
        %v2839 = vpop.f32.mrb[0].mxu0
        %v2840 = vadd.f32 0.0, %v2839
        %v2841 = vpop.f32.mrb[0].mxu0
        %2842 = vmatprep.mubr.bf16.mxu0 0
        %2843 = vmatmul.mubr.bf16.gmra.mrb[0].mxu0 %v2730
        %v2844 = vpop.f32.mrb[0].mxu0
        %v2845 = vadd.f32 0.0, %v2844
        %v2846 = vpop.f32.mrb[0].mxu0
        %v2847 = vpop.f32.mrb[0].mxu0
        %v2848 = vadd.f32 0.0, %v2847
        %v2849 = vpop.f32.mrb[0].mxu0
        %2850 = vmatprep.mubr.bf16.mxu0 0
        %2851 = vmatmul.mubr.bf16.gmra.mrb[0].mxu0 %v2733
        %v2852 = vpop.f32.mrb[0].mxu0
        %v2853 = vadd.f32 0.0, %v2852
        %v2854 = vpop.f32.mrb[0].mxu0
        %v2855 = vpop.f32.mrb[0].mxu0
        %v2856 = vadd.f32 0.0, %v2855
        %v2857 = vpop.f32.mrb[0].mxu0
        %2858 = vmatprep.mubr.bf16.mxu0 0
        %2859 = vmatmul.mubr.bf16.gmra.mrb[0].mxu0 %v2736
        %v2860 = vpop.f32.mrb[0].mxu0
        %v2861 = vadd.f32 0.0, %v2860
        %v2862 = vpop.f32.mrb[0].mxu0
        %v2863 = vpop.f32.mrb[0].mxu0
        %v2864 = vadd.f32 0.0, %v2863
        %v2865 = vpop.f32.mrb[0].mxu0
        %2866 = vmatprep.mubr.bf16.mxu0 0
        %2867 = vmatmul.mubr.bf16.gmra.mrb[0].mxu0 %v2739
        %v2868 = vpop.f32.mrb[0].mxu0
        %v2869 = vadd.f32 0.0, %v2868
        %v2870 = vpop.f32.mrb[0].mxu0
        %v2871 = vpop.f32.mrb[0].mxu0
        %v2872 = vadd.f32 0.0, %v2871
        %v2873 = vpop.f32.mrb[0].mxu0
        %2874 = vmatprep.mubr.bf16.mxu0 0
        %2875 = vmatmul.mubr.bf16.gmra.mrb[0].mxu0 %v2742
        %v2876 = vpop.f32.mrb[0].mxu0
        %v2877 = vadd.f32 0.0, %v2876
        %v2878 = vpop.f32.mrb[0].mxu0
        %v2879 = vpop.f32.mrb[0].mxu0
        %v2880 = vadd.f32 0.0, %v2879
        %v2881 = vpop.f32.mrb[0].mxu0
        %2882 = vmatprep.mubr.bf16.mxu0 0
        %2883 = vmatmul.mubr.bf16.gmra.mrb[0].mxu0 %v2745
        %v2884 = vpop.f32.mrb[0].mxu0
        %v2885 = vadd.f32 0.0, %v2884
        %v2886 = vpop.f32.mrb[0].mxu0
        %v2887 = vpop.f32.mrb[0].mxu0
        %v2888 = vadd.f32 0.0, %v2887
        %v2889 = vpop.f32.mrb[0].mxu0
        %2890 = vmatprep.mubr.bf16.mxu0 0
        %2891 = vmatmul.mubr.bf16.gmra.mrb[0].mxu0 %v2748
        %v2892 = vpop.f32.mrb[0].mxu0
        %v2893 = vadd.f32 0.0, %v2892
        %v2894 = vpop.f32.mrb[0].mxu0
        %v2895 = vpop.f32.mrb[0].mxu0
        %v2896 = vadd.f32 0.0, %v2895
        %v2897 = vpop.f32.mrb[0].mxu0
        %2898 = vmatprep.mubr.bf16.mxu0 0
        %2899 = vmatmul.mubr.bf16.gmra.mrb[0].mxu0 %v2751
        %v2900 = vpop.f32.mrb[0].mxu0
        %v2901 = vadd.f32 0.0, %v2900
        %v2902 = vpop.f32.mrb[0].mxu0
        %v2903 = vpop.f32.mrb[0].mxu0
        %v2904 = vadd.f32 0.0, %v2903
        %v2905 = vpop.f32.mrb[0].mxu0
        %2906 = vmatprep.mubr.bf16.mxu0 0
        %2907 = vmatmul.mubr.bf16.gmra.mrb[0].mxu0 %v2754
        %v2908 = vpop.f32.mrb[0].mxu0
        %v2909 = vadd.f32 0.0, %v2908
        %v2910 = vpop.f32.mrb[0].mxu0
        %v2911 = vpop.f32.mrb[0].mxu0
        %v2912 = vadd.f32 0.0, %v2911
        %v2913 = vpop.f32.mrb[0].mxu0
        %2914 = vmatprep.mubr.bf16.mxu0 0
        %2915 = vmatmul.mubr.bf16.gmra.mrb[0].mxu0 %v2757
        %v2916 = vpop.f32.mrb[0].mxu0
        %v2917 = vadd.f32 0.0, %v2916
        %v2918 = vpop.f32.mrb[0].mxu0
        %v2919 = vpop.f32.mrb[0].mxu0
        %v2920 = vadd.f32 0.0, %v2919
        %v2921 = vpop.f32.mrb[0].mxu0
        %2922 = vdwg.mxu0
        %v2923 = vadd.f32 %v2561, %v2797
        %v2924 = vadd.f32 %v2564, %v2800
        %v2925 = vadd.f32 %v2569, %v2805
        %v2926 = vadd.f32 %v2572, %v2808
        %v2927 = vadd.f32 %v2577, %v2813
        %v2928 = vadd.f32 %v2580, %v2816
        %v2929 = vadd.f32 %v2585, %v2821
        %v2930 = vadd.f32 %v2588, %v2824
        %v2931 = vadd.f32 %v2593, %v2829
        %v2932 = vadd.f32 %v2596, %v2832
        %v2933 = vadd.f32 %v2601, %v2837
        %v2934 = vadd.f32 %v2604, %v2840
        %v2935 = vadd.f32 %v2609, %v2845
        %v2936 = vadd.f32 %v2612, %v2848
        %v2937 = vadd.f32 %v2617, %v2853
        %v2938 = vadd.f32 %v2620, %v2856
        %v2939 = vadd.f32 %v2625, %v2861
        %v2940 = vadd.f32 %v2628, %v2864
        %v2941 = vadd.f32 %v2633, %v2869
        %v2942 = vadd.f32 %v2636, %v2872
        %v2943 = vadd.f32 %v2641, %v2877
        %v2944 = vadd.f32 %v2644, %v2880
        %v2945 = vadd.f32 %v2649, %v2885
        %v2946 = vadd.f32 %v2652, %v2888
        %v2947 = vadd.f32 %v2657, %v2893
        %v2948 = vadd.f32 %v2660, %v2896
        %v2949 = vadd.f32 %v2665, %v2901
        %v2950 = vadd.f32 %v2668, %v2904
        %v2951 = vadd.f32 %v2673, %v2909
        %v2952 = vadd.f32 %v2676, %v2912
        %v2953 = vadd.f32 %v2681, %v2917
        %v2954 = vadd.f32 %v2684, %v2920
        %v2955 = vld [vmem:[%s6] sm:$0x1]
        %v2957 = vlaneseq
        %v2958 = vshrl.u32 %v2957, 7
        %v2959 = vsub.s32 0, %v2958
        %v2960 = vrot.slane %v2955, %v2959
        %v2962 = vadd.f32 %v2923, %v2960
        %v2963 = vadd.f32 %v2924, %v2960
        %v2964 = vadd.f32 %v2925, %v2960
        %v2965 = vadd.f32 %v2926, %v2960
        %v2966 = vadd.f32 %v2927, %v2960
        %v2967 = vadd.f32 %v2928, %v2960
        %v2968 = vadd.f32 %v2929, %v2960
        %v2969 = vadd.f32 %v2930, %v2960
        %v2970 = vadd.f32 %v2931, %v2960
        %v2971 = vadd.f32 %v2932, %v2960
        %v2972 = vadd.f32 %v2933, %v2960
        %v2973 = vadd.f32 %v2934, %v2960
        %v2974 = vadd.f32 %v2935, %v2960
        %v2975 = vadd.f32 %v2936, %v2960
        %v2976 = vadd.f32 %v2937, %v2960
        %v2977 = vadd.f32 %v2938, %v2960
        %v2978 = vadd.f32 %v2939, %v2960
        %v2979 = vadd.f32 %v2940, %v2960
        %v2980 = vadd.f32 %v2941, %v2960
        %v2981 = vadd.f32 %v2942, %v2960
        %v2982 = vadd.f32 %v2943, %v2960
        %v2983 = vadd.f32 %v2944, %v2960
        %v2984 = vadd.f32 %v2945, %v2960
        %v2985 = vadd.f32 %v2946, %v2960
        %v2986 = vadd.f32 %v2947, %v2960
        %v2987 = vadd.f32 %v2948, %v2960
        %v2988 = vadd.f32 %v2949, %v2960
        %v2989 = vadd.f32 %v2950, %v2960
        %v2990 = vadd.f32 %v2951, %v2960
        %v2991 = vadd.f32 %v2952, %v2960
        %v2992 = vadd.f32 %v2953, %v2960
        %v2993 = vadd.f32 %v2954, %v2960
        %v2994 = vmax.f32 %v2962, 0.0
        %v2995 = vmax.f32 %v2963, 0.0
        %v2996 = vmax.f32 %v2964, 0.0
        %v2997 = vmax.f32 %v2965, 0.0
        %v2998 = vmax.f32 %v2966, 0.0
        %v2999 = vmax.f32 %v2967, 0.0
        %v3000 = vmax.f32 %v2968, 0.0
        %v3001 = vmax.f32 %v2969, 0.0
        %v3002 = vmax.f32 %v2970, 0.0
        %v3003 = vmax.f32 %v2971, 0.0
        %v3004 = vmax.f32 %v2972, 0.0
        %v3005 = vmax.f32 %v2973, 0.0
        %v3006 = vmax.f32 %v2974, 0.0
        %v3007 = vmax.f32 %v2975, 0.0
        %v3008 = vmax.f32 %v2976, 0.0
        %v3009 = vmax.f32 %v2977, 0.0
        %v3010 = vmax.f32 %v2978, 0.0
        %v3011 = vmax.f32 %v2979, 0.0
        %v3012 = vmax.f32 %v2980, 0.0
        %v3013 = vmax.f32 %v2981, 0.0
        %v3014 = vmax.f32 %v2982, 0.0
        %v3015 = vmax.f32 %v2983, 0.0
        %v3016 = vmax.f32 %v2984, 0.0
        %v3017 = vmax.f32 %v2985, 0.0
        %v3018 = vmax.f32 %v2986, 0.0
        %v3019 = vmax.f32 %v2987, 0.0
        %v3020 = vmax.f32 %v2988, 0.0
        %v3021 = vmax.f32 %v2989, 0.0
        %v3022 = vmax.f32 %v2990, 0.0
        %v3023 = vmax.f32 %v2991, 0.0
        %v3024 = vmax.f32 %v2992, 0.0
        %v3025 = vmax.f32 %v2993, 0.0
        %v3026 = vld [vmem:[%s416] sm:$0xff]
        %v3027 = vld [vmem:[%s416 + $0x8] sm:$0xff]
        %v3028 = vld [vmem:[%s416 + $0x10] sm:$0xff]
        %v3029 = vld [vmem:[%s416 + $0x18] sm:$0xff]
        %v3030 = vld [vmem:[%s416 + $0x20] sm:$0xff]
        %v3031 = vld [vmem:[%s416 + $0x28] sm:$0xff]
        %v3032 = vld [vmem:[%s416 + $0x30] sm:$0xff]
        %v3033 = vld [vmem:[%s416 + $0x38] sm:$0xff]
        %v3034 = vld [vmem:[%s416 + $0x40] sm:$0xff]
        %v3035 = vld [vmem:[%s416 + $0x48] sm:$0xff]
        %v3036 = vld [vmem:[%s416 + $0x50] sm:$0xff]
        %v3037 = vld [vmem:[%s416 + $0x58] sm:$0xff]
        %v3038 = vld [vmem:[%s416 + $0x60] sm:$0xff]
        %v3039 = vld [vmem:[%s416 + $0x68] sm:$0xff]
        %v3040 = vld [vmem:[%s416 + $0x70] sm:$0xff]
        %v3041 = vld [vmem:[%s416 + $0x78] sm:$0xff]
        %v3042 = vld [vmem:[%s416 + $0x80] sm:$0xff]
        %v3043 = vld [vmem:[%s416 + $0x88] sm:$0xff]
        %v3044 = vld [vmem:[%s416 + $0x90] sm:$0xff]
        %v3045 = vld [vmem:[%s416 + $0x98] sm:$0xff]
        %v3046 = vld [vmem:[%s416 + $0xa0] sm:$0xff]
        %v3047 = vld [vmem:[%s416 + $0xa8] sm:$0xff]
        %v3048 = vld [vmem:[%s416 + $0xb0] sm:$0xff]
        %v3049 = vld [vmem:[%s416 + $0xb8] sm:$0xff]
        %v3050 = vld [vmem:[%s416 + $0xc0] sm:$0xff]
        %v3051 = vld [vmem:[%s416 + $0xc8] sm:$0xff]
        %v3052 = vld [vmem:[%s416 + $0xd0] sm:$0xff]
        %v3053 = vld [vmem:[%s416 + $0xd8] sm:$0xff]
        %v3054 = vld [vmem:[%s416 + $0xe0] sm:$0xff]
        %v3055 = vld [vmem:[%s416 + $0xe8] sm:$0xff]
        %v3056 = vld [vmem:[%s416 + $0xf0] sm:$0xff]
        %v3057 = vld [vmem:[%s416 + $0xf8] sm:$0xff]
        %v3058 = vpack.c.bf16 %v2995, %v2994
        %v3059 = vpack.c.bf16 %v2997, %v2996
        %v3060 = vpack.c.bf16 %v2999, %v2998
        %v3061 = vpack.c.bf16 %v3001, %v3000
        %v3062 = vpack.c.bf16 %v3003, %v3002
        %v3063 = vpack.c.bf16 %v3005, %v3004
        %v3064 = vpack.c.bf16 %v3007, %v3006
        %v3065 = vpack.c.bf16 %v3009, %v3008
        %v3066 = vpack.c.bf16 %v3011, %v3010
        %v3067 = vpack.c.bf16 %v3013, %v3012
        %v3068 = vpack.c.bf16 %v3015, %v3014
        %v3069 = vpack.c.bf16 %v3017, %v3016
        %v3070 = vpack.c.bf16 %v3019, %v3018
        %v3071 = vpack.c.bf16 %v3021, %v3020
        %v3072 = vpack.c.bf16 %v3023, %v3022
        %v3073 = vpack.c.bf16 %v3025, %v3024
        %v3074 = vld [vmem:[%s7] sm:$0x3]
        %v3075 = vld [vmem:[%s8] sm:$0x1]
        %v3077 = vlaneseq
        %v3078 = vshrl.u32 %v3077, 7
        %v3079 = vsub.s32 0, %v3078
        %v3080 = vrot.slane %v3075, %v3079
        %v3083 = vsel %vm2164, %v3058, 0
        %v3086 = vsel %vm2164, %v3059, 0
        %v3089 = vsel %vm2164, %v3060, 0
        %v3092 = vsel %vm2164, %v3061, 0
        %v3095 = vsel %vm2164, %v3062, 0
        %v3098 = vsel %vm2164, %v3063, 0
        %v3101 = vsel %vm2164, %v3064, 0
        %v3104 = vsel %vm2164, %v3065, 0
        %v3107 = vsel %vm2164, %v3066, 0
        %v3110 = vsel %vm2164, %v3067, 0
        %v3113 = vsel %vm2164, %v3068, 0
        %v3116 = vsel %vm2164, %v3069, 0
        %v3119 = vsel %vm2164, %v3070, 0
        %v3122 = vsel %vm2164, %v3071, 0
        %v3125 = vsel %vm2164, %v3072, 0
        %v3128 = vsel %vm2164, %v3073, 0
        %vm3130 = vcmask 1041408
        %v3132 = vsel %vm3130, %v3074, 0
        %3134 = vmatprep.subr.bf16.mxu0 0
        %3135 = vmatpush1.bf16.msra.mxu0 %v3132
        %3136 = vmatprep.subr.bf16.mxu0 0
        %3137 = vmatpush1.bf16.msra.mxu0 0
        %3138 = vmatprep.subr.bf16.mxu0 0
        %3139 = vmatpush1.bf16.msra.mxu0 0
        %3140 = vmatprep.subr.bf16.mxu0 0
        %3141 = vmatpush1.bf16.msra.mxu0 0
        %3142 = vmatprep.subr.bf16.mxu0 0
        %3143 = vmatpush1.bf16.msra.mxu0 0
        %3144 = vmatprep.subr.bf16.mxu0 0
        %3145 = vmatpush1.bf16.msra.mxu0 0
        %3146 = vmatprep.subr.bf16.mxu0 0
        %3147 = vmatpush1.bf16.msra.mxu0 0
        %3148 = vmatprep.subr.bf16.mxu0 0
        %3149 = vmatpush1.bf16.msra.mxu0 0
        %3150 = vmatprep.subr.bf16.mxu0 0
        %3151 = vmatpush1.bf16.msra.mxu0 0
        %3152 = vmatprep.subr.bf16.mxu0 0
        %3153 = vmatpush1.bf16.msra.mxu0 0
        %3154 = vmatprep.subr.bf16.mxu0 0
        %3155 = vmatpush1.bf16.msra.mxu0 0
        %3156 = vmatprep.subr.bf16.mxu0 0
        %3157 = vmatpush1.bf16.msra.mxu0 0
        %3158 = vmatprep.subr.bf16.mxu0 0
        %3159 = vmatpush1.bf16.msra.mxu0 0
        %3160 = vmatprep.subr.bf16.mxu0 0
        %3161 = vmatpush1.bf16.msra.mxu0 0
        %3162 = vmatprep.subr.bf16.mxu0 0
        %3163 = vmatpush1.bf16.msra.mxu0 0
        %3164 = vmatprep.subr.bf16.mxu0 0
        %3165 = vmatpush1.bf16.msra.mxu0 0
        %3166 = vmatprep.mubr.bf16.mxu0 0
        %3167 = vmatmul.mubr.bf16.gmra.mrb[0].mxu0 %v3083
        %v3168 = vpop.f32.mrb[0].mxu0
        %v3169 = vadd.f32 %v3080, %v3168
        %v3170 = vpop.f32.mrb[0].mxu0
        %v3171 = vpop.f32.mrb[0].mxu0
        %v3172 = vadd.f32 %v3080, %v3171
        %v3173 = vpop.f32.mrb[0].mxu0
        %3174 = vmatprep.mubr.bf16.mxu0 0
        %3175 = vmatmul.mubr.bf16.gmra.mrb[0].mxu0 %v3086
        %v3176 = vpop.f32.mrb[0].mxu0
        %v3177 = vadd.f32 %v3080, %v3176
        %v3178 = vpop.f32.mrb[0].mxu0
        %v3179 = vpop.f32.mrb[0].mxu0
        %v3180 = vadd.f32 %v3080, %v3179
        %v3181 = vpop.f32.mrb[0].mxu0
        %3182 = vmatprep.mubr.bf16.mxu0 0
        %3183 = vmatmul.mubr.bf16.gmra.mrb[0].mxu0 %v3089
        %v3184 = vpop.f32.mrb[0].mxu0
        %v3185 = vadd.f32 %v3080, %v3184
        %v3186 = vpop.f32.mrb[0].mxu0
        %v3187 = vpop.f32.mrb[0].mxu0
        %v3188 = vadd.f32 %v3080, %v3187
        %v3189 = vpop.f32.mrb[0].mxu0
        %3190 = vmatprep.mubr.bf16.mxu0 0
        %3191 = vmatmul.mubr.bf16.gmra.mrb[0].mxu0 %v3092
        %v3192 = vpop.f32.mrb[0].mxu0
        %v3193 = vadd.f32 %v3080, %v3192
        %v3194 = vpop.f32.mrb[0].mxu0
        %v3195 = vpop.f32.mrb[0].mxu0
        %v3196 = vadd.f32 %v3080, %v3195
        %v3197 = vpop.f32.mrb[0].mxu0
        %3198 = vmatprep.mubr.bf16.mxu0 0
        %3199 = vmatmul.mubr.bf16.gmra.mrb[0].mxu0 %v3095
        %v3200 = vpop.f32.mrb[0].mxu0
        %v3201 = vadd.f32 %v3080, %v3200
        %v3202 = vpop.f32.mrb[0].mxu0
        %v3203 = vpop.f32.mrb[0].mxu0
        %v3204 = vadd.f32 %v3080, %v3203
        %v3205 = vpop.f32.mrb[0].mxu0
        %3206 = vmatprep.mubr.bf16.mxu0 0
        %3207 = vmatmul.mubr.bf16.gmra.mrb[0].mxu0 %v3098
        %v3208 = vpop.f32.mrb[0].mxu0
        %v3209 = vadd.f32 %v3080, %v3208
        %v3210 = vpop.f32.mrb[0].mxu0
        %v3211 = vpop.f32.mrb[0].mxu0
        %v3212 = vadd.f32 %v3080, %v3211
        %v3213 = vpop.f32.mrb[0].mxu0
        %3214 = vmatprep.mubr.bf16.mxu0 0
        %3215 = vmatmul.mubr.bf16.gmra.mrb[0].mxu0 %v3101
        %v3216 = vpop.f32.mrb[0].mxu0
        %v3217 = vadd.f32 %v3080, %v3216
        %v3218 = vpop.f32.mrb[0].mxu0
        %v3219 = vpop.f32.mrb[0].mxu0
        %v3220 = vadd.f32 %v3080, %v3219
        %v3221 = vpop.f32.mrb[0].mxu0
        %3222 = vmatprep.mubr.bf16.mxu0 0
        %3223 = vmatmul.mubr.bf16.gmra.mrb[0].mxu0 %v3104
        %v3224 = vpop.f32.mrb[0].mxu0
        %v3225 = vadd.f32 %v3080, %v3224
        %v3226 = vpop.f32.mrb[0].mxu0
        %v3227 = vpop.f32.mrb[0].mxu0
        %v3228 = vadd.f32 %v3080, %v3227
        %v3229 = vpop.f32.mrb[0].mxu0
        %3230 = vmatprep.mubr.bf16.mxu0 0
        %3231 = vmatmul.mubr.bf16.gmra.mrb[0].mxu0 %v3107
        %v3232 = vpop.f32.mrb[0].mxu0
        %v3233 = vadd.f32 %v3080, %v3232
        %v3234 = vpop.f32.mrb[0].mxu0
        %v3235 = vpop.f32.mrb[0].mxu0
        %v3236 = vadd.f32 %v3080, %v3235
        %v3237 = vpop.f32.mrb[0].mxu0
        %3238 = vmatprep.mubr.bf16.mxu0 0
        %3239 = vmatmul.mubr.bf16.gmra.mrb[0].mxu0 %v3110
        %v3240 = vpop.f32.mrb[0].mxu0
        %v3241 = vadd.f32 %v3080, %v3240
        %v3242 = vpop.f32.mrb[0].mxu0
        %v3243 = vpop.f32.mrb[0].mxu0
        %v3244 = vadd.f32 %v3080, %v3243
        %v3245 = vpop.f32.mrb[0].mxu0
        %3246 = vmatprep.mubr.bf16.mxu0 0
        %3247 = vmatmul.mubr.bf16.gmra.mrb[0].mxu0 %v3113
        %v3248 = vpop.f32.mrb[0].mxu0
        %v3249 = vadd.f32 %v3080, %v3248
        %v3250 = vpop.f32.mrb[0].mxu0
        %v3251 = vpop.f32.mrb[0].mxu0
        %v3252 = vadd.f32 %v3080, %v3251
        %v3253 = vpop.f32.mrb[0].mxu0
        %3254 = vmatprep.mubr.bf16.mxu0 0
        %3255 = vmatmul.mubr.bf16.gmra.mrb[0].mxu0 %v3116
        %v3256 = vpop.f32.mrb[0].mxu0
        %v3257 = vadd.f32 %v3080, %v3256
        %v3258 = vpop.f32.mrb[0].mxu0
        %v3259 = vpop.f32.mrb[0].mxu0
        %v3260 = vadd.f32 %v3080, %v3259
        %v3261 = vpop.f32.mrb[0].mxu0
        %3262 = vmatprep.mubr.bf16.mxu0 0
        %3263 = vmatmul.mubr.bf16.gmra.mrb[0].mxu0 %v3119
        %v3264 = vpop.f32.mrb[0].mxu0
        %v3265 = vadd.f32 %v3080, %v3264
        %v3266 = vpop.f32.mrb[0].mxu0
        %v3267 = vpop.f32.mrb[0].mxu0
        %v3268 = vadd.f32 %v3080, %v3267
        %v3269 = vpop.f32.mrb[0].mxu0
        %3270 = vmatprep.mubr.bf16.mxu0 0
        %3271 = vmatmul.mubr.bf16.gmra.mrb[0].mxu0 %v3122
        %v3272 = vpop.f32.mrb[0].mxu0
        %v3273 = vadd.f32 %v3080, %v3272
        %v3274 = vpop.f32.mrb[0].mxu0
        %v3275 = vpop.f32.mrb[0].mxu0
        %v3276 = vadd.f32 %v3080, %v3275
        %v3277 = vpop.f32.mrb[0].mxu0
        %3278 = vmatprep.mubr.bf16.mxu0 0
        %3279 = vmatmul.mubr.bf16.gmra.mrb[0].mxu0 %v3125
        %v3280 = vpop.f32.mrb[0].mxu0
        %v3281 = vadd.f32 %v3080, %v3280
        %v3282 = vpop.f32.mrb[0].mxu0
        %v3283 = vpop.f32.mrb[0].mxu0
        %v3284 = vadd.f32 %v3080, %v3283
        %v3285 = vpop.f32.mrb[0].mxu0
        %3286 = vmatprep.mubr.bf16.mxu0 0
        %3287 = vmatmul.mubr.bf16.gmra.mrb[0].mxu0 %v3128
        %v3288 = vpop.f32.mrb[0].mxu0
        %v3289 = vadd.f32 %v3080, %v3288
        %v3290 = vpop.f32.mrb[0].mxu0
        %v3291 = vpop.f32.mrb[0].mxu0
        %v3292 = vadd.f32 %v3080, %v3291
        %v3293 = vpop.f32.mrb[0].mxu0
        %3294 = vdwg.mxu0
        %v3295 = vadd.f32 %v3169, %v3026
        %v3296 = vadd.f32 %v3172, %v3027
        %v3297 = vadd.f32 %v3177, %v3028
        %v3298 = vadd.f32 %v3180, %v3029
        %v3299 = vadd.f32 %v3185, %v3030
        %v3300 = vadd.f32 %v3188, %v3031
        %v3301 = vadd.f32 %v3193, %v3032
        %v3302 = vadd.f32 %v3196, %v3033
        %v3303 = vadd.f32 %v3201, %v3034
        %v3304 = vadd.f32 %v3204, %v3035
        %v3305 = vadd.f32 %v3209, %v3036
        %v3306 = vadd.f32 %v3212, %v3037
        %v3307 = vadd.f32 %v3217, %v3038
        %v3308 = vadd.f32 %v3220, %v3039
        %v3309 = vadd.f32 %v3225, %v3040
        %v3310 = vadd.f32 %v3228, %v3041
        %v3311 = vadd.f32 %v3233, %v3042
        %v3312 = vadd.f32 %v3236, %v3043
        %v3313 = vadd.f32 %v3241, %v3044
        %v3314 = vadd.f32 %v3244, %v3045
        %v3315 = vadd.f32 %v3249, %v3046
        %v3316 = vadd.f32 %v3252, %v3047
        %v3317 = vadd.f32 %v3257, %v3048
        %v3318 = vadd.f32 %v3260, %v3049
        %v3319 = vadd.f32 %v3265, %v3050
        %v3320 = vadd.f32 %v3268, %v3051
        %v3321 = vadd.f32 %v3273, %v3052
        %v3322 = vadd.f32 %v3276, %v3053
        %v3323 = vadd.f32 %v3281, %v3054
        %v3324 = vadd.f32 %v3284, %v3055
        %v3325 = vadd.f32 %v3289, %v3056
        %v3326 = vadd.f32 %v3292, %v3057
        %v3327 = vmax.f32 %v3295, 0.0
        %v3328 = vmax.f32 %v3296, 0.0
        %v3329 = vmax.f32 %v3297, 0.0
        %v3330 = vmax.f32 %v3298, 0.0
        %v3331 = vmax.f32 %v3299, 0.0
        %v3332 = vmax.f32 %v3300, 0.0
        %v3333 = vmax.f32 %v3301, 0.0
        %v3334 = vmax.f32 %v3302, 0.0
        %v3335 = vmax.f32 %v3303, 0.0
        %v3336 = vmax.f32 %v3304, 0.0
        %v3337 = vmax.f32 %v3305, 0.0
        %v3338 = vmax.f32 %v3306, 0.0
        %v3339 = vmax.f32 %v3307, 0.0
        %v3340 = vmax.f32 %v3308, 0.0
        %v3341 = vmax.f32 %v3309, 0.0
        %v3342 = vmax.f32 %v3310, 0.0
        %v3343 = vmax.f32 %v3311, 0.0
        %v3344 = vmax.f32 %v3312, 0.0
        %v3345 = vmax.f32 %v3313, 0.0
        %v3346 = vmax.f32 %v3314, 0.0
        %v3347 = vmax.f32 %v3315, 0.0
        %v3348 = vmax.f32 %v3316, 0.0
        %v3349 = vmax.f32 %v3317, 0.0
        %v3350 = vmax.f32 %v3318, 0.0
        %v3351 = vmax.f32 %v3319, 0.0
        %v3352 = vmax.f32 %v3320, 0.0
        %v3353 = vmax.f32 %v3321, 0.0
        %v3354 = vmax.f32 %v3322, 0.0
        %v3355 = vmax.f32 %v3323, 0.0
        %v3356 = vmax.f32 %v3324, 0.0
        %v3357 = vmax.f32 %v3325, 0.0
        %v3358 = vmax.f32 %v3326, 0.0
        %3359 = vst.msk [vmem:[%s478] sm:$0xff] %vm509, %v3327
        %3360 = vst.msk [vmem:[%s478 + $0x8] sm:$0xff] %vm509, %v3328
        %3361 = vst.msk [vmem:[%s478 + $0x10] sm:$0xff] %vm509, %v3329
        %3362 = vst.msk [vmem:[%s478 + $0x18] sm:$0xff] %vm509, %v3330
        %3363 = vst.msk [vmem:[%s478 + $0x20] sm:$0xff] %vm509, %v3331
        %3364 = vst.msk [vmem:[%s478 + $0x28] sm:$0xff] %vm509, %v3332
        %3365 = vst.msk [vmem:[%s478 + $0x30] sm:$0xff] %vm509, %v3333
        %3366 = vst.msk [vmem:[%s478 + $0x38] sm:$0xff] %vm509, %v3334
        %3367 = vst.msk [vmem:[%s478 + $0x40] sm:$0xff] %vm509, %v3335
        %3368 = vst.msk [vmem:[%s478 + $0x48] sm:$0xff] %vm509, %v3336
        %3369 = vst.msk [vmem:[%s478 + $0x50] sm:$0xff] %vm509, %v3337
        %3370 = vst.msk [vmem:[%s478 + $0x58] sm:$0xff] %vm509, %v3338
        %3371 = vst.msk [vmem:[%s478 + $0x60] sm:$0xff] %vm509, %v3339
        %3372 = vst.msk [vmem:[%s478 + $0x68] sm:$0xff] %vm509, %v3340
        %3373 = vst.msk [vmem:[%s478 + $0x70] sm:$0xff] %vm509, %v3341
        %3374 = vst.msk [vmem:[%s478 + $0x78] sm:$0xff] %vm509, %v3342
        %3375 = vst.msk [vmem:[%s478 + $0x80] sm:$0xff] %vm509, %v3343
        %3376 = vst.msk [vmem:[%s478 + $0x88] sm:$0xff] %vm509, %v3344
        %3377 = vst.msk [vmem:[%s478 + $0x90] sm:$0xff] %vm509, %v3345
        %3378 = vst.msk [vmem:[%s478 + $0x98] sm:$0xff] %vm509, %v3346
        %3379 = vst.msk [vmem:[%s478 + $0xa0] sm:$0xff] %vm509, %v3347
        %3380 = vst.msk [vmem:[%s478 + $0xa8] sm:$0xff] %vm509, %v3348
        %3381 = vst.msk [vmem:[%s478 + $0xb0] sm:$0xff] %vm509, %v3349
        %3382 = vst.msk [vmem:[%s478 + $0xb8] sm:$0xff] %vm509, %v3350
        %3383 = vst.msk [vmem:[%s478 + $0xc0] sm:$0xff] %vm509, %v3351
        %3384 = vst.msk [vmem:[%s478 + $0xc8] sm:$0xff] %vm509, %v3352
        %3385 = vst.msk [vmem:[%s478 + $0xd0] sm:$0xff] %vm509, %v3353
        %3386 = vst.msk [vmem:[%s478 + $0xd8] sm:$0xff] %vm509, %v3354
        %3387 = vst.msk [vmem:[%s478 + $0xe0] sm:$0xff] %vm509, %v3355
        %3388 = vst.msk [vmem:[%s478 + $0xe8] sm:$0xff] %vm509, %v3356
        %3389 = vst.msk [vmem:[%s478 + $0xf0] sm:$0xff] %vm509, %v3357
        %3390 = vst.msk [vmem:[%s478 + $0xf8] sm:$0xff] %vm509, %v3358
        %s3391 = sand.u32 %s277, 1
        %s3392 = scalar_lea.sflag [#allocation5], %s3391
        %s3393 = sand.u32 %s277, 1
        %s3394 = smul.addr %s3393, 256
        %s3395 = scalar_lea.vmem [#allocation9], %s3394
        // Predicated region
        $region69: #{tpu_custom_call.1} parent=55 // pred_check
          %p3396 = pneg %p287
        $region70: #{tpu_custom_call.1} parent=55 // pred_check_branch
          %3398 = sbr.rel (%p3396) target = $region72
        $region71: #{tpu_custom_call.1} parent=55 // pred_region
          %s3399 = smul.u32 16, %s34
          %s3401 = ssub.s32 4096, 4096
          %3402 = vsyncadd %s3392, %s3401
          %s3403 = smul.addr %s3399, 2
          %s3404 = smul.addr %s33, 32
          %s3405 = sadd.s32 %s3403, %s3404
          %s3406 = smul.addr %s3405, 128
          %s3407 = scalar_lea.hbm %s9, %s3406
          %s3408 = sshll.u32 %s3395, 4
          %s3409 = int_to_ptr.vmem [resolvable:$true] %s3408
          %3414 = dma.vmem_to_hbm [thread:$0]  %s3409, 4096, %s3407, %s3392, 128, 128, 8
        $region72: #{tpu_custom_call.1} parent=55 // pred_fallthru
          _
      $region56: #{tpu_custom_call.1} parent=5 // pred_fallthru
        _
      %p3415 = scmp.le.s32.totalorder 2, %s24
      // Predicated region
      $region73: #{tpu_custom_call.1} parent=5 // pred_check
        %p3416 = pneg %p3415
      $region74: #{tpu_custom_call.1} parent=5 // pred_check_branch
        %3418 = sbr.rel (%p3416) target = $region76
      $region75: #{tpu_custom_call.1} parent=5 // pred_region
        %s3419 = ssub.s32 %s24, 2
        // Predicated region
        $region77: #{tpu_custom_call.1} parent=75 // pred_check
          %p3420 = pneg %p293
        $region78: #{tpu_custom_call.1} parent=75 // pred_check_branch
          %3422 = sbr.rel (%p3420) target = $region80
        $region79: #{tpu_custom_call.1} parent=75 // pred_region
          %s3423 = sand.u32 %s278, 1
          %s3424 = scalar_lea.sflag [#allocation5], %s3423
          %s3425 = sand.u32 %s278, 1
          %s3426 = smul.addr %s3425, 256
          %s3427 = scalar_lea.vmem [#allocation9], %s3426
          %3428 = dma.done %s3424, 4096
        $region80: #{tpu_custom_call.1} parent=75 // pred_fallthru
          _
      $region76: #{tpu_custom_call.1} parent=5 // pred_fallthru
        _
    $region6: #{tpu_custom_call.1} parent=1 // loop_footer
      %s28 = sadd.s32 1, %s24
    $region7: #{tpu_custom_call.1} parent=1 // loop_footer_branch
      %23 = sbr.rel target = $region3
    $region8: #{tpu_custom_call.1} parent=1 // loop_exit
      _
    %3429 = vsyncpa [#allocation4], 1
    %s3430 = scalar_lea.sflag [#allocation4], 1
    %3431 = vsyncpa %s3430, 1
    %3432 = vsyncpa [#allocation7], 1
    %s3433 = scalar_lea.sflag [#allocation7], 1
    %3434 = vsyncpa %s3433, 1
    %3435 = vsyncpa [#allocation5], 1
    %s3436 = scalar_lea.sflag [#allocation5], 1
    %3437 = vsyncpa %s3436, 1

</llo_original>
